<compile_context>
chip_gen: v6e
topology: v6e:2x2x1
jax: 0.10.0
libtpu: 0.0.40
codegen_flags: <defaults>
</compile_context>

<pallas_src>
import functools

import jax
import jax.numpy as jnp
from jax.experimental import pallas as pl
from jax.experimental.pallas import tpu as pltpu

EPS = 1e-5
NEG_SLOPE = 0.2
VMEM_LIMIT = 48 * 1024 * 1024   # < 64 MiB (v7x per-core VMEM), ample headroom


def _round_up(x, m):
    return (x + m - 1) // m * m


# ----------------------------- Pallas kernels ------------------------------

def _mm_act_kernel(x_ref, w_ref, o_ref, acc_ref, *, act):
    """Tiled matmul (bf16 on MXU, f32 accumulate) with fused activation."""
    ki = pl.program_id(1)

    @pl.when(ki == 0)
    def _():
        acc_ref[...] = jnp.zeros_like(acc_ref)

    acc_ref[...] += jnp.dot(x_ref[...], w_ref[...],
                            preferred_element_type=jnp.float32)

    @pl.when(ki == pl.num_programs(1) - 1)
    def _():
        y = acc_ref[...]
        if act == "lrelu":
            y = jnp.maximum(y, NEG_SLOPE * y)
        elif act == "sigmoid":
            y = 1.0 / (1.0 + jnp.exp(-y))
        o_ref[...] = y.astype(o_ref.dtype)


def _mm_stats_kernel(x_ref, w_ref, y_ref, sum_ref, ssq_ref, acc_ref):
    """Tiled matmul that also emits per-M-tile partial sum / sum-of-squares
    (one-pass batch-norm statistics computed from the f32 accumulator)."""
    ki = pl.program_id(1)

    @pl.when(ki == 0)
    def _():
        acc_ref[...] = jnp.zeros_like(acc_ref)

    acc_ref[...] += jnp.dot(x_ref[...], w_ref[...],
                            preferred_element_type=jnp.float32)

    @pl.when(ki == pl.num_programs(1) - 1)
    def _():
        acc = acc_ref[...]
        y_ref[...] = acc
        c = acc.shape[1]
        s = jnp.sum(acc, axis=0, keepdims=True)          # (1, C)
        ss = jnp.sum(acc * acc, axis=0, keepdims=True)   # (1, C)
        # Stats blocks are (8, C) for sublane alignment; replicate the row
        # sums over the 8 rows and divide by 8 outside the kernel.
        sum_ref[...] = jnp.broadcast_to(s, (8, c))
        ssq_ref[...] = jnp.broadcast_to(ss, (8, c))


def _affine_lrelu_kernel(y_ref, scale_ref, shift_ref, o_ref):
    """Fused (train-mode) batch-norm affine + LeakyReLU(0.2)."""
    yhat = y_ref[...] * scale_ref[...] + shift_ref[...]
    o_ref[...] = jnp.maximum(yhat, NEG_SLOPE * yhat).astype(o_ref.dtype)


# ---------------------------- pallas_call wrappers --------------------------

def _matmul_act(cols, wmat, cout_p, act, out_dtype, tm, tk):
    mp, kp = cols.shape
    return pl.pallas_call(
        functools.partial(_mm_act_kernel, act=act),
        grid=(mp // tm, kp // tk),
        in_specs=[pl.BlockSpec((tm, tk), lambda i, k: (i, k)),
                  pl.BlockSpec((tk, cout_p), lambda i, k: (k, 0))],
        out_specs=pl.BlockSpec((tm, cout_p), lambda i, k: (i, 0)),
        out_shape=jax.ShapeDtypeStruct((mp, cout_p), out_dtype),
        scratch_shapes=[pltpu.VMEM((tm, cout_p), jnp.float32)],
        compiler_params=pltpu.CompilerParams(
            dimension_semantics=("parallel", "arbitrary"),
            vmem_limit_bytes=VMEM_LIMIT),
    )(cols, wmat)


def _matmul_stats(cols, wmat, cout_p, tm, tk):
    mp, kp = cols.shape
    n_m, n_k = mp // tm, kp // tk
    return pl.pallas_call(
        _mm_stats_kernel,
        grid=(n_m, n_k),
        in_specs=[pl.BlockSpec((tm, tk), lambda i, k: (i, k)),
                  pl.BlockSpec((tk, cout_p), lambda i, k: (k, 0))],
        out_specs=(pl.BlockSpec((tm, cout_p), lambda i, k: (i, 0)),
                   pl.BlockSpec((8, cout_p), lambda i, k: (i, 0)),
                   pl.BlockSpec((8, cout_p), lambda i, k: (i, 0))),
        out_shape=(jax.ShapeDtypeStruct((mp, cout_p), jnp.float32),
                   jax.ShapeDtypeStruct((n_m * 8, cout_p), jnp.float32),
                   jax.ShapeDtypeStruct((n_m * 8, cout_p), jnp.float32)),
        scratch_shapes=[pltpu.VMEM((tm, cout_p), jnp.float32)],
        compiler_params=pltpu.CompilerParams(
            dimension_semantics=("parallel", "arbitrary"),
            vmem_limit_bytes=VMEM_LIMIT),
    )(cols, wmat)


def _bn_lrelu(y, scale, shift, tm):
    mp, cp = y.shape
    return pl.pallas_call(
        _affine_lrelu_kernel,
        grid=(mp // tm,),
        in_specs=[pl.BlockSpec((tm, cp), lambda i: (i, 0)),
                  pl.BlockSpec((1, cp), lambda i: (0, 0)),
                  pl.BlockSpec((1, cp), lambda i: (0, 0))],
        out_specs=pl.BlockSpec((tm, cp), lambda i: (i, 0)),
        out_shape=jax.ShapeDtypeStruct((mp, cp), jnp.bfloat16),
        compiler_params=pltpu.CompilerParams(
            dimension_semantics=("parallel",),
            vmem_limit_bytes=VMEM_LIMIT),
    )(y, scale, shift)


# --------------------------------- glue -------------------------------------

def _im2col_nhwc(x, k, stride, padding):
    """NHWC im2col in bfloat16; column order is (kh, kw, cin)."""
    n, h, w, c = x.shape
    xp = jnp.pad(x, ((0, 0), (padding, padding), (padding, padding), (0, 0)))
    oh = (h + 2 * padding - k) // stride + 1
    ow = (w + 2 * padding - k) // stride + 1
    taps = [xp[:, kh:kh + stride * (oh - 1) + 1:stride,
               kw:kw + stride * (ow - 1) + 1:stride, :]
            for kh in range(k) for kw in range(k)]
    cols = jnp.stack(taps, axis=3).reshape(n * oh * ow, k * k * c)
    return cols.astype(jnp.bfloat16), oh, ow


def conv_bn_act(x_nhwc, w, gamma, beta, *, stride, padding, bn, act):
    n = x_nhwc.shape[0]
    cout, cin, k, _ = w.shape
    cols, oh, ow = _im2col_nhwc(x_nhwc, k, stride, padding)
    m, kdim = cols.shape
    cout_p = _round_up(cout, 128)          # lane-dense output (cout=1 -> 128)

    # Tile sizes: M tiles >= 16-row aligned, contraction padded to x128.
    tm = 256 if m >= 256 else _round_up(m, 16)
    kpad = _round_up(kdim, 128)
    if kpad > 1024:
        tk = 512
        kpad = _round_up(kpad, tk)
    else:
        tk = kpad
    mpad = _round_up(m, tm)

    cols_p = jnp.pad(cols, ((0, mpad - m), (0, kpad - kdim)))
    wmat = w.transpose(2, 3, 1, 0).reshape(kdim, cout).astype(jnp.bfloat16)
    wmat_p = jnp.pad(wmat, ((0, kpad - kdim), (0, cout_p - cout)))

    if not bn:
        out_dtype = jnp.float32 if act == "sigmoid" else jnp.bfloat16
        y = _matmul_act(cols_p, wmat_p, cout_p, act, out_dtype, tm, tk)
    else:
        y, psum, pssq = _matmul_stats(cols_p, wmat_p, cout_p, tm, tk)
        tot_sum = jnp.sum(psum, axis=0) / 8.0        # (cout_p,)
        tot_ssq = jnp.sum(pssq, axis=0) / 8.0
        # Zero-padded rows contribute 0 to both sums, so dividing by the true
        # row count m gives exact batch statistics.
        mean = tot_sum / m
        var = jnp.maximum(tot_ssq / m - mean * mean, 0.0)   # biased (train) var
        rstd = jax.lax.rsqrt(var + EPS)
        gamma_p = jnp.pad(gamma, (0, cout_p - cout), constant_values=1.0)
        beta_p = jnp.pad(beta, (0, cout_p - cout))
        scale = (gamma_p * rstd)[None, :].astype(jnp.float32)
        shift = (beta_p - mean * gamma_p * rstd)[None, :].astype(jnp.float32)
        y = _bn_lrelu(y, scale, shift, tm)

    return y[:m, :cout].reshape(n, oh, ow, cout)


# ------------------------------ Discriminator --------------------------------

LAYERS = [
    # (cin, cout, kernel, stride, padding, batchnorm, activation)
    (1,   64,  3, 2, 1, False, "lrelu"),
    (64,  128, 3, 2, 1, True,  "lrelu"),
    (128, 256, 3, 2, 1, True,  "lrelu"),
    (256, 1,   3, 1, 0, False, "sigmoid"),
]


def init_params(key):
    params = []
    for (cin, cout, k, _s, _p, bn, _a) in LAYERS:
        key, sub = jax.random.split(key)
        w = 0.05 * jax.random.normal(sub, (cout, cin, k, k), jnp.float32)
        gamma = jnp.ones((cout,), jnp.float32) if bn else None
        beta = jnp.zeros((cout,), jnp.float32) if bn else None
        params.append((w, gamma, beta))
    return params


def discriminator_forward(params, x_nchw):
    # NCHW -> NHWC once; all layers stay NHWC / bf16 (no per-layer transposes).
    x = jnp.transpose(x_nchw, (0, 2, 3, 1)).astype(jnp.bfloat16)
    for (cin, cout, k, s, p, bn, act), (w, gamma, beta) in zip(LAYERS, params):
        x = conv_bn_act(x, w, gamma, beta, stride=s, padding=p, bn=bn, act=act)
    return jnp.transpose(x, (0, 3, 1, 2)).astype(jnp.float32)


if __name__ == "__main__":
    key = jax.random.PRNGKey(0)
    pkey, xkey = jax.random.split(key)
    params = init_params(pkey)

    batch = 2
    x = jax.random.normal(xkey, (batch, 1, 32, 32), jnp.float32)

    y = jax.jit(discriminator_forward)(params, x)
    y = jax.block_until_ready(y)

    assert y.shape == (batch, 1, 2, 2), y.shape
    assert bool(jnp.all(jnp.isfinite(y))), "non-finite output"
    assert bool(jnp.all((y >= 0.0) & (y <= 1.0))), "sigmoid range violated"
    print("KERNEL_OK")
</pallas_src>

<mosaic_0001>
module attributes {stable_mosaic.version = 11 : i64} {
  func.func @_mm_act_kernel(%arg0: i32, %arg1: i32, %arg2: memref<256x128xbf16, #tpu.memory_space<vmem>>, %arg3: memref<128x128xbf16, #tpu.memory_space<vmem>>, %arg4: memref<256x128xbf16, #tpu.memory_space<vmem>>, %arg5: memref<256x128xf32, #tpu.memory_space<vmem>>) attributes {dimension_semantics = [#tpu.dimension_semantics<parallel>, #tpu.dimension_semantics<arbitrary>], iteration_bounds = array<i64: 2, 1>, scalar_prefetch = 0 : i64, scratch_operands = 1 : i64, tpu.core_type = #tpu.core_type<tc>, window_params = [{transform_indices = @transform_0, window_bounds = array<i64: 256, 128>}, {transform_indices = @transform_1, window_bounds = array<i64: 128, 128>}, {transform_indices = @transform_2, window_bounds = array<i64: 256, 128>}]} {
    %c0_i32 = arith.constant 0 : i32
    %0 = arith.cmpi eq, %arg1, %c0_i32 : i32
    %1 = arith.extui %0 : i1 to i32
    %c0_i32_0 = arith.constant 0 : i32
    %2 = arith.cmpi ne, %1, %c0_i32_0 : i32
    scf.if %2 {
      %cst_10 = arith.constant 0.000000e+00 : f32
      %12 = vector.broadcast %cst_10 : f32 to vector<256x128xf32>
      %c0_11 = arith.constant 0 : index
      %c0_12 = arith.constant 0 : index
      %13 = vector.load %arg5[%c0_11, %c0_12] : memref<256x128xf32, #tpu.memory_space<vmem>>, vector<256x128xf32>
      tpu.vector_store %arg5[%c0_11, %c0_12], %12 {strides = array<i32>} : memref<256x128xf32, #tpu.memory_space<vmem>>, vector<256x128xf32>,
    } else {
    }
    %c0 = arith.constant 0 : index
    %c0_1 = arith.constant 0 : index
    %3 = vector.load %arg5[%c0, %c0_1] : memref<256x128xf32, #tpu.memory_space<vmem>>, vector<256x128xf32>
    %c0_2 = arith.constant 0 : index
    %c0_3 = arith.constant 0 : index
    %4 = vector.load %arg2[%c0_2, %c0_3] : memref<256x128xbf16, #tpu.memory_space<vmem>>, vector<256x128xbf16>
    %c0_4 = arith.constant 0 : index
    %c0_5 = arith.constant 0 : index
    %5 = vector.load %arg3[%c0_4, %c0_5] : memref<128x128xbf16, #tpu.memory_space<vmem>>, vector<128x128xbf16>
    %cst = arith.constant dense<0.000000e+00> : vector<256x128xf32>
    %6 = tpu.matmul %4, %5, %cst {dimension_numbers = #tpu.dot_dimension_numbers<[1], [0], [0], [1], [0, 0, 1, 1], [], []>} : vector<256x128xbf16>, vector<128x128xbf16>, vector<256x128xf32> -> vector<256x128xf32>
    %7 = arith.addf %3, %6 : vector<256x128xf32>
    %c0_6 = arith.constant 0 : index
    %c0_7 = arith.constant 0 : index
    %8 = vector.load %arg5[%c0_6, %c0_7] : memref<256x128xf32, #tpu.memory_space<vmem>>, vector<256x128xf32>
    tpu.vector_store %arg5[%c0_6, %c0_7], %7 {strides = array<i32>} : memref<256x128xf32, #tpu.memory_space<vmem>>, vector<256x128xf32>,
    %c0_i32_8 = arith.constant 0 : i32
    %9 = arith.cmpi eq, %arg1, %c0_i32_8 : i32
    %10 = arith.extui %9 : i1 to i32
    %c0_i32_9 = arith.constant 0 : i32
    %11 = arith.cmpi ne, %10, %c0_i32_9 : i32
    scf.if %11 {
      %c0_10 = arith.constant 0 : index
      %c0_11 = arith.constant 0 : index
      %12 = vector.load %arg5[%c0_10, %c0_11] : memref<256x128xf32, #tpu.memory_space<vmem>>, vector<256x128xf32>
      %cst_12 = arith.constant 2.000000e-01 : f32
      %13 = vector.broadcast %cst_12 : f32 to vector<256x128xf32>
      %14 = arith.mulf %13, %12 : vector<256x128xf32>
      %15 = arith.maximumf %12, %14 : vector<256x128xf32>
      %16 = arith.truncf %15 : vector<256x128xf32> to vector<256x128xbf16>
      %c0_13 = arith.constant 0 : index
      %c0_14 = arith.constant 0 : index
      %17 = vector.load %arg4[%c0_13, %c0_14] : memref<256x128xbf16, #tpu.memory_space<vmem>>, vector<256x128xbf16>
      tpu.vector_store %arg4[%c0_13, %c0_14], %16 {strides = array<i32>} : memref<256x128xbf16, #tpu.memory_space<vmem>>, vector<256x128xbf16>,
    } else {
    }
    return
  }
  func.func @transform_0(%arg0: i32, %arg1: i32) -> (i32, i32) {
    %c0_i32 = arith.constant 0 : i32
    return %arg0, %arg1 : i32, i32
  }
  func.func @transform_1(%arg0: i32, %arg1: i32) -> (i32, i32) {
    %c0_i32 = arith.constant 0 : i32
    %c0_i32_0 = arith.constant 0 : i32
    return %arg1, %c0_i32 : i32, i32
  }
  func.func @transform_2(%arg0: i32, %arg1: i32) -> (i32, i32) {
    %c0_i32 = arith.constant 0 : i32
    %c0_i32_0 = arith.constant 0 : i32
    return %arg0, %c0_i32 : i32, i32
  }
}

module attributes {stable_mosaic.version = 11 : i64} {
  func.func @_mm_stats_kernel(%arg0: i32, %arg1: i32, %arg2: memref<128x640xbf16, #tpu.memory_space<vmem>>, %arg3: memref<640x128xbf16, #tpu.memory_space<vmem>>, %arg4: memref<128x128xf32, #tpu.memory_space<vmem>>, %arg5: memref<8x128xf32, #tpu.memory_space<vmem>>, %arg6: memref<8x128xf32, #tpu.memory_space<vmem>>, %arg7: memref<128x128xf32, #tpu.memory_space<vmem>>) attributes {dimension_semantics = [#tpu.dimension_semantics<parallel>, #tpu.dimension_semantics<arbitrary>], iteration_bounds = array<i64: 1, 1>, scalar_prefetch = 0 : i64, scratch_operands = 1 : i64, tpu.core_type = #tpu.core_type<tc>, window_params = [{transform_indices = @transform_0, window_bounds = array<i64: 128, 640>}, {transform_indices = @transform_1, window_bounds = array<i64: 640, 128>}, {transform_indices = @transform_2, window_bounds = array<i64: 128, 128>}, {transform_indices = @transform_3, window_bounds = array<i64: 8, 128>}, {transform_indices = @transform_4, window_bounds = array<i64: 8, 128>}]} {
    %c0_i32 = arith.constant 0 : i32
    %0 = arith.cmpi eq, %arg1, %c0_i32 : i32
    %1 = arith.extui %0 : i1 to i32
    %c0_i32_0 = arith.constant 0 : i32
    %2 = arith.cmpi ne, %1, %c0_i32_0 : i32
    scf.if %2 {
      %cst_10 = arith.constant 0.000000e+00 : f32
      %12 = vector.broadcast %cst_10 : f32 to vector<128x128xf32>
      %c0_11 = arith.constant 0 : index
      %c0_12 = arith.constant 0 : index
      %13 = vector.load %arg7[%c0_11, %c0_12] : memref<128x128xf32, #tpu.memory_space<vmem>>, vector<128x128xf32>
      tpu.vector_store %arg7[%c0_11, %c0_12], %12 {strides = array<i32>} : memref<128x128xf32, #tpu.memory_space<vmem>>, vector<128x128xf32>,
    } else {
    }
    %c0 = arith.constant 0 : index
    %c0_1 = arith.constant 0 : index
    %3 = vector.load %arg7[%c0, %c0_1] : memref<128x128xf32, #tpu.memory_space<vmem>>, vector<128x128xf32>
    %c0_2 = arith.constant 0 : index
    %c0_3 = arith.constant 0 : index
    %4 = vector.load %arg2[%c0_2, %c0_3] : memref<128x640xbf16, #tpu.memory_space<vmem>>, vector<128x640xbf16>
    %c0_4 = arith.constant 0 : index
    %c0_5 = arith.constant 0 : index
    %5 = vector.load %arg3[%c0_4, %c0_5] : memref<640x128xbf16, #tpu.memory_space<vmem>>, vector<640x128xbf16>
    %cst = arith.constant dense<0.000000e+00> : vector<128x128xf32>
    %6 = tpu.matmul %4, %5, %cst {dimension_numbers = #tpu.dot_dimension_numbers<[1], [0], [0], [1], [0, 0, 1, 1], [], []>} : vector<128x640xbf16>, vector<640x128xbf16>, vector<128x128xf32> -> vector<128x128xf32>
    %7 = arith.addf %3, %6 : vector<128x128xf32>
    %c0_6 = arith.constant 0 : index
    %c0_7 = arith.constant 0 : index
    %8 = vector.load %arg7[%c0_6, %c0_7] : memref<128x128xf32, #tpu.memory_space<vmem>>, vector<128x128xf32>
    tpu.vector_store %arg7[%c0_6, %c0_7], %7 {strides = array<i32>} : memref<128x128xf32, #tpu.memory_space<vmem>>, vector<128x128xf32>,
    %c0_i32_8 = arith.constant 0 : i32
    %9 = arith.cmpi eq, %arg1, %c0_i32_8 : i32
    %10 = arith.extui %9 : i1 to i32
    %c0_i32_9 = arith.constant 0 : i32
    %11 = arith.cmpi ne, %10, %c0_i32_9 : i32
    scf.if %11 {
      %c0_10 = arith.constant 0 : index
      %c0_11 = arith.constant 0 : index
      %12 = vector.load %arg7[%c0_10, %c0_11] : memref<128x128xf32, #tpu.memory_space<vmem>>, vector<128x128xf32>
      %c0_12 = arith.constant 0 : index
      %c0_13 = arith.constant 0 : index
      %13 = vector.load %arg4[%c0_12, %c0_13] : memref<128x128xf32, #tpu.memory_space<vmem>>, vector<128x128xf32>
      tpu.vector_store %arg4[%c0_12, %c0_13], %12 {strides = array<i32>} : memref<128x128xf32, #tpu.memory_space<vmem>>, vector<128x128xf32>,
      %cst_14 = arith.constant dense<0.000000e+00> : vector<128xf32>
      %14 = vector.multi_reduction <add>, %12, %cst_14 [0] : vector<128x128xf32> to vector<128xf32>
      %15 = vector.shape_cast %14 : vector<128xf32> to vector<1x128xf32>
      %16 = arith.mulf %12, %12 : vector<128x128xf32>
      %cst_15 = arith.constant dense<0.000000e+00> : vector<128xf32>
      %17 = vector.multi_reduction <add>, %16, %cst_15 [0] : vector<128x128xf32> to vector<128xf32>
      %18 = vector.shape_cast %17 : vector<128xf32> to vector<1x128xf32>
      %19 = vector.shape_cast %15 : vector<1x128xf32> to vector<1x128xf32>
      %20 = vector.broadcast %19 : vector<1x128xf32> to vector<8x128xf32>
      %c0_16 = arith.constant 0 : index
      %c0_17 = arith.constant 0 : index
      %21 = vector.load %arg5[%c0_16, %c0_17] : memref<8x128xf32, #tpu.memory_space<vmem>>, vector<8x128xf32>
      tpu.vector_store %arg5[%c0_16, %c0_17], %20 {strides = array<i32>} : memref<8x128xf32, #tpu.memory_space<vmem>>, vector<8x128xf32>,
      %22 = vector.shape_cast %18 : vector<1x128xf32> to vector<1x128xf32>
      %23 = vector.broadcast %22 : vector<1x128xf32> to vector<8x128xf32>
      %c0_18 = arith.constant 0 : index
      %c0_19 = arith.constant 0 : index
      %24 = vector.load %arg6[%c0_18, %c0_19] : memref<8x128xf32, #tpu.memory_space<vmem>>, vector<8x128xf32>
      tpu.vector_store %arg6[%c0_18, %c0_19], %23 {strides = array<i32>} : memref<8x128xf32, #tpu.memory_space<vmem>>, vector<8x128xf32>,
    } else {
    }
    return
  }
  func.func @transform_0(%arg0: i32, %arg1: i32) -> (i32, i32) {
    %c0_i32 = arith.constant 0 : i32
    return %arg0, %arg1 : i32, i32
  }
  func.func @transform_1(%arg0: i32, %arg1: i32) -> (i32, i32) {
    %c0_i32 = arith.constant 0 : i32
    %c0_i32_0 = arith.constant 0 : i32
    return %arg1, %c0_i32 : i32, i32
  }
  func.func @transform_2(%arg0: i32, %arg1: i32) -> (i32, i32) {
    %c0_i32 = arith.constant 0 : i32
    %c0_i32_0 = arith.constant 0 : i32
    return %arg0, %c0_i32 : i32, i32
  }
  func.func @transform_3(%arg0: i32, %arg1: i32) -> (i32, i32) {
    %c0_i32 = arith.constant 0 : i32
    %c0_i32_0 = arith.constant 0 : i32
    return %arg0, %c0_i32 : i32, i32
  }
  func.func @transform_4(%arg0: i32, %arg1: i32) -> (i32, i32) {
    %c0_i32 = arith.constant 0 : i32
    %c0_i32_0 = arith.constant 0 : i32
    return %arg0, %c0_i32 : i32, i32
  }
}

module attributes {stable_mosaic.version = 11 : i64} {
  func.func @_affine_lrelu_kernel(%arg0: i32, %arg1: memref<128x128xf32, #tpu.memory_space<vmem>>, %arg2: memref<1x128xf32, #tpu.memory_space<vmem>>, %arg3: memref<1x128xf32, #tpu.memory_space<vmem>>, %arg4: memref<128x128xbf16, #tpu.memory_space<vmem>>) attributes {dimension_semantics = [#tpu.dimension_semantics<parallel>], iteration_bounds = array<i64: 1>, scalar_prefetch = 0 : i64, scratch_operands = 0 : i64, tpu.core_type = #tpu.core_type<tc>, window_params = [{transform_indices = @transform_0, window_bounds = array<i64: 128, 128>}, {pipeline_mode = #tpu.pipeline_mode<synchronous>, transform_indices = @transform_1, window_bounds = array<i64: 1, 128>}, {pipeline_mode = #tpu.pipeline_mode<synchronous>, transform_indices = @transform_2, window_bounds = array<i64: 1, 128>}, {transform_indices = @transform_3, window_bounds = array<i64: 128, 128>}]} {
    %c0 = arith.constant 0 : index
    %c0_0 = arith.constant 0 : index
    %0 = vector.load %arg1[%c0, %c0_0] : memref<128x128xf32, #tpu.memory_space<vmem>>, vector<128x128xf32>
    %c0_1 = arith.constant 0 : index
    %c0_2 = arith.constant 0 : index
    %1 = vector.load %arg2[%c0_1, %c0_2] : memref<1x128xf32, #tpu.memory_space<vmem>>, vector<1x128xf32>
    %2 = vector.broadcast %1 : vector<1x128xf32> to vector<128x128xf32>
    %3 = arith.mulf %0, %2 : vector<128x128xf32>
    %c0_3 = arith.constant 0 : index
    %c0_4 = arith.constant 0 : index
    %4 = vector.load %arg3[%c0_3, %c0_4] : memref<1x128xf32, #tpu.memory_space<vmem>>, vector<1x128xf32>
    %5 = vector.broadcast %4 : vector<1x128xf32> to vector<128x128xf32>
    %6 = arith.addf %3, %5 : vector<128x128xf32>
    %cst = arith.constant 2.000000e-01 : f32
    %7 = vector.broadcast %cst : f32 to vector<128x128xf32>
    %8 = arith.mulf %7, %6 : vector<128x128xf32>
    %9 = arith.maximumf %6, %8 : vector<128x128xf32>
    %10 = arith.truncf %9 : vector<128x128xf32> to vector<128x128xbf16>
    %c0_5 = arith.constant 0 : index
    %c0_6 = arith.constant 0 : index
    %11 = vector.load %arg4[%c0_5, %c0_6] : memref<128x128xbf16, #tpu.memory_space<vmem>>, vector<128x128xbf16>
    tpu.vector_store %arg4[%c0_5, %c0_6], %10 {strides = array<i32>} : memref<128x128xbf16, #tpu.memory_space<vmem>>, vector<128x128xbf16>,
    return
  }
  func.func @transform_0(%arg0: i32) -> (i32, i32) {
    %c0_i32 = arith.constant 0 : i32
    %c0_i32_0 = arith.constant 0 : i32
    return %arg0, %c0_i32 : i32, i32
  }
  func.func @transform_1(%arg0: i32) -> (i32, i32) {
    %c0_i32 = arith.constant 0 : i32
    %c0_i32_0 = arith.constant 0 : i32
    %c0_i32_1 = arith.constant 0 : i32
    return %c0_i32, %c0_i32_0 : i32, i32
  }
  func.func @transform_2(%arg0: i32) -> (i32, i32) {
    %c0_i32 = arith.constant 0 : i32
    %c0_i32_0 = arith.constant 0 : i32
    %c0_i32_1 = arith.constant 0 : i32
    return %c0_i32, %c0_i32_0 : i32, i32
  }
  func.func @transform_3(%arg0: i32) -> (i32, i32) {
    %c0_i32 = arith.constant 0 : i32
    %c0_i32_0 = arith.constant 0 : i32
    return %arg0, %c0_i32 : i32, i32
  }
}

module attributes {stable_mosaic.version = 11 : i64} {
  func.func @_mm_stats_kernel(%arg0: i32, %arg1: i32, %arg2: memref<32x512xbf16, #tpu.memory_space<vmem>>, %arg3: memref<512x256xbf16, #tpu.memory_space<vmem>>, %arg4: memref<32x256xf32, #tpu.memory_space<vmem>>, %arg5: memref<8x256xf32, #tpu.memory_space<vmem>>, %arg6: memref<8x256xf32, #tpu.memory_space<vmem>>, %arg7: memref<32x256xf32, #tpu.memory_space<vmem>>) attributes {dimension_semantics = [#tpu.dimension_semantics<parallel>, #tpu.dimension_semantics<arbitrary>], iteration_bounds = array<i64: 1, 3>, scalar_prefetch = 0 : i64, scratch_operands = 1 : i64, tpu.core_type = #tpu.core_type<tc>, window_params = [{transform_indices = @transform_0, window_bounds = array<i64: 32, 512>}, {transform_indices = @transform_1, window_bounds = array<i64: 512, 256>}, {transform_indices = @transform_2, window_bounds = array<i64: 32, 256>}, {transform_indices = @transform_3, window_bounds = array<i64: 8, 256>}, {transform_indices = @transform_4, window_bounds = array<i64: 8, 256>}]} {
    %c0_i32 = arith.constant 0 : i32
    %0 = arith.cmpi eq, %arg1, %c0_i32 : i32
    %1 = arith.extui %0 : i1 to i32
    %c0_i32_0 = arith.constant 0 : i32
    %2 = arith.cmpi ne, %1, %c0_i32_0 : i32
    scf.if %2 {
      %cst_9 = arith.constant 0.000000e+00 : f32
      %12 = vector.broadcast %cst_9 : f32 to vector<32x256xf32>
      %c0_10 = arith.constant 0 : index
      %c0_11 = arith.constant 0 : index
      %13 = vector.load %arg7[%c0_10, %c0_11] : memref<32x256xf32, #tpu.memory_space<vmem>>, vector<32x256xf32>
      tpu.vector_store %arg7[%c0_10, %c0_11], %12 {strides = array<i32>} : memref<32x256xf32, #tpu.memory_space<vmem>>, vector<32x256xf32>,
    } else {
    }
    %c0 = arith.constant 0 : index
    %c0_1 = arith.constant 0 : index
    %3 = vector.load %arg7[%c0, %c0_1] : memref<32x256xf32, #tpu.memory_space<vmem>>, vector<32x256xf32>
    %c0_2 = arith.constant 0 : index
    %c0_3 = arith.constant 0 : index
    %4 = vector.load %arg2[%c0_2, %c0_3] : memref<32x512xbf16, #tpu.memory_space<vmem>>, vector<32x512xbf16>
    %c0_4 = arith.constant 0 : index
    %c0_5 = arith.constant 0 : index
    %5 = vector.load %arg3[%c0_4, %c0_5] : memref<512x256xbf16, #tpu.memory_space<vmem>>, vector<512x256xbf16>
    %cst = arith.constant dense<0.000000e+00> : vector<32x256xf32>
    %6 = tpu.matmul %4, %5, %cst {dimension_numbers = #tpu.dot_dimension_numbers<[1], [0], [0], [1], [0, 0, 1, 1], [], []>} : vector<32x512xbf16>, vector<512x256xbf16>, vector<32x256xf32> -> vector<32x256xf32>
    %7 = arith.addf %3, %6 : vector<32x256xf32>
    %c0_6 = arith.constant 0 : index
    %c0_7 = arith.constant 0 : index
    %8 = vector.load %arg7[%c0_6, %c0_7] : memref<32x256xf32, #tpu.memory_space<vmem>>, vector<32x256xf32>
    tpu.vector_store %arg7[%c0_6, %c0_7], %7 {strides = array<i32>} : memref<32x256xf32, #tpu.memory_space<vmem>>, vector<32x256xf32>,
    %c2_i32 = arith.constant 2 : i32
    %9 = arith.cmpi eq, %arg1, %c2_i32 : i32
    %10 = arith.extui %9 : i1 to i32
    %c0_i32_8 = arith.constant 0 : i32
    %11 = arith.cmpi ne, %10, %c0_i32_8 : i32
    scf.if %11 {
      %c0_9 = arith.constant 0 : index
      %c0_10 = arith.constant 0 : index
      %12 = vector.load %arg7[%c0_9, %c0_10] : memref<32x256xf32, #tpu.memory_space<vmem>>, vector<32x256xf32>
      %c0_11 = arith.constant 0 : index
      %c0_12 = arith.constant 0 : index
      %13 = vector.load %arg4[%c0_11, %c0_12] : memref<32x256xf32, #tpu.memory_space<vmem>>, vector<32x256xf32>
      tpu.vector_store %arg4[%c0_11, %c0_12], %12 {strides = array<i32>} : memref<32x256xf32, #tpu.memory_space<vmem>>, vector<32x256xf32>,
      %cst_13 = arith.constant dense<0.000000e+00> : vector<256xf32>
      %14 = vector.multi_reduction <add>, %12, %cst_13 [0] : vector<32x256xf32> to vector<256xf32>
      %15 = vector.shape_cast %14 : vector<256xf32> to vector<1x256xf32>
      %16 = arith.mulf %12, %12 : vector<32x256xf32>
      %cst_14 = arith.constant dense<0.000000e+00> : vector<256xf32>
      %17 = vector.multi_reduction <add>, %16, %cst_14 [0] : vector<32x256xf32> to vector<256xf32>
      %18 = vector.shape_cast %17 : vector<256xf32> to vector<1x256xf32>
      %19 = vector.shape_cast %15 : vector<1x256xf32> to vector<1x256xf32>
      %20 = vector.broadcast %19 : vector<1x256xf32> to vector<8x256xf32>
      %c0_15 = arith.constant 0 : index
      %c0_16 = arith.constant 0 : index
      %21 = vector.load %arg5[%c0_15, %c0_16] : memref<8x256xf32, #tpu.memory_space<vmem>>, vector<8x256xf32>
      tpu.vector_store %arg5[%c0_15, %c0_16], %20 {strides = array<i32>} : memref<8x256xf32, #tpu.memory_space<vmem>>, vector<8x256xf32>,
      %22 = vector.shape_cast %18 : vector<1x256xf32> to vector<1x256xf32>
      %23 = vector.broadcast %22 : vector<1x256xf32> to vector<8x256xf32>
      %c0_17 = arith.constant 0 : index
      %c0_18 = arith.constant 0 : index
      %24 = vector.load %arg6[%c0_17, %c0_18] : memref<8x256xf32, #tpu.memory_space<vmem>>, vector<8x256xf32>
      tpu.vector_store %arg6[%c0_17, %c0_18], %23 {strides = array<i32>} : memref<8x256xf32, #tpu.memory_space<vmem>>, vector<8x256xf32>,
    } else {
    }
    return
  }
  func.func @transform_0(%arg0: i32, %arg1: i32) -> (i32, i32) {
    %c0_i32 = arith.constant 0 : i32
    return %arg0, %arg1 : i32, i32
  }
  func.func @transform_1(%arg0: i32, %arg1: i32) -> (i32, i32) {
    %c0_i32 = arith.constant 0 : i32
    %c0_i32_0 = arith.constant 0 : i32
    return %arg1, %c0_i32 : i32, i32
  }
  func.func @transform_2(%arg0: i32, %arg1: i32) -> (i32, i32) {
    %c0_i32 = arith.constant 0 : i32
    %c0_i32_0 = arith.constant 0 : i32
    return %arg0, %c0_i32 : i32, i32
  }
  func.func @transform_3(%arg0: i32, %arg1: i32) -> (i32, i32) {
    %c0_i32 = arith.constant 0 : i32
    %c0_i32_0 = arith.constant 0 : i32
    return %arg0, %c0_i32 : i32, i32
  }
  func.func @transform_4(%arg0: i32, %arg1: i32) -> (i32, i32) {
    %c0_i32 = arith.constant 0 : i32
    %c0_i32_0 = arith.constant 0 : i32
    return %arg0, %c0_i32 : i32, i32
  }
}

module attributes {stable_mosaic.version = 11 : i64} {
  func.func @_affine_lrelu_kernel(%arg0: i32, %arg1: memref<32x256xf32, #tpu.memory_space<vmem>>, %arg2: memref<1x256xf32, #tpu.memory_space<vmem>>, %arg3: memref<1x256xf32, #tpu.memory_space<vmem>>, %arg4: memref<32x256xbf16, #tpu.memory_space<vmem>>) attributes {dimension_semantics = [#tpu.dimension_semantics<parallel>], iteration_bounds = array<i64: 1>, scalar_prefetch = 0 : i64, scratch_operands = 0 : i64, tpu.core_type = #tpu.core_type<tc>, window_params = [{transform_indices = @transform_0, window_bounds = array<i64: 32, 256>}, {pipeline_mode = #tpu.pipeline_mode<synchronous>, transform_indices = @transform_1, window_bounds = array<i64: 1, 256>}, {pipeline_mode = #tpu.pipeline_mode<synchronous>, transform_indices = @transform_2, window_bounds = array<i64: 1, 256>}, {transform_indices = @transform_3, window_bounds = array<i64: 32, 256>}]} {
    %c0 = arith.constant 0 : index
    %c0_0 = arith.constant 0 : index
    %0 = vector.load %arg1[%c0, %c0_0] : memref<32x256xf32, #tpu.memory_space<vmem>>, vector<32x256xf32>
    %c0_1 = arith.constant 0 : index
    %c0_2 = arith.constant 0 : index
    %1 = vector.load %arg2[%c0_1, %c0_2] : memref<1x256xf32, #tpu.memory_space<vmem>>, vector<1x256xf32>
    %2 = vector.broadcast %1 : vector<1x256xf32> to vector<32x256xf32>
    %3 = arith.mulf %0, %2 : vector<32x256xf32>
    %c0_3 = arith.constant 0 : index
    %c0_4 = arith.constant 0 : index
    %4 = vector.load %arg3[%c0_3, %c0_4] : memref<1x256xf32, #tpu.memory_space<vmem>>, vector<1x256xf32>
    %5 = vector.broadcast %4 : vector<1x256xf32> to vector<32x256xf32>
    %6 = arith.addf %3, %5 : vector<32x256xf32>
    %cst = arith.constant 2.000000e-01 : f32
    %7 = vector.broadcast %cst : f32 to vector<32x256xf32>
    %8 = arith.mulf %7, %6 : vector<32x256xf32>
    %9 = arith.maximumf %6, %8 : vector<32x256xf32>
    %10 = arith.truncf %9 : vector<32x256xf32> to vector<32x256xbf16>
    %c0_5 = arith.constant 0 : index
    %c0_6 = arith.constant 0 : index
    %11 = vector.load %arg4[%c0_5, %c0_6] : memref<32x256xbf16, #tpu.memory_space<vmem>>, vector<32x256xbf16>
    tpu.vector_store %arg4[%c0_5, %c0_6], %10 {strides = array<i32>} : memref<32x256xbf16, #tpu.memory_space<vmem>>, vector<32x256xbf16>,
    return
  }
  func.func @transform_0(%arg0: i32) -> (i32, i32) {
    %c0_i32 = arith.constant 0 : i32
    %c0_i32_0 = arith.constant 0 : i32
    return %arg0, %c0_i32 : i32, i32
  }
  func.func @transform_1(%arg0: i32) -> (i32, i32) {
    %c0_i32 = arith.constant 0 : i32
    %c0_i32_0 = arith.constant 0 : i32
    %c0_i32_1 = arith.constant 0 : i32
    return %c0_i32, %c0_i32_0 : i32, i32
  }
  func.func @transform_2(%arg0: i32) -> (i32, i32) {
    %c0_i32 = arith.constant 0 : i32
    %c0_i32_0 = arith.constant 0 : i32
    %c0_i32_1 = arith.constant 0 : i32
    return %c0_i32, %c0_i32_0 : i32, i32
  }
  func.func @transform_3(%arg0: i32) -> (i32, i32) {
    %c0_i32 = arith.constant 0 : i32
    %c0_i32_0 = arith.constant 0 : i32
    return %arg0, %c0_i32 : i32, i32
  }
}

module attributes {stable_mosaic.version = 11 : i64} {
  func.func @_mm_act_kernel(%arg0: i32, %arg1: i32, %arg2: memref<16x512xbf16, #tpu.memory_space<vmem>>, %arg3: memref<512x128xbf16, #tpu.memory_space<vmem>>, %arg4: memref<16x128xf32, #tpu.memory_space<vmem>>, %arg5: memref<16x128xf32, #tpu.memory_space<vmem>>) attributes {dimension_semantics = [#tpu.dimension_semantics<parallel>, #tpu.dimension_semantics<arbitrary>], iteration_bounds = array<i64: 1, 5>, scalar_prefetch = 0 : i64, scratch_operands = 1 : i64, tpu.core_type = #tpu.core_type<tc>, window_params = [{transform_indices = @transform_0, window_bounds = array<i64: 16, 512>}, {transform_indices = @transform_1, window_bounds = array<i64: 512, 128>}, {transform_indices = @transform_2, window_bounds = array<i64: 16, 128>}]} {
    %c0_i32 = arith.constant 0 : i32
    %0 = arith.cmpi eq, %arg1, %c0_i32 : i32
    %1 = arith.extui %0 : i1 to i32
    %c0_i32_0 = arith.constant 0 : i32
    %2 = arith.cmpi ne, %1, %c0_i32_0 : i32
    scf.if %2 {
      %cst_9 = arith.constant 0.000000e+00 : f32
      %12 = vector.broadcast %cst_9 : f32 to vector<16x128xf32>
      %c0_10 = arith.constant 0 : index
      %c0_11 = arith.constant 0 : index
      %13 = vector.load %arg5[%c0_10, %c0_11] : memref<16x128xf32, #tpu.memory_space<vmem>>, vector<16x128xf32>
      tpu.vector_store %arg5[%c0_10, %c0_11], %12 {strides = array<i32>} : memref<16x128xf32, #tpu.memory_space<vmem>>, vector<16x128xf32>,
    } else {
    }
    %c0 = arith.constant 0 : index
    %c0_1 = arith.constant 0 : index
    %3 = vector.load %arg5[%c0, %c0_1] : memref<16x128xf32, #tpu.memory_space<vmem>>, vector<16x128xf32>
    %c0_2 = arith.constant 0 : index
    %c0_3 = arith.constant 0 : index
    %4 = vector.load %arg2[%c0_2, %c0_3] : memref<16x512xbf16, #tpu.memory_space<vmem>>, vector<16x512xbf16>
    %c0_4 = arith.constant 0 : index
    %c0_5 = arith.constant 0 : index
    %5 = vector.load %arg3[%c0_4, %c0_5] : memref<512x128xbf16, #tpu.memory_space<vmem>>, vector<512x128xbf16>
    %cst = arith.constant dense<0.000000e+00> : vector<16x128xf32>
    %6 = tpu.matmul %4, %5, %cst {dimension_numbers = #tpu.dot_dimension_numbers<[1], [0], [0], [1], [0, 0, 1, 1], [], []>} : vector<16x512xbf16>, vector<512x128xbf16>, vector<16x128xf32> -> vector<16x128xf32>
    %7 = arith.addf %3, %6 : vector<16x128xf32>
    %c0_6 = arith.constant 0 : index
    %c0_7 = arith.constant 0 : index
    %8 = vector.load %arg5[%c0_6, %c0_7] : memref<16x128xf32, #tpu.memory_space<vmem>>, vector<16x128xf32>
    tpu.vector_store %arg5[%c0_6, %c0_7], %7 {strides = array<i32>} : memref<16x128xf32, #tpu.memory_space<vmem>>, vector<16x128xf32>,
    %c4_i32 = arith.constant 4 : i32
    %9 = arith.cmpi eq, %arg1, %c4_i32 : i32
    %10 = arith.extui %9 : i1 to i32
    %c0_i32_8 = arith.constant 0 : i32
    %11 = arith.cmpi ne, %10, %c0_i32_8 : i32
    scf.if %11 {
      %c0_9 = arith.constant 0 : index
      %c0_10 = arith.constant 0 : index
      %12 = vector.load %arg5[%c0_9, %c0_10] : memref<16x128xf32, #tpu.memory_space<vmem>>, vector<16x128xf32>
      %cst_11 = arith.constant 0.000000e+00 : f32
      %13 = vector.broadcast %cst_11 : f32 to vector<16x128xf32>
      %14 = arith.subf %13, %12 : vector<16x128xf32>
      %15 = math.exp %14 : vector<16x128xf32>
      %cst_12 = arith.constant 1.000000e+00 : f32
      %16 = vector.broadcast %cst_12 : f32 to vector<16x128xf32>
      %17 = arith.addf %16, %15 : vector<16x128xf32>
      %cst_13 = arith.constant 1.000000e+00 : f32
      %18 = vector.broadcast %cst_13 : f32 to vector<16x128xf32>
      %19 = arith.divf %18, %17 : vector<16x128xf32>
      %c0_14 = arith.constant 0 : index
      %c0_15 = arith.constant 0 : index
      %20 = vector.load %arg4[%c0_14, %c0_15] : memref<16x128xf32, #tpu.memory_space<vmem>>, vector<16x128xf32>
      tpu.vector_store %arg4[%c0_14, %c0_15], %19 {strides = array<i32>} : memref<16x128xf32, #tpu.memory_space<vmem>>, vector<16x128xf32>,
    } else {
    }
    return
  }
  func.func @transform_0(%arg0: i32, %arg1: i32) -> (i32, i32) {
    %c0_i32 = arith.constant 0 : i32
    return %arg0, %arg1 : i32, i32
  }
  func.func @transform_1(%arg0: i32, %arg1: i32) -> (i32, i32) {
    %c0_i32 = arith.constant 0 : i32
    %c0_i32_0 = arith.constant 0 : i32
    return %arg1, %c0_i32 : i32, i32
  }
  func.func @transform_2(%arg0: i32, %arg1: i32) -> (i32, i32) {
    %c0_i32 = arith.constant 0 : i32
    %c0_i32_0 = arith.constant 0 : i32
    return %arg0, %c0_i32 : i32, i32
  }
}

</mosaic_0001>

<llo_original>
// kernel: discriminator_forward.6
$region0: #{discriminator_forward.6}
  #allocation0 [shape = 'u32[]', space=smem, size = 0x4, offset = 0x4, fixed_abs, tag = 'smem constant byte address 0x4 - core index']
  #allocation1 [shape = 'u32[144,128]{1,0:T(1,128)}', space=vmem, size = 0x12000, scoped, tag = 'internal scratch']
  #allocation2 [shape = 'f32[256,128]{1,0:T(8,128)}', space=vmem, size = 0x20000, scoped, tag = 'scratch operand']
  %s0 = inlined_call_operand.vmem [shape: bf16[512,128], index: 0, kind: input, shape index: {}]
  %s1 = inlined_call_operand.vmem [shape: bf16[128,128], index: 1, kind: input, shape index: {}]
  %s2 = inlined_call_operand.vmem [shape: bf16[512,128], index: 2, kind: output, shape index: {}]
  %s3 = sld [smem:[#allocation0]]
  $region49: #{discriminator_forward.6} parent=0
    _
  %s5 = ssub.s32 1, %s3
  %s6 = scalar_select 0, %s5, %s3
  loop: start=0, step=1, limit=4
  $region2: #{discriminator_forward.6} parent=0 // loop_pre_header
    _
  $region3: #{discriminator_forward.6} parent=0 // loop_header
    %s8 = sphi 0, %s12
    %p9 = scmp.ge.s32.totalorder %s8, 4
    %s15 = sphi 0, %s27
    %s16 = sphi 0, %s23
    %s17 = sphi 0, %s15
    %s18 = sphi 0, %s16
    %s19 = sphi 0, %s17
    %s20 = sphi 0, %s18
    %s32 = sphi 0, %s34
    %s35 = sphi 0, %s32
    %s36 = sphi 0, %s35
    %s52 = sphi 0, %s36
    %s58 = sphi 0, %s60
    %s61 = sphi 0, %s58
    %s62 = sphi 0, %s61
    %s78 = sphi 0, %s62
    %s84 = sphi 0, %s86
    %s87 = sphi 0, %s84
    %s88 = sphi 0, %s87
    %s104 = sphi 0, %s88
  $region4: #{discriminator_forward.6} parent=0 // loop_header_branch
    %11 = sbr.rel (%p9) target = $region8
  $region5: #{discriminator_forward.6} parent=0 // loop_body
    %s13 = ssub.s32 %s8, 1
    %s14 = ssub.s32 %s8, 2
    %s21 = sadd.s32 1, %s16
    %p22 = scmp.ge.s32.totalorder %s21, 1
    %s23 = scalar_select %p22, 0, %s21
    %s24 = sadd.s32 1, %s15
    %s25 = scalar_select %p22, %s24, %s15
    %p26 = scmp.ge.s32.totalorder %s25, 2
    %s27 = scalar_select %p26, 0, %s25
    %s28 = ssub.s32 %s15, %s27
    %s29 = ssub.s32 %s16, %s23
    %s30 = sor.u32 %s28, %s29
    %p31 = scmp.eq.s32.totalorder %s30, 0
    %s33 = sadd.s32 %s32, 1
    %s34 = scalar_select %p31, %s32, %s33
    %p37 = pneg %p31
    %p38 = scmp.eq.s32.totalorder %s8, 1
    %p39 = por %p37, %p38
    %p40 = scmp.ne.s32.totalorder %s32, %s35
    %p41 = scmp.eq.s32.totalorder %s8, 0
    %p42 = por %p40, %p41
    %p43 = scmp.ne.s32.totalorder %s32, %s35
    %p44 = scmp.eq.s32.totalorder %s13, 1
    %p45 = por %p43, %p44
    %p46 = scmp.ne.s32.totalorder %s35, %s36
    %p47 = scmp.eq.s32.totalorder %s13, 0
    %p48 = por %p46, %p47
    %p49 = scmp.ne.s32.totalorder %s35, %s36
    %p50 = scmp.eq.s32.totalorder %s14, 1
    %p51 = por %p49, %p50
    %p53 = scmp.ne.s32.totalorder %s36, %s52
    %p54 = scmp.eq.s32.totalorder %s14, 0
    %p55 = por %p53, %p54
    %s56 = ssub.s32 %s16, %s23
    %p57 = scmp.eq.s32.totalorder %s56, 0
    %s59 = sadd.s32 %s58, 1
    %s60 = scalar_select %p57, %s58, %s59
    %p63 = pneg %p57
    %p64 = scmp.eq.s32.totalorder %s8, 1
    %p65 = por %p63, %p64
    %p66 = scmp.ne.s32.totalorder %s58, %s61
    %p67 = scmp.eq.s32.totalorder %s8, 0
    %p68 = por %p66, %p67
    %p69 = scmp.ne.s32.totalorder %s58, %s61
    %p70 = scmp.eq.s32.totalorder %s13, 1
    %p71 = por %p69, %p70
    %p72 = scmp.ne.s32.totalorder %s61, %s62
    %p73 = scmp.eq.s32.totalorder %s13, 0
    %p74 = por %p72, %p73
    %p75 = scmp.ne.s32.totalorder %s61, %s62
    %p76 = scmp.eq.s32.totalorder %s14, 1
    %p77 = por %p75, %p76
    %p79 = scmp.ne.s32.totalorder %s62, %s78
    %p80 = scmp.eq.s32.totalorder %s14, 0
    %p81 = por %p79, %p80
    %s82 = ssub.s32 %s15, %s27
    %p83 = scmp.eq.s32.totalorder %s82, 0
    %s85 = sadd.s32 %s84, 1
    %s86 = scalar_select %p83, %s84, %s85
    %p89 = pneg %p83
    %p90 = scmp.eq.s32.totalorder %s8, 1
    %p91 = por %p89, %p90
    %p92 = scmp.ne.s32.totalorder %s84, %s87
    %p93 = scmp.eq.s32.totalorder %s8, 0
    %p94 = por %p92, %p93
    %p95 = scmp.ne.s32.totalorder %s84, %s87
    %p96 = scmp.eq.s32.totalorder %s13, 1
    %p97 = por %p95, %p96
    %p98 = scmp.ne.s32.totalorder %s87, %s88
    %p99 = scmp.eq.s32.totalorder %s13, 0
    %p100 = por %p98, %p99
    %p101 = scmp.ne.s32.totalorder %s87, %s88
    %p102 = scmp.eq.s32.totalorder %s14, 1
    %p103 = por %p101, %p102
    %p105 = scmp.ne.s32.totalorder %s88, %s104
    %p106 = scmp.eq.s32.totalorder %s14, 0
    %p107 = por %p105, %p106
    %p108 = scmp.le.s32.totalorder 1, %s8
    %p109 = scmp.lt.s32.totalorder %s8, 3
    %p110 = pnand %p108, %p109
    %p111 = pneg %p110
    // Predicated region
    $region9: #{discriminator_forward.6} parent=5 // pred_check
      _
    $region10: #{discriminator_forward.6} parent=5 // pred_check_branch
      %113 = sbr.rel (%p110) target = $region12
    $region11: #{discriminator_forward.6} parent=5 // pred_region
      %s114 = ssub.s32 %s8, 1
      // Predicated region
      $region13: #{discriminator_forward.6} parent=11 // pred_check
        %p115 = pneg %p74
      $region14: #{discriminator_forward.6} parent=11 // pred_check_branch
        %117 = sbr.rel (%p115) target = $region16
      $region15: #{discriminator_forward.6} parent=11 // pred_region
        %s118 = smul.u32 16, %s18
        %p119 = scmp.lt.s32.totalorder %s118, 15
        %s120 = scalar_select %p119, %s118, 15
        %s121 = smul.addr %s120, 4
        %s122 = scalar_lea.vmem %s1, %s121
        %s123 = smul.u32 16, %s18
      $region16: #{discriminator_forward.6} parent=11 // pred_fallthru
        _
    $region12: #{discriminator_forward.6} parent=5 // pred_fallthru
      _
    %p124 = scmp.lt.s32.totalorder %s8, 2
    // Predicated region
    $region17: #{discriminator_forward.6} parent=5 // pred_check
      %p125 = pneg %p124
    $region18: #{discriminator_forward.6} parent=5 // pred_check_branch
      %127 = sbr.rel (%p125) target = $region20
    $region19: #{discriminator_forward.6} parent=5 // pred_region
      // Predicated region
      $region21: #{discriminator_forward.6} parent=19 // pred_check
        %p128 = pneg %p42
      $region22: #{discriminator_forward.6} parent=19 // pred_check_branch
        %130 = sbr.rel (%p128) target = $region24
      $region23: #{discriminator_forward.6} parent=19 // pred_region
        %s131 = smul.u32 32, %s15
        %p132 = scmp.lt.s32.totalorder %s131, 63
        %s133 = scalar_select %p132, %s131, 63
        %p134 = scmp.lt.s32.totalorder %s16, 0
        %s135 = scalar_select %p134, %s16, 0
        %s136 = sadd.s32 %s135, %s133
        %s137 = smul.addr %s136, 4
        %s138 = scalar_lea.vmem %s0, %s137
        %s139 = smul.u32 32, %s15
      $region24: #{discriminator_forward.6} parent=19 // pred_fallthru
        _
    $region20: #{discriminator_forward.6} parent=5 // pred_fallthru
      _
    %p140 = scmp.le.s32.totalorder 1, %s8
    %p141 = scmp.lt.s32.totalorder %s8, 3
    %p142 = pnand %p140, %p141
    %p143 = pneg %p142
    // Predicated region
    $region25: #{discriminator_forward.6} parent=5 // pred_check
      _
    $region26: #{discriminator_forward.6} parent=5 // pred_check_branch
      %145 = sbr.rel (%p142) target = $region28
    $region27: #{discriminator_forward.6} parent=5 // pred_region
      %s146 = ssub.s32 %s8, 1
      %s147 = smul.u32 32, %s17
      %p148 = scmp.lt.s32.totalorder %s147, 63
      %s149 = scalar_select %p148, %s147, 63
      %p150 = scmp.lt.s32.totalorder %s18, 0
      %s151 = scalar_select %p150, %s18, 0
      %s152 = sadd.s32 %s151, %s149
      %s153 = smul.addr %s152, 4
      %s154 = scalar_lea.vmem %s0, %s153
      %p155 = pneg %p48
      %p156 = pneg %p45
      %s157 = smul.u32 16, %s18
      %p158 = scmp.lt.s32.totalorder %s157, 15
      %s159 = scalar_select %p158, %s157, 15
      %s160 = smul.addr %s159, 4
      %s161 = scalar_lea.vmem %s1, %s160
      %p162 = pneg %p74
      %p163 = pneg %p71
      %p164 = pneg %p100
      %p165 = pneg %p97
      %s166 = smul.u32 32, %s17
      %p167 = scmp.lt.s32.totalorder %s166, 63
      %s168 = scalar_select %p167, %s166, 63
      %s169 = smul.addr %s168, 4
      %s170 = scalar_lea.vmem %s2, %s169
      %s171 = smul.u32 32, %s17
      %p172 = scmp.lt.s32.totalorder %s171, 63
      %s173 = scalar_select %p172, %s171, 63
      %p174 = scmp.lt.s32.totalorder %s18, 0
      %s175 = scalar_select %p174, %s18, 0
      %s176 = sadd.s32 %s175, %s173
      %s177 = smul.addr %s176, 4
      %s178 = scalar_lea.vmem %s0, %s177
      %s179 = smul.u32 32, %s17
      %s180 = smul.u32 16, %s18
      %p181 = scmp.lt.s32.totalorder %s180, 15
      %s182 = scalar_select %p181, %s180, 15
      %s183 = smul.addr %s182, 4
      %s184 = scalar_lea.vmem %s1, %s183
      %s185 = smul.u32 16, %s18
      %s186 = smul.u32 32, %s17
      %p187 = scmp.lt.s32.totalorder %s186, 63
      %s188 = scalar_select %p187, %s186, 63
      %s189 = smul.addr %s188, 4
      %s190 = scalar_lea.vmem %s2, %s189
      %s191 = smul.u32 32, %s17
      %p193 = scmp.eq.s32.totalorder %s18, 0
      // Predicated region
      $region29: #{discriminator_forward.6} parent=27 // pred_check
        %p194 = pneg %p193
      $region30: #{discriminator_forward.6} parent=27 // pred_check_branch
        %196 = sbr.rel (%p194) target = $region32
      $region31: #{discriminator_forward.6} parent=27 // pred_region
        %197 = vst [vmem:[#allocation2] sm:$0xff] 0.0
        %198 = vst [vmem:[#allocation2 + $0x8] sm:$0xff] 0.0
        %199 = vst [vmem:[#allocation2 + $0x10] sm:$0xff] 0.0
        %200 = vst [vmem:[#allocation2 + $0x18] sm:$0xff] 0.0
        %201 = vst [vmem:[#allocation2 + $0x20] sm:$0xff] 0.0
        %202 = vst [vmem:[#allocation2 + $0x28] sm:$0xff] 0.0
        %203 = vst [vmem:[#allocation2 + $0x30] sm:$0xff] 0.0
        %204 = vst [vmem:[#allocation2 + $0x38] sm:$0xff] 0.0
        %205 = vst [vmem:[#allocation2 + $0x40] sm:$0xff] 0.0
        %206 = vst [vmem:[#allocation2 + $0x48] sm:$0xff] 0.0
        %207 = vst [vmem:[#allocation2 + $0x50] sm:$0xff] 0.0
        %208 = vst [vmem:[#allocation2 + $0x58] sm:$0xff] 0.0
        %209 = vst [vmem:[#allocation2 + $0x60] sm:$0xff] 0.0
        %210 = vst [vmem:[#allocation2 + $0x68] sm:$0xff] 0.0
        %211 = vst [vmem:[#allocation2 + $0x70] sm:$0xff] 0.0
        %212 = vst [vmem:[#allocation2 + $0x78] sm:$0xff] 0.0
        %213 = vst [vmem:[#allocation2 + $0x80] sm:$0xff] 0.0
        %214 = vst [vmem:[#allocation2 + $0x88] sm:$0xff] 0.0
        %215 = vst [vmem:[#allocation2 + $0x90] sm:$0xff] 0.0
        %216 = vst [vmem:[#allocation2 + $0x98] sm:$0xff] 0.0
        %217 = vst [vmem:[#allocation2 + $0xa0] sm:$0xff] 0.0
        %218 = vst [vmem:[#allocation2 + $0xa8] sm:$0xff] 0.0
        %219 = vst [vmem:[#allocation2 + $0xb0] sm:$0xff] 0.0
        %220 = vst [vmem:[#allocation2 + $0xb8] sm:$0xff] 0.0
        %221 = vst [vmem:[#allocation2 + $0xc0] sm:$0xff] 0.0
        %222 = vst [vmem:[#allocation2 + $0xc8] sm:$0xff] 0.0
        %223 = vst [vmem:[#allocation2 + $0xd0] sm:$0xff] 0.0
        %224 = vst [vmem:[#allocation2 + $0xd8] sm:$0xff] 0.0
        %225 = vst [vmem:[#allocation2 + $0xe0] sm:$0xff] 0.0
        %226 = vst [vmem:[#allocation2 + $0xe8] sm:$0xff] 0.0
        %227 = vst [vmem:[#allocation2 + $0xf0] sm:$0xff] 0.0
        %228 = vst [vmem:[#allocation2 + $0xf8] sm:$0xff] 0.0
      $region32: #{discriminator_forward.6} parent=27 // pred_fallthru
        _
      %v229 = vld [vmem:[#allocation2] sm:$0xff]
      %v230 = vld [vmem:[#allocation2 + $0x8] sm:$0xff]
      %v231 = vld [vmem:[#allocation2 + $0x10] sm:$0xff]
      %v232 = vld [vmem:[#allocation2 + $0x18] sm:$0xff]
      %v233 = vld [vmem:[#allocation2 + $0x20] sm:$0xff]
      %v234 = vld [vmem:[#allocation2 + $0x28] sm:$0xff]
      %v235 = vld [vmem:[#allocation2 + $0x30] sm:$0xff]
      %v236 = vld [vmem:[#allocation2 + $0x38] sm:$0xff]
      %v237 = vld [vmem:[#allocation2 + $0x40] sm:$0xff]
      %v238 = vld [vmem:[#allocation2 + $0x48] sm:$0xff]
      %v239 = vld [vmem:[#allocation2 + $0x50] sm:$0xff]
      %v240 = vld [vmem:[#allocation2 + $0x58] sm:$0xff]
      %v241 = vld [vmem:[#allocation2 + $0x60] sm:$0xff]
      %v242 = vld [vmem:[#allocation2 + $0x68] sm:$0xff]
      %v243 = vld [vmem:[#allocation2 + $0x70] sm:$0xff]
      %v244 = vld [vmem:[#allocation2 + $0x78] sm:$0xff]
      %v245 = vld [vmem:[#allocation2 + $0x80] sm:$0xff]
      %v246 = vld [vmem:[#allocation2 + $0x88] sm:$0xff]
      %v247 = vld [vmem:[#allocation2 + $0x90] sm:$0xff]
      %v248 = vld [vmem:[#allocation2 + $0x98] sm:$0xff]
      %v249 = vld [vmem:[#allocation2 + $0xa0] sm:$0xff]
      %v250 = vld [vmem:[#allocation2 + $0xa8] sm:$0xff]
      %v251 = vld [vmem:[#allocation2 + $0xb0] sm:$0xff]
      %v252 = vld [vmem:[#allocation2 + $0xb8] sm:$0xff]
      %v253 = vld [vmem:[#allocation2 + $0xc0] sm:$0xff]
      %v254 = vld [vmem:[#allocation2 + $0xc8] sm:$0xff]
      %v255 = vld [vmem:[#allocation2 + $0xd0] sm:$0xff]
      %v256 = vld [vmem:[#allocation2 + $0xd8] sm:$0xff]
      %v257 = vld [vmem:[#allocation2 + $0xe0] sm:$0xff]
      %v258 = vld [vmem:[#allocation2 + $0xe8] sm:$0xff]
      %v259 = vld [vmem:[#allocation2 + $0xf0] sm:$0xff]
      %v260 = vld [vmem:[#allocation2 + $0xf8] sm:$0xff]
      %v261 = vld [vmem:[%s178] sm:$0xf]
      %v262 = vld [vmem:[%s178 + $0x4] sm:$0xf]
      %v263 = vld [vmem:[%s178 + $0x8] sm:$0xf]
      %v264 = vld [vmem:[%s178 + $0xc] sm:$0xf]
      %v265 = vld [vmem:[%s178 + $0x10] sm:$0xf]
      %v266 = vld [vmem:[%s178 + $0x14] sm:$0xf]
      %v267 = vld [vmem:[%s178 + $0x18] sm:$0xf]
      %v268 = vld [vmem:[%s178 + $0x1c] sm:$0xf]
      %v269 = vld [vmem:[%s178 + $0x20] sm:$0xf]
      %v270 = vld [vmem:[%s178 + $0x24] sm:$0xf]
      %v271 = vld [vmem:[%s178 + $0x28] sm:$0xf]
      %v272 = vld [vmem:[%s178 + $0x2c] sm:$0xf]
      %v273 = vld [vmem:[%s178 + $0x30] sm:$0xf]
      %v274 = vld [vmem:[%s178 + $0x34] sm:$0xf]
      %v275 = vld [vmem:[%s178 + $0x38] sm:$0xf]
      %v276 = vld [vmem:[%s178 + $0x3c] sm:$0xf]
      %v277 = vld [vmem:[%s178 + $0x40] sm:$0xf]
      %v278 = vld [vmem:[%s178 + $0x44] sm:$0xf]
      %v279 = vld [vmem:[%s178 + $0x48] sm:$0xf]
      %v280 = vld [vmem:[%s178 + $0x4c] sm:$0xf]
      %v281 = vld [vmem:[%s178 + $0x50] sm:$0xf]
      %v282 = vld [vmem:[%s178 + $0x54] sm:$0xf]
      %v283 = vld [vmem:[%s178 + $0x58] sm:$0xf]
      %v284 = vld [vmem:[%s178 + $0x5c] sm:$0xf]
      %v285 = vld [vmem:[%s178 + $0x60] sm:$0xf]
      %v286 = vld [vmem:[%s178 + $0x64] sm:$0xf]
      %v287 = vld [vmem:[%s178 + $0x68] sm:$0xf]
      %v288 = vld [vmem:[%s178 + $0x6c] sm:$0xf]
      %v289 = vld [vmem:[%s178 + $0x70] sm:$0xf]
      %v290 = vld [vmem:[%s178 + $0x74] sm:$0xf]
      %v291 = vld [vmem:[%s178 + $0x78] sm:$0xf]
      %v292 = vld [vmem:[%s178 + $0x7c] sm:$0xf]
      %v293 = vld [vmem:[%s184] sm:$0xf]
      %v294 = vld [vmem:[%s184 + $0x4] sm:$0xf]
      %v295 = vld [vmem:[%s184 + $0x8] sm:$0xf]
      %v296 = vld [vmem:[%s184 + $0xc] sm:$0xf]
      %v297 = vld [vmem:[%s184 + $0x10] sm:$0xf]
      %v298 = vld [vmem:[%s184 + $0x14] sm:$0xf]
      %v299 = vld [vmem:[%s184 + $0x18] sm:$0xf]
      %v300 = vld [vmem:[%s184 + $0x1c] sm:$0xf]
      %v301 = vld [vmem:[%s184 + $0x20] sm:$0xf]
      %v302 = vld [vmem:[%s184 + $0x24] sm:$0xf]
      %v303 = vld [vmem:[%s184 + $0x28] sm:$0xf]
      %v304 = vld [vmem:[%s184 + $0x2c] sm:$0xf]
      %v305 = vld [vmem:[%s184 + $0x30] sm:$0xf]
      %v306 = vld [vmem:[%s184 + $0x34] sm:$0xf]
      %v307 = vld [vmem:[%s184 + $0x38] sm:$0xf]
      %v308 = vld [vmem:[%s184 + $0x3c] sm:$0xf]
      %v341 = vunpack.c.l.b16 %v261
      %v342 = vunpack.c.l.b16 %v262
      %v343 = vunpack.c.l.b16 %v263
      %v344 = vunpack.c.l.b16 %v264
      %v345 = vunpack.c.l.b16 %v265
      %v346 = vunpack.c.l.b16 %v266
      %v347 = vunpack.c.l.b16 %v267
      %v348 = vunpack.c.l.b16 %v268
      %v349 = vunpack.c.l.b16 %v269
      %v350 = vunpack.c.l.b16 %v270
      %v351 = vunpack.c.l.b16 %v271
      %v352 = vunpack.c.l.b16 %v272
      %v353 = vunpack.c.l.b16 %v273
      %v354 = vunpack.c.l.b16 %v274
      %v355 = vunpack.c.l.b16 %v275
      %v356 = vunpack.c.l.b16 %v276
      %v357 = vunpack.c.l.b16 %v277
      %v358 = vunpack.c.l.b16 %v278
      %v359 = vunpack.c.l.b16 %v279
      %v360 = vunpack.c.l.b16 %v280
      %v361 = vunpack.c.l.b16 %v281
      %v362 = vunpack.c.l.b16 %v282
      %v363 = vunpack.c.l.b16 %v283
      %v364 = vunpack.c.l.b16 %v284
      %v365 = vunpack.c.l.b16 %v285
      %v366 = vunpack.c.l.b16 %v286
      %v367 = vunpack.c.l.b16 %v287
      %v368 = vunpack.c.l.b16 %v288
      %v369 = vunpack.c.l.b16 %v289
      %v370 = vunpack.c.l.b16 %v290
      %v371 = vunpack.c.l.b16 %v291
      %v372 = vunpack.c.l.b16 %v292
      %v373 = vpack.c.b16 %v342, %v341
      %v374 = vpack.c.b16 %v344, %v343
      %v375 = vpack.c.b16 %v346, %v345
      %v376 = vpack.c.b16 %v348, %v347
      %v377 = vpack.c.b16 %v350, %v349
      %v378 = vpack.c.b16 %v352, %v351
      %v379 = vpack.c.b16 %v354, %v353
      %v380 = vpack.c.b16 %v356, %v355
      %v381 = vpack.c.b16 %v358, %v357
      %v382 = vpack.c.b16 %v360, %v359
      %v383 = vpack.c.b16 %v362, %v361
      %v384 = vpack.c.b16 %v364, %v363
      %v385 = vpack.c.b16 %v366, %v365
      %v386 = vpack.c.b16 %v368, %v367
      %v387 = vpack.c.b16 %v370, %v369
      %v388 = vpack.c.b16 %v372, %v371
      %v421 = vunpack.c.l.b16 %v293
      %v422 = vunpack.c.l.b16 %v294
      %v423 = vunpack.c.l.b16 %v295
      %v424 = vunpack.c.l.b16 %v296
      %v425 = vunpack.c.l.b16 %v297
      %v426 = vunpack.c.l.b16 %v298
      %v427 = vunpack.c.l.b16 %v299
      %v428 = vunpack.c.l.b16 %v300
      %v429 = vunpack.c.l.b16 %v301
      %v430 = vunpack.c.l.b16 %v302
      %v431 = vunpack.c.l.b16 %v303
      %v432 = vunpack.c.l.b16 %v304
      %v433 = vunpack.c.l.b16 %v305
      %v434 = vunpack.c.l.b16 %v306
      %v435 = vunpack.c.l.b16 %v307
      %v436 = vunpack.c.l.b16 %v308
      %v437 = vpack.c.b16 %v422, %v421
      %v438 = vpack.c.b16 %v424, %v423
      %v439 = vpack.c.b16 %v426, %v425
      %v440 = vpack.c.b16 %v428, %v427
      %v441 = vpack.c.b16 %v430, %v429
      %v442 = vpack.c.b16 %v432, %v431
      %v443 = vpack.c.b16 %v434, %v433
      %v444 = vpack.c.b16 %v436, %v435
      %453 = vmatprep.subr.bf16.mxu0 0
      %454 = vmatpush1.bf16.msra.mxu0 %v444
      %455 = vmatprep.subr.bf16.mxu0 0
      %456 = vmatpush1.bf16.msra.mxu0 %v443
      %457 = vmatprep.subr.bf16.mxu0 0
      %458 = vmatpush1.bf16.msra.mxu0 %v442
      %459 = vmatprep.subr.bf16.mxu0 0
      %460 = vmatpush1.bf16.msra.mxu0 %v441
      %461 = vmatprep.subr.bf16.mxu0 0
      %462 = vmatpush1.bf16.msra.mxu0 %v440
      %463 = vmatprep.subr.bf16.mxu0 0
      %464 = vmatpush1.bf16.msra.mxu0 %v439
      %465 = vmatprep.subr.bf16.mxu0 0
      %466 = vmatpush1.bf16.msra.mxu0 %v438
      %467 = vmatprep.subr.bf16.mxu0 0
      %468 = vmatpush1.bf16.msra.mxu0 %v437
      %469 = vmatprep.subr.bf16.mxu0 0
      %470 = vmatpush2.bf16.msra.mxu0 0
      %471 = vmatprep.subr.bf16.mxu0 0
      %472 = vmatpush2.bf16.msra.mxu0 0
      %473 = vmatprep.subr.bf16.mxu0 0
      %474 = vmatpush2.bf16.msra.mxu0 0
      %475 = vmatprep.subr.bf16.mxu0 0
      %476 = vmatpush2.bf16.msra.mxu0 0
      %477 = vmatprep.subr.bf16.mxu0 0
      %478 = vmatpush2.bf16.msra.mxu0 0
      %479 = vmatprep.subr.bf16.mxu0 0
      %480 = vmatpush2.bf16.msra.mxu0 0
      %481 = vmatprep.subr.bf16.mxu0 0
      %482 = vmatpush2.bf16.msra.mxu0 0
      %483 = vmatprep.subr.bf16.mxu0 0
      %484 = vmatpush2.bf16.msra.mxu0 0
      %485 = vmatprep.mubr.bf16.mxu0 0
      %486 = vmatmul.mubr.bf16.gmra.mxu0 %v373
      %v487 = vpop.f32.mrf.mxu0
      %v488 = vadd.f32 0.0, %v487
      %v489 = vpop.f32.mrf.mxu0
      %v490 = vpop.f32.mrf.mxu0
      %v491 = vadd.f32 0.0, %v490
      %v492 = vpop.f32.mrf.mxu0
      %493 = vmatprep.mubr.bf16.mxu0 0
      %494 = vmatmul.mubr.bf16.gmra.mxu0 %v374
      %v495 = vpop.f32.mrf.mxu0
      %v496 = vadd.f32 0.0, %v495
      %v497 = vpop.f32.mrf.mxu0
      %v498 = vpop.f32.mrf.mxu0
      %v499 = vadd.f32 0.0, %v498
      %v500 = vpop.f32.mrf.mxu0
      %501 = vmatprep.mubr.bf16.mxu0 0
      %502 = vmatmul.mubr.bf16.gmra.mxu0 %v375
      %v503 = vpop.f32.mrf.mxu0
      %v504 = vadd.f32 0.0, %v503
      %v505 = vpop.f32.mrf.mxu0
      %v506 = vpop.f32.mrf.mxu0
      %v507 = vadd.f32 0.0, %v506
      %v508 = vpop.f32.mrf.mxu0
      %509 = vmatprep.mubr.bf16.mxu0 0
      %510 = vmatmul.mubr.bf16.gmra.mxu0 %v376
      %v511 = vpop.f32.mrf.mxu0
      %v512 = vadd.f32 0.0, %v511
      %v513 = vpop.f32.mrf.mxu0
      %v514 = vpop.f32.mrf.mxu0
      %v515 = vadd.f32 0.0, %v514
      %v516 = vpop.f32.mrf.mxu0
      %517 = vmatprep.mubr.bf16.mxu0 0
      %518 = vmatmul.mubr.bf16.gmra.mxu0 %v377
      %v519 = vpop.f32.mrf.mxu0
      %v520 = vadd.f32 0.0, %v519
      %v521 = vpop.f32.mrf.mxu0
      %v522 = vpop.f32.mrf.mxu0
      %v523 = vadd.f32 0.0, %v522
      %v524 = vpop.f32.mrf.mxu0
      %525 = vmatprep.mubr.bf16.mxu0 0
      %526 = vmatmul.mubr.bf16.gmra.mxu0 %v378
      %v527 = vpop.f32.mrf.mxu0
      %v528 = vadd.f32 0.0, %v527
      %v529 = vpop.f32.mrf.mxu0
      %v530 = vpop.f32.mrf.mxu0
      %v531 = vadd.f32 0.0, %v530
      %v532 = vpop.f32.mrf.mxu0
      %533 = vmatprep.mubr.bf16.mxu0 0
      %534 = vmatmul.mubr.bf16.gmra.mxu0 %v379
      %v535 = vpop.f32.mrf.mxu0
      %v536 = vadd.f32 0.0, %v535
      %v537 = vpop.f32.mrf.mxu0
      %v538 = vpop.f32.mrf.mxu0
      %v539 = vadd.f32 0.0, %v538
      %v540 = vpop.f32.mrf.mxu0
      %541 = vmatprep.mubr.bf16.mxu0 0
      %542 = vmatmul.mubr.bf16.gmra.mxu0 %v380
      %v543 = vpop.f32.mrf.mxu0
      %v544 = vadd.f32 0.0, %v543
      %v545 = vpop.f32.mrf.mxu0
      %v546 = vpop.f32.mrf.mxu0
      %v547 = vadd.f32 0.0, %v546
      %v548 = vpop.f32.mrf.mxu0
      %549 = vmatprep.mubr.bf16.mxu0 0
      %550 = vmatmul.mubr.bf16.gmra.mxu0 %v381
      %v551 = vpop.f32.mrf.mxu0
      %v552 = vadd.f32 0.0, %v551
      %v553 = vpop.f32.mrf.mxu0
      %v554 = vpop.f32.mrf.mxu0
      %v555 = vadd.f32 0.0, %v554
      %v556 = vpop.f32.mrf.mxu0
      %557 = vmatprep.mubr.bf16.mxu0 0
      %558 = vmatmul.mubr.bf16.gmra.mxu0 %v382
      %v559 = vpop.f32.mrf.mxu0
      %v560 = vadd.f32 0.0, %v559
      %v561 = vpop.f32.mrf.mxu0
      %v562 = vpop.f32.mrf.mxu0
      %v563 = vadd.f32 0.0, %v562
      %v564 = vpop.f32.mrf.mxu0
      %565 = vmatprep.mubr.bf16.mxu0 0
      %566 = vmatmul.mubr.bf16.gmra.mxu0 %v383
      %v567 = vpop.f32.mrf.mxu0
      %v568 = vadd.f32 0.0, %v567
      %v569 = vpop.f32.mrf.mxu0
      %v570 = vpop.f32.mrf.mxu0
      %v571 = vadd.f32 0.0, %v570
      %v572 = vpop.f32.mrf.mxu0
      %573 = vmatprep.mubr.bf16.mxu0 0
      %574 = vmatmul.mubr.bf16.gmra.mxu0 %v384
      %v575 = vpop.f32.mrf.mxu0
      %v576 = vadd.f32 0.0, %v575
      %v577 = vpop.f32.mrf.mxu0
      %v578 = vpop.f32.mrf.mxu0
      %v579 = vadd.f32 0.0, %v578
      %v580 = vpop.f32.mrf.mxu0
      %581 = vmatprep.mubr.bf16.mxu0 0
      %582 = vmatmul.mubr.bf16.gmra.mxu0 %v385
      %v583 = vpop.f32.mrf.mxu0
      %v584 = vadd.f32 0.0, %v583
      %v585 = vpop.f32.mrf.mxu0
      %v586 = vpop.f32.mrf.mxu0
      %v587 = vadd.f32 0.0, %v586
      %v588 = vpop.f32.mrf.mxu0
      %589 = vmatprep.mubr.bf16.mxu0 0
      %590 = vmatmul.mubr.bf16.gmra.mxu0 %v386
      %v591 = vpop.f32.mrf.mxu0
      %v592 = vadd.f32 0.0, %v591
      %v593 = vpop.f32.mrf.mxu0
      %v594 = vpop.f32.mrf.mxu0
      %v595 = vadd.f32 0.0, %v594
      %v596 = vpop.f32.mrf.mxu0
      %597 = vmatprep.mubr.bf16.mxu0 0
      %598 = vmatmul.mubr.bf16.gmra.mxu0 %v387
      %v599 = vpop.f32.mrf.mxu0
      %v600 = vadd.f32 0.0, %v599
      %v601 = vpop.f32.mrf.mxu0
      %v602 = vpop.f32.mrf.mxu0
      %v603 = vadd.f32 0.0, %v602
      %v604 = vpop.f32.mrf.mxu0
      %605 = vmatprep.mubr.bf16.mxu0 0
      %606 = vmatmul.mubr.bf16.gmra.mxu0 %v388
      %v607 = vpop.f32.mrf.mxu0
      %v608 = vadd.f32 0.0, %v607
      %v609 = vpop.f32.mrf.mxu0
      %v610 = vpop.f32.mrf.mxu0
      %v611 = vadd.f32 0.0, %v610
      %v612 = vpop.f32.mrf.mxu0
      %613 = vdwg.mxu0
      %v614 = vadd.f32 %v229, %v488
      %v615 = vadd.f32 %v230, %v491
      %v616 = vadd.f32 %v231, %v496
      %v617 = vadd.f32 %v232, %v499
      %v618 = vadd.f32 %v233, %v504
      %v619 = vadd.f32 %v234, %v507
      %v620 = vadd.f32 %v235, %v512
      %v621 = vadd.f32 %v236, %v515
      %v622 = vadd.f32 %v237, %v520
      %v623 = vadd.f32 %v238, %v523
      %v624 = vadd.f32 %v239, %v528
      %v625 = vadd.f32 %v240, %v531
      %v626 = vadd.f32 %v241, %v536
      %v627 = vadd.f32 %v242, %v539
      %v628 = vadd.f32 %v243, %v544
      %v629 = vadd.f32 %v244, %v547
      %v630 = vadd.f32 %v245, %v552
      %v631 = vadd.f32 %v246, %v555
      %v632 = vadd.f32 %v247, %v560
      %v633 = vadd.f32 %v248, %v563
      %v634 = vadd.f32 %v249, %v568
      %v635 = vadd.f32 %v250, %v571
      %v636 = vadd.f32 %v251, %v576
      %v637 = vadd.f32 %v252, %v579
      %v638 = vadd.f32 %v253, %v584
      %v639 = vadd.f32 %v254, %v587
      %v640 = vadd.f32 %v255, %v592
      %v641 = vadd.f32 %v256, %v595
      %v642 = vadd.f32 %v257, %v600
      %v643 = vadd.f32 %v258, %v603
      %v644 = vadd.f32 %v259, %v608
      %v645 = vadd.f32 %v260, %v611
      %646 = vst [vmem:[#allocation2] sm:$0xff] %v614
      %647 = vst [vmem:[#allocation2 + $0x8] sm:$0xff] %v615
      %648 = vst [vmem:[#allocation2 + $0x10] sm:$0xff] %v616
      %649 = vst [vmem:[#allocation2 + $0x18] sm:$0xff] %v617
      %650 = vst [vmem:[#allocation2 + $0x20] sm:$0xff] %v618
      %651 = vst [vmem:[#allocation2 + $0x28] sm:$0xff] %v619
      %652 = vst [vmem:[#allocation2 + $0x30] sm:$0xff] %v620
      %653 = vst [vmem:[#allocation2 + $0x38] sm:$0xff] %v621
      %654 = vst [vmem:[#allocation2 + $0x40] sm:$0xff] %v622
      %655 = vst [vmem:[#allocation2 + $0x48] sm:$0xff] %v623
      %656 = vst [vmem:[#allocation2 + $0x50] sm:$0xff] %v624
      %657 = vst [vmem:[#allocation2 + $0x58] sm:$0xff] %v625
      %658 = vst [vmem:[#allocation2 + $0x60] sm:$0xff] %v626
      %659 = vst [vmem:[#allocation2 + $0x68] sm:$0xff] %v627
      %660 = vst [vmem:[#allocation2 + $0x70] sm:$0xff] %v628
      %661 = vst [vmem:[#allocation2 + $0x78] sm:$0xff] %v629
      %662 = vst [vmem:[#allocation2 + $0x80] sm:$0xff] %v630
      %663 = vst [vmem:[#allocation2 + $0x88] sm:$0xff] %v631
      %664 = vst [vmem:[#allocation2 + $0x90] sm:$0xff] %v632
      %665 = vst [vmem:[#allocation2 + $0x98] sm:$0xff] %v633
      %666 = vst [vmem:[#allocation2 + $0xa0] sm:$0xff] %v634
      %667 = vst [vmem:[#allocation2 + $0xa8] sm:$0xff] %v635
      %668 = vst [vmem:[#allocation2 + $0xb0] sm:$0xff] %v636
      %669 = vst [vmem:[#allocation2 + $0xb8] sm:$0xff] %v637
      %670 = vst [vmem:[#allocation2 + $0xc0] sm:$0xff] %v638
      %671 = vst [vmem:[#allocation2 + $0xc8] sm:$0xff] %v639
      %672 = vst [vmem:[#allocation2 + $0xd0] sm:$0xff] %v640
      %673 = vst [vmem:[#allocation2 + $0xd8] sm:$0xff] %v641
      %674 = vst [vmem:[#allocation2 + $0xe0] sm:$0xff] %v642
      %675 = vst [vmem:[#allocation2 + $0xe8] sm:$0xff] %v643
      %676 = vst [vmem:[#allocation2 + $0xf0] sm:$0xff] %v644
      %677 = vst [vmem:[#allocation2 + $0xf8] sm:$0xff] %v645
      // Predicated region
      $region33: #{discriminator_forward.6} parent=27 // pred_check
        %p678 = pneg %p193
      $region34: #{discriminator_forward.6} parent=27 // pred_check_branch
        %680 = sbr.rel (%p678) target = $region36
      $region35: #{discriminator_forward.6} parent=27 // pred_region
        %v681 = vld [vmem:[#allocation2] sm:$0xff]
        %v682 = vld [vmem:[#allocation2 + $0x8] sm:$0xff]
        %v683 = vld [vmem:[#allocation2 + $0x10] sm:$0xff]
        %v684 = vld [vmem:[#allocation2 + $0x18] sm:$0xff]
        %v685 = vld [vmem:[#allocation2 + $0x20] sm:$0xff]
        %v686 = vld [vmem:[#allocation2 + $0x28] sm:$0xff]
        %v687 = vld [vmem:[#allocation2 + $0x30] sm:$0xff]
        %v688 = vld [vmem:[#allocation2 + $0x38] sm:$0xff]
        %v689 = vld [vmem:[#allocation2 + $0x40] sm:$0xff]
        %v690 = vld [vmem:[#allocation2 + $0x48] sm:$0xff]
        %v691 = vld [vmem:[#allocation2 + $0x50] sm:$0xff]
        %v692 = vld [vmem:[#allocation2 + $0x58] sm:$0xff]
        %v693 = vld [vmem:[#allocation2 + $0x60] sm:$0xff]
        %v694 = vld [vmem:[#allocation2 + $0x68] sm:$0xff]
        %v695 = vld [vmem:[#allocation2 + $0x70] sm:$0xff]
        %v696 = vld [vmem:[#allocation2 + $0x78] sm:$0xff]
        %v697 = vld [vmem:[#allocation2 + $0x80] sm:$0xff]
        %v698 = vld [vmem:[#allocation2 + $0x88] sm:$0xff]
        %v699 = vld [vmem:[#allocation2 + $0x90] sm:$0xff]
        %v700 = vld [vmem:[#allocation2 + $0x98] sm:$0xff]
        %v701 = vld [vmem:[#allocation2 + $0xa0] sm:$0xff]
        %v702 = vld [vmem:[#allocation2 + $0xa8] sm:$0xff]
        %v703 = vld [vmem:[#allocation2 + $0xb0] sm:$0xff]
        %v704 = vld [vmem:[#allocation2 + $0xb8] sm:$0xff]
        %v705 = vld [vmem:[#allocation2 + $0xc0] sm:$0xff]
        %v706 = vld [vmem:[#allocation2 + $0xc8] sm:$0xff]
        %v707 = vld [vmem:[#allocation2 + $0xd0] sm:$0xff]
        %v708 = vld [vmem:[#allocation2 + $0xd8] sm:$0xff]
        %v709 = vld [vmem:[#allocation2 + $0xe0] sm:$0xff]
        %v710 = vld [vmem:[#allocation2 + $0xe8] sm:$0xff]
        %v711 = vld [vmem:[#allocation2 + $0xf0] sm:$0xff]
        %v712 = vld [vmem:[#allocation2 + $0xf8] sm:$0xff]
        %v713 = vmul.f32 %v681, 0.2
        %v714 = vmul.f32 %v682, 0.2
        %v715 = vmul.f32 %v683, 0.2
        %v716 = vmul.f32 %v684, 0.2
        %v717 = vmul.f32 %v685, 0.2
        %v718 = vmul.f32 %v686, 0.2
        %v719 = vmul.f32 %v687, 0.2
        %v720 = vmul.f32 %v688, 0.2
        %v721 = vmul.f32 %v689, 0.2
        %v722 = vmul.f32 %v690, 0.2
        %v723 = vmul.f32 %v691, 0.2
        %v724 = vmul.f32 %v692, 0.2
        %v725 = vmul.f32 %v693, 0.2
        %v726 = vmul.f32 %v694, 0.2
        %v727 = vmul.f32 %v695, 0.2
        %v728 = vmul.f32 %v696, 0.2
        %v729 = vmul.f32 %v697, 0.2
        %v730 = vmul.f32 %v698, 0.2
        %v731 = vmul.f32 %v699, 0.2
        %v732 = vmul.f32 %v700, 0.2
        %v733 = vmul.f32 %v701, 0.2
        %v734 = vmul.f32 %v702, 0.2
        %v735 = vmul.f32 %v703, 0.2
        %v736 = vmul.f32 %v704, 0.2
        %v737 = vmul.f32 %v705, 0.2
        %v738 = vmul.f32 %v706, 0.2
        %v739 = vmul.f32 %v707, 0.2
        %v740 = vmul.f32 %v708, 0.2
        %v741 = vmul.f32 %v709, 0.2
        %v742 = vmul.f32 %v710, 0.2
        %v743 = vmul.f32 %v711, 0.2
        %v744 = vmul.f32 %v712, 0.2
        %v745 = vmax.f32 %v681, %v713
        %v746 = vmax.f32 %v682, %v714
        %v747 = vmax.f32 %v683, %v715
        %v748 = vmax.f32 %v684, %v716
        %v749 = vmax.f32 %v685, %v717
        %v750 = vmax.f32 %v686, %v718
        %v751 = vmax.f32 %v687, %v719
        %v752 = vmax.f32 %v688, %v720
        %v753 = vmax.f32 %v689, %v721
        %v754 = vmax.f32 %v690, %v722
        %v755 = vmax.f32 %v691, %v723
        %v756 = vmax.f32 %v692, %v724
        %v757 = vmax.f32 %v693, %v725
        %v758 = vmax.f32 %v694, %v726
        %v759 = vmax.f32 %v695, %v727
        %v760 = vmax.f32 %v696, %v728
        %v761 = vmax.f32 %v697, %v729
        %v762 = vmax.f32 %v698, %v730
        %v763 = vmax.f32 %v699, %v731
        %v764 = vmax.f32 %v700, %v732
        %v765 = vmax.f32 %v701, %v733
        %v766 = vmax.f32 %v702, %v734
        %v767 = vmax.f32 %v703, %v735
        %v768 = vmax.f32 %v704, %v736
        %v769 = vmax.f32 %v705, %v737
        %v770 = vmax.f32 %v706, %v738
        %v771 = vmax.f32 %v707, %v739
        %v772 = vmax.f32 %v708, %v740
        %v773 = vmax.f32 %v709, %v741
        %v774 = vmax.f32 %v710, %v742
        %v775 = vmax.f32 %v711, %v743
        %v776 = vmax.f32 %v712, %v744
        %v777 = vpack.c.bf16 %v746, %v745
        %v778 = vpack.c.bf16 %v748, %v747
        %v779 = vpack.c.bf16 %v750, %v749
        %v780 = vpack.c.bf16 %v752, %v751
        %v781 = vpack.c.bf16 %v754, %v753
        %v782 = vpack.c.bf16 %v756, %v755
        %v783 = vpack.c.bf16 %v758, %v757
        %v784 = vpack.c.bf16 %v760, %v759
        %v785 = vpack.c.bf16 %v762, %v761
        %v786 = vpack.c.bf16 %v764, %v763
        %v787 = vpack.c.bf16 %v766, %v765
        %v788 = vpack.c.bf16 %v768, %v767
        %v789 = vpack.c.bf16 %v770, %v769
        %v790 = vpack.c.bf16 %v772, %v771
        %v791 = vpack.c.bf16 %v774, %v773
        %v792 = vpack.c.bf16 %v776, %v775
        %v809 = vunpack.c.l.b16 %v777
        %v810 = vunpack.c.h.b16 %v777
        %v811 = vunpack.c.l.b16 %v778
        %v812 = vunpack.c.h.b16 %v778
        %v813 = vunpack.c.l.b16 %v779
        %v814 = vunpack.c.h.b16 %v779
        %v815 = vunpack.c.l.b16 %v780
        %v816 = vunpack.c.h.b16 %v780
        %v817 = vunpack.c.l.b16 %v781
        %v818 = vunpack.c.h.b16 %v781
        %v819 = vunpack.c.l.b16 %v782
        %v820 = vunpack.c.h.b16 %v782
        %v821 = vunpack.c.l.b16 %v783
        %v822 = vunpack.c.h.b16 %v783
        %v823 = vunpack.c.l.b16 %v784
        %v824 = vunpack.c.h.b16 %v784
        %v825 = vunpack.c.l.b16 %v785
        %v826 = vunpack.c.h.b16 %v785
        %v827 = vunpack.c.l.b16 %v786
        %v828 = vunpack.c.h.b16 %v786
        %v829 = vunpack.c.l.b16 %v787
        %v830 = vunpack.c.h.b16 %v787
        %v831 = vunpack.c.l.b16 %v788
        %v832 = vunpack.c.h.b16 %v788
        %v833 = vunpack.c.l.b16 %v789
        %v834 = vunpack.c.h.b16 %v789
        %v835 = vunpack.c.l.b16 %v790
        %v836 = vunpack.c.h.b16 %v790
        %v837 = vunpack.c.l.b16 %v791
        %v838 = vunpack.c.h.b16 %v791
        %v839 = vunpack.c.l.b16 %v792
        %v840 = vunpack.c.h.b16 %v792
        %v841 = vpack.c.b16 %v809, %v809
        %v842 = vpack.c.b16 %v810, %v810
        %v843 = vpack.c.b16 %v811, %v811
        %v844 = vpack.c.b16 %v812, %v812
        %v845 = vpack.c.b16 %v813, %v813
        %v846 = vpack.c.b16 %v814, %v814
        %v847 = vpack.c.b16 %v815, %v815
        %v848 = vpack.c.b16 %v816, %v816
        %v849 = vpack.c.b16 %v817, %v817
        %v850 = vpack.c.b16 %v818, %v818
        %v851 = vpack.c.b16 %v819, %v819
        %v852 = vpack.c.b16 %v820, %v820
        %v853 = vpack.c.b16 %v821, %v821
        %v854 = vpack.c.b16 %v822, %v822
        %v855 = vpack.c.b16 %v823, %v823
        %v856 = vpack.c.b16 %v824, %v824
        %v857 = vpack.c.b16 %v825, %v825
        %v858 = vpack.c.b16 %v826, %v826
        %v859 = vpack.c.b16 %v827, %v827
        %v860 = vpack.c.b16 %v828, %v828
        %v861 = vpack.c.b16 %v829, %v829
        %v862 = vpack.c.b16 %v830, %v830
        %v863 = vpack.c.b16 %v831, %v831
        %v864 = vpack.c.b16 %v832, %v832
        %v865 = vpack.c.b16 %v833, %v833
        %v866 = vpack.c.b16 %v834, %v834
        %v867 = vpack.c.b16 %v835, %v835
        %v868 = vpack.c.b16 %v836, %v836
        %v869 = vpack.c.b16 %v837, %v837
        %v870 = vpack.c.b16 %v838, %v838
        %v871 = vpack.c.b16 %v839, %v839
        %v872 = vpack.c.b16 %v840, %v840
        %905 = vst [vmem:[%s190] sm:$0xf] %v841
        %906 = vst [vmem:[%s190 + $0x4] sm:$0xf] %v842
        %907 = vst [vmem:[%s190 + $0x8] sm:$0xf] %v843
        %908 = vst [vmem:[%s190 + $0xc] sm:$0xf] %v844
        %909 = vst [vmem:[%s190 + $0x10] sm:$0xf] %v845
        %910 = vst [vmem:[%s190 + $0x14] sm:$0xf] %v846
        %911 = vst [vmem:[%s190 + $0x18] sm:$0xf] %v847
        %912 = vst [vmem:[%s190 + $0x1c] sm:$0xf] %v848
        %913 = vst [vmem:[%s190 + $0x20] sm:$0xf] %v849
        %914 = vst [vmem:[%s190 + $0x24] sm:$0xf] %v850
        %915 = vst [vmem:[%s190 + $0x28] sm:$0xf] %v851
        %916 = vst [vmem:[%s190 + $0x2c] sm:$0xf] %v852
        %917 = vst [vmem:[%s190 + $0x30] sm:$0xf] %v853
        %918 = vst [vmem:[%s190 + $0x34] sm:$0xf] %v854
        %919 = vst [vmem:[%s190 + $0x38] sm:$0xf] %v855
        %920 = vst [vmem:[%s190 + $0x3c] sm:$0xf] %v856
        %921 = vst [vmem:[%s190 + $0x40] sm:$0xf] %v857
        %922 = vst [vmem:[%s190 + $0x44] sm:$0xf] %v858
        %923 = vst [vmem:[%s190 + $0x48] sm:$0xf] %v859
        %924 = vst [vmem:[%s190 + $0x4c] sm:$0xf] %v860
        %925 = vst [vmem:[%s190 + $0x50] sm:$0xf] %v861
        %926 = vst [vmem:[%s190 + $0x54] sm:$0xf] %v862
        %927 = vst [vmem:[%s190 + $0x58] sm:$0xf] %v863
        %928 = vst [vmem:[%s190 + $0x5c] sm:$0xf] %v864
        %929 = vst [vmem:[%s190 + $0x60] sm:$0xf] %v865
        %930 = vst [vmem:[%s190 + $0x64] sm:$0xf] %v866
        %931 = vst [vmem:[%s190 + $0x68] sm:$0xf] %v867
        %932 = vst [vmem:[%s190 + $0x6c] sm:$0xf] %v868
        %933 = vst [vmem:[%s190 + $0x70] sm:$0xf] %v869
        %934 = vst [vmem:[%s190 + $0x74] sm:$0xf] %v870
        %935 = vst [vmem:[%s190 + $0x78] sm:$0xf] %v871
        %936 = vst [vmem:[%s190 + $0x7c] sm:$0xf] %v872
      $region36: #{discriminator_forward.6} parent=27 // pred_fallthru
        _
      %s937 = smul.u32 32, %s17
      %p938 = scmp.lt.s32.totalorder %s937, 63
      %s939 = scalar_select %p938, %s937, 63
      %s940 = smul.addr %s939, 4
      %s941 = scalar_lea.vmem %s2, %s940
      // Predicated region
      $region37: #{discriminator_forward.6} parent=27 // pred_check
        %p942 = pneg %p97
      $region38: #{discriminator_forward.6} parent=27 // pred_check_branch
        %944 = sbr.rel (%p942) target = $region40
      $region39: #{discriminator_forward.6} parent=27 // pred_region
        %s945 = smul.u32 32, %s17
      $region40: #{discriminator_forward.6} parent=27 // pred_fallthru
        _
    $region28: #{discriminator_forward.6} parent=5 // pred_fallthru
      _
    %p946 = scmp.le.s32.totalorder 2, %s8
    // Predicated region
    $region41: #{discriminator_forward.6} parent=5 // pred_check
      %p947 = pneg %p946
    $region42: #{discriminator_forward.6} parent=5 // pred_check_branch
      %949 = sbr.rel (%p947) target = $region44
    $region43: #{discriminator_forward.6} parent=5 // pred_region
      %s950 = ssub.s32 %s8, 2
      // Predicated region
      $region45: #{discriminator_forward.6} parent=43 // pred_check
        %p951 = pneg %p103
      $region46: #{discriminator_forward.6} parent=43 // pred_check_branch
        %953 = sbr.rel (%p951) target = $region48
      $region47: #{discriminator_forward.6} parent=43 // pred_region
        %s954 = smul.u32 32, %s19
        %p955 = scmp.lt.s32.totalorder %s954, 63
        %s956 = scalar_select %p955, %s954, 63
        %s957 = smul.addr %s956, 4
        %s958 = scalar_lea.vmem %s2, %s957
      $region48: #{discriminator_forward.6} parent=43 // pred_fallthru
        _
    $region44: #{discriminator_forward.6} parent=5 // pred_fallthru
      _
  $region6: #{discriminator_forward.6} parent=0 // loop_footer
    %s12 = sadd.s32 1, %s8
  $region7: #{discriminator_forward.6} parent=0 // loop_footer_branch
    %7 = sbr.rel target = $region3
  $region8: #{discriminator_forward.6} parent=0 // loop_exit
    _

// kernel: discriminator_forward.8
$region0: #{discriminator_forward.8}
  #allocation0 [shape = 'u32[]', space=smem, size = 0x4, offset = 0x4, fixed_abs, tag = 'smem constant byte address 0x4 - core index']
  #allocation1 [shape = 'u32[144,128]{1,0:T(1,128)}', space=vmem, size = 0x12000, scoped, tag = 'internal scratch']
  %s0 = inlined_call_operand.vmem [shape: f32[128,128], index: 0, kind: input, shape index: {}]
  %s1 = inlined_call_operand.vmem [shape: f32[1,128], index: 1, kind: input, shape index: {}]
  %s2 = inlined_call_operand.vmem [shape: f32[1,128], index: 2, kind: input, shape index: {}]
  %s3 = inlined_call_operand.vmem [shape: bf16[128,128], index: 3, kind: output, shape index: {}]
  %s4 = sld [smem:[#allocation0]]
  $region22: #{discriminator_forward.8} parent=0
    _
  %s6 = ssub.s32 1, %s4
  %s7 = scalar_select 0, %s6, %s4
  // Predicated region
  $region2: #{discriminator_forward.8} parent=0 // pred_check
    _
  $region3: #{discriminator_forward.8} parent=0 // pred_check_branch
    %9 = sbr.rel (0) target = $region5
  $region4: #{discriminator_forward.8} parent=0 // pred_region
    _
  $region5: #{discriminator_forward.8} parent=0 // pred_fallthru
    _
  // Predicated region
  $region6: #{discriminator_forward.8} parent=0 // pred_check
    _
  $region7: #{discriminator_forward.8} parent=0 // pred_check_branch
    %11 = sbr.rel (0) target = $region9
  $region8: #{discriminator_forward.8} parent=0 // pred_region
    _
  $region9: #{discriminator_forward.8} parent=0 // pred_fallthru
    _
  // Predicated region
  $region10: #{discriminator_forward.8} parent=0 // pred_check
    _
  $region11: #{discriminator_forward.8} parent=0 // pred_check_branch
    %13 = sbr.rel (0) target = $region13
  $region12: #{discriminator_forward.8} parent=0 // pred_region
    _
  $region13: #{discriminator_forward.8} parent=0 // pred_fallthru
    _
  %v14 = vld [vmem:[%s0] sm:$0xff]
  %v15 = vld [vmem:[%s0 + $0x8] sm:$0xff]
  %v16 = vld [vmem:[%s0 + $0x10] sm:$0xff]
  %v17 = vld [vmem:[%s0 + $0x18] sm:$0xff]
  %v18 = vld [vmem:[%s0 + $0x20] sm:$0xff]
  %v19 = vld [vmem:[%s0 + $0x28] sm:$0xff]
  %v20 = vld [vmem:[%s0 + $0x30] sm:$0xff]
  %v21 = vld [vmem:[%s0 + $0x38] sm:$0xff]
  %v22 = vld [vmem:[%s0 + $0x40] sm:$0xff]
  %v23 = vld [vmem:[%s0 + $0x48] sm:$0xff]
  %v24 = vld [vmem:[%s0 + $0x50] sm:$0xff]
  %v25 = vld [vmem:[%s0 + $0x58] sm:$0xff]
  %v26 = vld [vmem:[%s0 + $0x60] sm:$0xff]
  %v27 = vld [vmem:[%s0 + $0x68] sm:$0xff]
  %v28 = vld [vmem:[%s0 + $0x70] sm:$0xff]
  %v29 = vld [vmem:[%s0 + $0x78] sm:$0xff]
  %v30 = vld [vmem:[%s1] sm:$0x1]
  %v32 = vlaneseq
  %v33 = vshrl.u32 %v32, 7
  %v34 = vsub.s32 0, %v33
  %v35 = vrot.slane %v30, %v34
  %v37 = vmul.f32 %v14, %v35
  %v38 = vmul.f32 %v15, %v35
  %v39 = vmul.f32 %v16, %v35
  %v40 = vmul.f32 %v17, %v35
  %v41 = vmul.f32 %v18, %v35
  %v42 = vmul.f32 %v19, %v35
  %v43 = vmul.f32 %v20, %v35
  %v44 = vmul.f32 %v21, %v35
  %v45 = vmul.f32 %v22, %v35
  %v46 = vmul.f32 %v23, %v35
  %v47 = vmul.f32 %v24, %v35
  %v48 = vmul.f32 %v25, %v35
  %v49 = vmul.f32 %v26, %v35
  %v50 = vmul.f32 %v27, %v35
  %v51 = vmul.f32 %v28, %v35
  %v52 = vmul.f32 %v29, %v35
  %v53 = vld [vmem:[%s2] sm:$0x1]
  %v55 = vlaneseq
  %v56 = vshrl.u32 %v55, 7
  %v57 = vsub.s32 0, %v56
  %v58 = vrot.slane %v53, %v57
  %v60 = vadd.f32 %v37, %v58
  %v61 = vadd.f32 %v38, %v58
  %v62 = vadd.f32 %v39, %v58
  %v63 = vadd.f32 %v40, %v58
  %v64 = vadd.f32 %v41, %v58
  %v65 = vadd.f32 %v42, %v58
  %v66 = vadd.f32 %v43, %v58
  %v67 = vadd.f32 %v44, %v58
  %v68 = vadd.f32 %v45, %v58
  %v69 = vadd.f32 %v46, %v58
  %v70 = vadd.f32 %v47, %v58
  %v71 = vadd.f32 %v48, %v58
  %v72 = vadd.f32 %v49, %v58
  %v73 = vadd.f32 %v50, %v58
  %v74 = vadd.f32 %v51, %v58
  %v75 = vadd.f32 %v52, %v58
  %v76 = vmul.f32 %v60, 0.2
  %v77 = vmul.f32 %v61, 0.2
  %v78 = vmul.f32 %v62, 0.2
  %v79 = vmul.f32 %v63, 0.2
  %v80 = vmul.f32 %v64, 0.2
  %v81 = vmul.f32 %v65, 0.2
  %v82 = vmul.f32 %v66, 0.2
  %v83 = vmul.f32 %v67, 0.2
  %v84 = vmul.f32 %v68, 0.2
  %v85 = vmul.f32 %v69, 0.2
  %v86 = vmul.f32 %v70, 0.2
  %v87 = vmul.f32 %v71, 0.2
  %v88 = vmul.f32 %v72, 0.2
  %v89 = vmul.f32 %v73, 0.2
  %v90 = vmul.f32 %v74, 0.2
  %v91 = vmul.f32 %v75, 0.2
  %v92 = vmax.f32 %v60, %v76
  %v93 = vmax.f32 %v61, %v77
  %v94 = vmax.f32 %v62, %v78
  %v95 = vmax.f32 %v63, %v79
  %v96 = vmax.f32 %v64, %v80
  %v97 = vmax.f32 %v65, %v81
  %v98 = vmax.f32 %v66, %v82
  %v99 = vmax.f32 %v67, %v83
  %v100 = vmax.f32 %v68, %v84
  %v101 = vmax.f32 %v69, %v85
  %v102 = vmax.f32 %v70, %v86
  %v103 = vmax.f32 %v71, %v87
  %v104 = vmax.f32 %v72, %v88
  %v105 = vmax.f32 %v73, %v89
  %v106 = vmax.f32 %v74, %v90
  %v107 = vmax.f32 %v75, %v91
  %v108 = vpack.c.bf16 %v93, %v92
  %v109 = vpack.c.bf16 %v95, %v94
  %v110 = vpack.c.bf16 %v97, %v96
  %v111 = vpack.c.bf16 %v99, %v98
  %v112 = vpack.c.bf16 %v101, %v100
  %v113 = vpack.c.bf16 %v103, %v102
  %v114 = vpack.c.bf16 %v105, %v104
  %v115 = vpack.c.bf16 %v107, %v106
  %v124 = vunpack.c.l.b16 %v108
  %v125 = vunpack.c.h.b16 %v108
  %v126 = vunpack.c.l.b16 %v109
  %v127 = vunpack.c.h.b16 %v109
  %v128 = vunpack.c.l.b16 %v110
  %v129 = vunpack.c.h.b16 %v110
  %v130 = vunpack.c.l.b16 %v111
  %v131 = vunpack.c.h.b16 %v111
  %v132 = vunpack.c.l.b16 %v112
  %v133 = vunpack.c.h.b16 %v112
  %v134 = vunpack.c.l.b16 %v113
  %v135 = vunpack.c.h.b16 %v113
  %v136 = vunpack.c.l.b16 %v114
  %v137 = vunpack.c.h.b16 %v114
  %v138 = vunpack.c.l.b16 %v115
  %v139 = vunpack.c.h.b16 %v115
  %v140 = vpack.c.b16 %v124, %v124
  %v141 = vpack.c.b16 %v125, %v125
  %v142 = vpack.c.b16 %v126, %v126
  %v143 = vpack.c.b16 %v127, %v127
  %v144 = vpack.c.b16 %v128, %v128
  %v145 = vpack.c.b16 %v129, %v129
  %v146 = vpack.c.b16 %v130, %v130
  %v147 = vpack.c.b16 %v131, %v131
  %v148 = vpack.c.b16 %v132, %v132
  %v149 = vpack.c.b16 %v133, %v133
  %v150 = vpack.c.b16 %v134, %v134
  %v151 = vpack.c.b16 %v135, %v135
  %v152 = vpack.c.b16 %v136, %v136
  %v153 = vpack.c.b16 %v137, %v137
  %v154 = vpack.c.b16 %v138, %v138
  %v155 = vpack.c.b16 %v139, %v139
  %172 = vst [vmem:[%s3] sm:$0xf] %v140
  %173 = vst [vmem:[%s3 + $0x4] sm:$0xf] %v141
  %174 = vst [vmem:[%s3 + $0x8] sm:$0xf] %v142
  %175 = vst [vmem:[%s3 + $0xc] sm:$0xf] %v143
  %176 = vst [vmem:[%s3 + $0x10] sm:$0xf] %v144
  %177 = vst [vmem:[%s3 + $0x14] sm:$0xf] %v145
  %178 = vst [vmem:[%s3 + $0x18] sm:$0xf] %v146
  %179 = vst [vmem:[%s3 + $0x1c] sm:$0xf] %v147
  %180 = vst [vmem:[%s3 + $0x20] sm:$0xf] %v148
  %181 = vst [vmem:[%s3 + $0x24] sm:$0xf] %v149
  %182 = vst [vmem:[%s3 + $0x28] sm:$0xf] %v150
  %183 = vst [vmem:[%s3 + $0x2c] sm:$0xf] %v151
  %184 = vst [vmem:[%s3 + $0x30] sm:$0xf] %v152
  %185 = vst [vmem:[%s3 + $0x34] sm:$0xf] %v153
  %186 = vst [vmem:[%s3 + $0x38] sm:$0xf] %v154
  %187 = vst [vmem:[%s3 + $0x3c] sm:$0xf] %v155
  // Predicated region
  $region14: #{discriminator_forward.8} parent=0 // pred_check
    _
  $region15: #{discriminator_forward.8} parent=0 // pred_check_branch
    %189 = sbr.rel (0) target = $region17
  $region16: #{discriminator_forward.8} parent=0 // pred_region
    _
  $region17: #{discriminator_forward.8} parent=0 // pred_fallthru
    _
  // Predicated region
  $region18: #{discriminator_forward.8} parent=0 // pred_check
    _
  $region19: #{discriminator_forward.8} parent=0 // pred_check_branch
    %191 = sbr.rel (0) target = $region21
  $region20: #{discriminator_forward.8} parent=0 // pred_region
    _
  $region21: #{discriminator_forward.8} parent=0 // pred_fallthru
    _

// kernel: discriminator_forward.7
$region0: #{discriminator_forward.7}
  #allocation0 [shape = 'u32[]', space=smem, size = 0x4, offset = 0x4, fixed_abs, tag = 'smem constant byte address 0x4 - core index']
  #allocation1 [shape = 'u32[144,128]{1,0:T(1,128)}', space=vmem, size = 0x12000, scoped, tag = 'internal scratch']
  #allocation2 [shape = 'f32[128,128]{1,0:T(8,128)}', space=vmem, size = 0x10000, scoped, tag = 'scratch operand']
  %s0 = inlined_call_operand.vmem [shape: bf16[128,640], index: 0, kind: input, shape index: {}]
  %s1 = inlined_call_operand.vmem [shape: bf16[640,128], index: 1, kind: input, shape index: {}]
  %s2 = inlined_call_operand.vmem [shape: f32[128,128], index: 2, kind: output, shape index: {0}]
  %s3 = inlined_call_operand.vmem [shape: f32[8,128], index: 3, kind: output, shape index: {1}]
  %s4 = inlined_call_operand.vmem [shape: f32[8,128], index: 4, kind: output, shape index: {2}]
  %5 = xla_tuple %s2, %s3, %s4
  %s6 = sld [smem:[#allocation0]]
  $region42: #{discriminator_forward.7} parent=0
    _
  %s8 = ssub.s32 1, %s6
  %s9 = scalar_select 0, %s8, %s6
  // Predicated region
  $region2: #{discriminator_forward.7} parent=0 // pred_check
    _
  $region3: #{discriminator_forward.7} parent=0 // pred_check_branch
    %11 = sbr.rel (0) target = $region5
  $region4: #{discriminator_forward.7} parent=0 // pred_region
    _
  $region5: #{discriminator_forward.7} parent=0 // pred_fallthru
    _
  // Predicated region
  $region6: #{discriminator_forward.7} parent=0 // pred_check
    _
  $region7: #{discriminator_forward.7} parent=0 // pred_check_branch
    %13 = sbr.rel (0) target = $region9
  $region8: #{discriminator_forward.7} parent=0 // pred_region
    _
  $region9: #{discriminator_forward.7} parent=0 // pred_fallthru
    _
  %p15 = scmp.eq.s32.totalorder 0, 0
  // Predicated region
  $region10: #{discriminator_forward.7} parent=0 // pred_check
    %p16 = pneg %p15
  $region11: #{discriminator_forward.7} parent=0 // pred_check_branch
    %18 = sbr.rel (%p16) target = $region13
  $region12: #{discriminator_forward.7} parent=0 // pred_region
    %19 = vst [vmem:[#allocation2] sm:$0xff] 0.0
    %20 = vst [vmem:[#allocation2 + $0x8] sm:$0xff] 0.0
    %21 = vst [vmem:[#allocation2 + $0x10] sm:$0xff] 0.0
    %22 = vst [vmem:[#allocation2 + $0x18] sm:$0xff] 0.0
    %23 = vst [vmem:[#allocation2 + $0x20] sm:$0xff] 0.0
    %24 = vst [vmem:[#allocation2 + $0x28] sm:$0xff] 0.0
    %25 = vst [vmem:[#allocation2 + $0x30] sm:$0xff] 0.0
    %26 = vst [vmem:[#allocation2 + $0x38] sm:$0xff] 0.0
    %27 = vst [vmem:[#allocation2 + $0x40] sm:$0xff] 0.0
    %28 = vst [vmem:[#allocation2 + $0x48] sm:$0xff] 0.0
    %29 = vst [vmem:[#allocation2 + $0x50] sm:$0xff] 0.0
    %30 = vst [vmem:[#allocation2 + $0x58] sm:$0xff] 0.0
    %31 = vst [vmem:[#allocation2 + $0x60] sm:$0xff] 0.0
    %32 = vst [vmem:[#allocation2 + $0x68] sm:$0xff] 0.0
    %33 = vst [vmem:[#allocation2 + $0x70] sm:$0xff] 0.0
    %34 = vst [vmem:[#allocation2 + $0x78] sm:$0xff] 0.0
  $region13: #{discriminator_forward.7} parent=0 // pred_fallthru
    _
  %v35 = vld [vmem:[#allocation2] sm:$0xff]
  %v36 = vld [vmem:[#allocation2 + $0x8] sm:$0xff]
  %v37 = vld [vmem:[#allocation2 + $0x10] sm:$0xff]
  %v38 = vld [vmem:[#allocation2 + $0x18] sm:$0xff]
  %v39 = vld [vmem:[#allocation2 + $0x20] sm:$0xff]
  %v40 = vld [vmem:[#allocation2 + $0x28] sm:$0xff]
  %v41 = vld [vmem:[#allocation2 + $0x30] sm:$0xff]
  %v42 = vld [vmem:[#allocation2 + $0x38] sm:$0xff]
  %v43 = vld [vmem:[#allocation2 + $0x40] sm:$0xff]
  %v44 = vld [vmem:[#allocation2 + $0x48] sm:$0xff]
  %v45 = vld [vmem:[#allocation2 + $0x50] sm:$0xff]
  %v46 = vld [vmem:[#allocation2 + $0x58] sm:$0xff]
  %v47 = vld [vmem:[#allocation2 + $0x60] sm:$0xff]
  %v48 = vld [vmem:[#allocation2 + $0x68] sm:$0xff]
  %v49 = vld [vmem:[#allocation2 + $0x70] sm:$0xff]
  %v50 = vld [vmem:[#allocation2 + $0x78] sm:$0xff]
  %v51 = vld [vmem:[%s0] sm:$0xff]
  %v52 = vld [vmem:[%s0 + $0x8] sm:$0xff]
  %v53 = vld [vmem:[%s0 + $0x10] sm:$0xf]
  %v54 = vld [vmem:[%s0 + $0x14] sm:$0xff]
  %v55 = vld [vmem:[%s0 + $0x1c] sm:$0xff]
  %v56 = vld [vmem:[%s0 + $0x24] sm:$0xf]
  %v57 = vld [vmem:[%s0 + $0x28] sm:$0xff]
  %v58 = vld [vmem:[%s0 + $0x30] sm:$0xff]
  %v59 = vld [vmem:[%s0 + $0x38] sm:$0xf]
  %v60 = vld [vmem:[%s0 + $0x3c] sm:$0xff]
  %v61 = vld [vmem:[%s0 + $0x44] sm:$0xff]
  %v62 = vld [vmem:[%s0 + $0x4c] sm:$0xf]
  %v63 = vld [vmem:[%s0 + $0x50] sm:$0xff]
  %v64 = vld [vmem:[%s0 + $0x58] sm:$0xff]
  %v65 = vld [vmem:[%s0 + $0x60] sm:$0xf]
  %v66 = vld [vmem:[%s0 + $0x64] sm:$0xff]
  %v67 = vld [vmem:[%s0 + $0x6c] sm:$0xff]
  %v68 = vld [vmem:[%s0 + $0x74] sm:$0xf]
  %v69 = vld [vmem:[%s0 + $0x78] sm:$0xff]
  %v70 = vld [vmem:[%s0 + $0x80] sm:$0xff]
  %v71 = vld [vmem:[%s0 + $0x88] sm:$0xf]
  %v72 = vld [vmem:[%s0 + $0x8c] sm:$0xff]
  %v73 = vld [vmem:[%s0 + $0x94] sm:$0xff]
  %v74 = vld [vmem:[%s0 + $0x9c] sm:$0xf]
  %v75 = vld [vmem:[%s0 + $0xa0] sm:$0xff]
  %v76 = vld [vmem:[%s0 + $0xa8] sm:$0xff]
  %v77 = vld [vmem:[%s0 + $0xb0] sm:$0xf]
  %v78 = vld [vmem:[%s0 + $0xb4] sm:$0xff]
  %v79 = vld [vmem:[%s0 + $0xbc] sm:$0xff]
  %v80 = vld [vmem:[%s0 + $0xc4] sm:$0xf]
  %v81 = vld [vmem:[%s0 + $0xc8] sm:$0xff]
  %v82 = vld [vmem:[%s0 + $0xd0] sm:$0xff]
  %v83 = vld [vmem:[%s0 + $0xd8] sm:$0xf]
  %v84 = vld [vmem:[%s0 + $0xdc] sm:$0xff]
  %v85 = vld [vmem:[%s0 + $0xe4] sm:$0xff]
  %v86 = vld [vmem:[%s0 + $0xec] sm:$0xf]
  %v87 = vld [vmem:[%s0 + $0xf0] sm:$0xff]
  %v88 = vld [vmem:[%s0 + $0xf8] sm:$0xff]
  %v89 = vld [vmem:[%s0 + $0x100] sm:$0xf]
  %v90 = vld [vmem:[%s0 + $0x104] sm:$0xff]
  %v91 = vld [vmem:[%s0 + $0x10c] sm:$0xff]
  %v92 = vld [vmem:[%s0 + $0x114] sm:$0xf]
  %v93 = vld [vmem:[%s0 + $0x118] sm:$0xff]
  %v94 = vld [vmem:[%s0 + $0x120] sm:$0xff]
  %v95 = vld [vmem:[%s0 + $0x128] sm:$0xf]
  %v96 = vld [vmem:[%s0 + $0x12c] sm:$0xff]
  %v97 = vld [vmem:[%s0 + $0x134] sm:$0xff]
  %v98 = vld [vmem:[%s0 + $0x13c] sm:$0xf]
  %v99 = vld [vmem:[%s1] sm:$0xf]
  %v100 = vld [vmem:[%s1 + $0x4] sm:$0xf]
  %v101 = vld [vmem:[%s1 + $0x8] sm:$0xf]
  %v102 = vld [vmem:[%s1 + $0xc] sm:$0xf]
  %v103 = vld [vmem:[%s1 + $0x10] sm:$0xf]
  %v104 = vld [vmem:[%s1 + $0x14] sm:$0xf]
  %v105 = vld [vmem:[%s1 + $0x18] sm:$0xf]
  %v106 = vld [vmem:[%s1 + $0x1c] sm:$0xf]
  %v107 = vld [vmem:[%s1 + $0x20] sm:$0xf]
  %v108 = vld [vmem:[%s1 + $0x24] sm:$0xf]
  %v109 = vld [vmem:[%s1 + $0x28] sm:$0xf]
  %v110 = vld [vmem:[%s1 + $0x2c] sm:$0xf]
  %v111 = vld [vmem:[%s1 + $0x30] sm:$0xf]
  %v112 = vld [vmem:[%s1 + $0x34] sm:$0xf]
  %v113 = vld [vmem:[%s1 + $0x38] sm:$0xf]
  %v114 = vld [vmem:[%s1 + $0x3c] sm:$0xf]
  %v115 = vld [vmem:[%s1 + $0x40] sm:$0xf]
  %v116 = vld [vmem:[%s1 + $0x44] sm:$0xf]
  %v117 = vld [vmem:[%s1 + $0x48] sm:$0xf]
  %v118 = vld [vmem:[%s1 + $0x4c] sm:$0xf]
  %v119 = vld [vmem:[%s1 + $0x50] sm:$0xf]
  %v120 = vld [vmem:[%s1 + $0x54] sm:$0xf]
  %v121 = vld [vmem:[%s1 + $0x58] sm:$0xf]
  %v122 = vld [vmem:[%s1 + $0x5c] sm:$0xf]
  %v123 = vld [vmem:[%s1 + $0x60] sm:$0xf]
  %v124 = vld [vmem:[%s1 + $0x64] sm:$0xf]
  %v125 = vld [vmem:[%s1 + $0x68] sm:$0xf]
  %v126 = vld [vmem:[%s1 + $0x6c] sm:$0xf]
  %v127 = vld [vmem:[%s1 + $0x70] sm:$0xf]
  %v128 = vld [vmem:[%s1 + $0x74] sm:$0xf]
  %v129 = vld [vmem:[%s1 + $0x78] sm:$0xf]
  %v130 = vld [vmem:[%s1 + $0x7c] sm:$0xf]
  %v131 = vld [vmem:[%s1 + $0x80] sm:$0xf]
  %v132 = vld [vmem:[%s1 + $0x84] sm:$0xf]
  %v133 = vld [vmem:[%s1 + $0x88] sm:$0xf]
  %v134 = vld [vmem:[%s1 + $0x8c] sm:$0xf]
  %v135 = vld [vmem:[%s1 + $0x90] sm:$0xf]
  %v136 = vld [vmem:[%s1 + $0x94] sm:$0xf]
  %v137 = vld [vmem:[%s1 + $0x98] sm:$0xf]
  %v138 = vld [vmem:[%s1 + $0x9c] sm:$0xf]
  %v139 = vld [vmem:[%s1 + $0xa0] sm:$0xf]
  %v140 = vld [vmem:[%s1 + $0xa4] sm:$0xf]
  %v141 = vld [vmem:[%s1 + $0xa8] sm:$0xf]
  %v142 = vld [vmem:[%s1 + $0xac] sm:$0xf]
  %v143 = vld [vmem:[%s1 + $0xb0] sm:$0xf]
  %v144 = vld [vmem:[%s1 + $0xb4] sm:$0xf]
  %v145 = vld [vmem:[%s1 + $0xb8] sm:$0xf]
  %v146 = vld [vmem:[%s1 + $0xbc] sm:$0xf]
  %v147 = vld [vmem:[%s1 + $0xc0] sm:$0xf]
  %v148 = vld [vmem:[%s1 + $0xc4] sm:$0xf]
  %v149 = vld [vmem:[%s1 + $0xc8] sm:$0xf]
  %v150 = vld [vmem:[%s1 + $0xcc] sm:$0xf]
  %v151 = vld [vmem:[%s1 + $0xd0] sm:$0xf]
  %v152 = vld [vmem:[%s1 + $0xd4] sm:$0xf]
  %v153 = vld [vmem:[%s1 + $0xd8] sm:$0xf]
  %v154 = vld [vmem:[%s1 + $0xdc] sm:$0xf]
  %v155 = vld [vmem:[%s1 + $0xe0] sm:$0xf]
  %v156 = vld [vmem:[%s1 + $0xe4] sm:$0xf]
  %v157 = vld [vmem:[%s1 + $0xe8] sm:$0xf]
  %v158 = vld [vmem:[%s1 + $0xec] sm:$0xf]
  %v159 = vld [vmem:[%s1 + $0xf0] sm:$0xf]
  %v160 = vld [vmem:[%s1 + $0xf4] sm:$0xf]
  %v161 = vld [vmem:[%s1 + $0xf8] sm:$0xf]
  %v162 = vld [vmem:[%s1 + $0xfc] sm:$0xf]
  %v163 = vld [vmem:[%s1 + $0x100] sm:$0xf]
  %v164 = vld [vmem:[%s1 + $0x104] sm:$0xf]
  %v165 = vld [vmem:[%s1 + $0x108] sm:$0xf]
  %v166 = vld [vmem:[%s1 + $0x10c] sm:$0xf]
  %v167 = vld [vmem:[%s1 + $0x110] sm:$0xf]
  %v168 = vld [vmem:[%s1 + $0x114] sm:$0xf]
  %v169 = vld [vmem:[%s1 + $0x118] sm:$0xf]
  %v170 = vld [vmem:[%s1 + $0x11c] sm:$0xf]
  %v171 = vld [vmem:[%s1 + $0x120] sm:$0xf]
  %v172 = vld [vmem:[%s1 + $0x124] sm:$0xf]
  %v173 = vld [vmem:[%s1 + $0x128] sm:$0xf]
  %v174 = vld [vmem:[%s1 + $0x12c] sm:$0xf]
  %v175 = vld [vmem:[%s1 + $0x130] sm:$0xf]
  %v176 = vld [vmem:[%s1 + $0x134] sm:$0xf]
  %v177 = vld [vmem:[%s1 + $0x138] sm:$0xf]
  %v178 = vld [vmem:[%s1 + $0x13c] sm:$0xf]
  %v227 = vunpack.c.l.b16 %v51
  %v228 = vunpack.c.h.b16 %v51
  %v229 = vunpack.c.l.b16 %v52
  %v230 = vunpack.c.h.b16 %v52
  %v231 = vunpack.c.l.b16 %v53
  %v232 = vunpack.c.l.b16 %v54
  %v233 = vunpack.c.h.b16 %v54
  %v234 = vunpack.c.l.b16 %v55
  %v235 = vunpack.c.h.b16 %v55
  %v236 = vunpack.c.l.b16 %v56
  %v237 = vunpack.c.l.b16 %v57
  %v238 = vunpack.c.h.b16 %v57
  %v239 = vunpack.c.l.b16 %v58
  %v240 = vunpack.c.h.b16 %v58
  %v241 = vunpack.c.l.b16 %v59
  %v242 = vunpack.c.l.b16 %v60
  %v243 = vunpack.c.h.b16 %v60
  %v244 = vunpack.c.l.b16 %v61
  %v245 = vunpack.c.h.b16 %v61
  %v246 = vunpack.c.l.b16 %v62
  %v247 = vunpack.c.l.b16 %v63
  %v248 = vunpack.c.h.b16 %v63
  %v249 = vunpack.c.l.b16 %v64
  %v250 = vunpack.c.h.b16 %v64
  %v251 = vunpack.c.l.b16 %v65
  %v252 = vunpack.c.l.b16 %v66
  %v253 = vunpack.c.h.b16 %v66
  %v254 = vunpack.c.l.b16 %v67
  %v255 = vunpack.c.h.b16 %v67
  %v256 = vunpack.c.l.b16 %v68
  %v257 = vunpack.c.l.b16 %v69
  %v258 = vunpack.c.h.b16 %v69
  %v259 = vunpack.c.l.b16 %v70
  %v260 = vunpack.c.h.b16 %v70
  %v261 = vunpack.c.l.b16 %v71
  %v262 = vunpack.c.l.b16 %v72
  %v263 = vunpack.c.h.b16 %v72
  %v264 = vunpack.c.l.b16 %v73
  %v265 = vunpack.c.h.b16 %v73
  %v266 = vunpack.c.l.b16 %v74
  %v267 = vunpack.c.l.b16 %v75
  %v268 = vunpack.c.h.b16 %v75
  %v269 = vunpack.c.l.b16 %v76
  %v270 = vunpack.c.h.b16 %v76
  %v271 = vunpack.c.l.b16 %v77
  %v272 = vunpack.c.l.b16 %v78
  %v273 = vunpack.c.h.b16 %v78
  %v274 = vunpack.c.l.b16 %v79
  %v275 = vunpack.c.h.b16 %v79
  %v276 = vunpack.c.l.b16 %v80
  %v277 = vunpack.c.l.b16 %v81
  %v278 = vunpack.c.h.b16 %v81
  %v279 = vunpack.c.l.b16 %v82
  %v280 = vunpack.c.h.b16 %v82
  %v281 = vunpack.c.l.b16 %v83
  %v282 = vunpack.c.l.b16 %v84
  %v283 = vunpack.c.h.b16 %v84
  %v284 = vunpack.c.l.b16 %v85
  %v285 = vunpack.c.h.b16 %v85
  %v286 = vunpack.c.l.b16 %v86
  %v287 = vunpack.c.l.b16 %v87
  %v288 = vunpack.c.h.b16 %v87
  %v289 = vunpack.c.l.b16 %v88
  %v290 = vunpack.c.h.b16 %v88
  %v291 = vunpack.c.l.b16 %v89
  %v292 = vunpack.c.l.b16 %v90
  %v293 = vunpack.c.h.b16 %v90
  %v294 = vunpack.c.l.b16 %v91
  %v295 = vunpack.c.h.b16 %v91
  %v296 = vunpack.c.l.b16 %v92
  %v297 = vunpack.c.l.b16 %v93
  %v298 = vunpack.c.h.b16 %v93
  %v299 = vunpack.c.l.b16 %v94
  %v300 = vunpack.c.h.b16 %v94
  %v301 = vunpack.c.l.b16 %v95
  %v302 = vunpack.c.l.b16 %v96
  %v303 = vunpack.c.h.b16 %v96
  %v304 = vunpack.c.l.b16 %v97
  %v305 = vunpack.c.h.b16 %v97
  %v306 = vunpack.c.l.b16 %v98
  %v307 = vpack.c.b16 %v232, %v227
  %v308 = vpack.c.b16 %v233, %v228
  %v309 = vpack.c.b16 %v234, %v229
  %v310 = vpack.c.b16 %v235, %v230
  %v311 = vpack.c.b16 %v236, %v231
  %v312 = vpack.c.b16 %v242, %v237
  %v313 = vpack.c.b16 %v243, %v238
  %v314 = vpack.c.b16 %v244, %v239
  %v315 = vpack.c.b16 %v245, %v240
  %v316 = vpack.c.b16 %v246, %v241
  %v317 = vpack.c.b16 %v252, %v247
  %v318 = vpack.c.b16 %v253, %v248
  %v319 = vpack.c.b16 %v254, %v249
  %v320 = vpack.c.b16 %v255, %v250
  %v321 = vpack.c.b16 %v256, %v251
  %v322 = vpack.c.b16 %v262, %v257
  %v323 = vpack.c.b16 %v263, %v258
  %v324 = vpack.c.b16 %v264, %v259
  %v325 = vpack.c.b16 %v265, %v260
  %v326 = vpack.c.b16 %v266, %v261
  %v327 = vpack.c.b16 %v272, %v267
  %v328 = vpack.c.b16 %v273, %v268
  %v329 = vpack.c.b16 %v274, %v269
  %v330 = vpack.c.b16 %v275, %v270
  %v331 = vpack.c.b16 %v276, %v271
  %v332 = vpack.c.b16 %v282, %v277
  %v333 = vpack.c.b16 %v283, %v278
  %v334 = vpack.c.b16 %v284, %v279
  %v335 = vpack.c.b16 %v285, %v280
  %v336 = vpack.c.b16 %v286, %v281
  %v337 = vpack.c.b16 %v292, %v287
  %v338 = vpack.c.b16 %v293, %v288
  %v339 = vpack.c.b16 %v294, %v289
  %v340 = vpack.c.b16 %v295, %v290
  %v341 = vpack.c.b16 %v296, %v291
  %v342 = vpack.c.b16 %v302, %v297
  %v343 = vpack.c.b16 %v303, %v298
  %v344 = vpack.c.b16 %v304, %v299
  %v345 = vpack.c.b16 %v305, %v300
  %v346 = vpack.c.b16 %v306, %v301
  %v467 = vunpack.c.l.b16 %v99
  %v468 = vunpack.c.l.b16 %v100
  %v469 = vunpack.c.l.b16 %v101
  %v470 = vunpack.c.l.b16 %v102
  %v471 = vunpack.c.l.b16 %v103
  %v472 = vunpack.c.l.b16 %v104
  %v473 = vunpack.c.l.b16 %v105
  %v474 = vunpack.c.l.b16 %v106
  %v475 = vunpack.c.l.b16 %v107
  %v476 = vunpack.c.l.b16 %v108
  %v477 = vunpack.c.l.b16 %v109
  %v478 = vunpack.c.l.b16 %v110
  %v479 = vunpack.c.l.b16 %v111
  %v480 = vunpack.c.l.b16 %v112
  %v481 = vunpack.c.l.b16 %v113
  %v482 = vunpack.c.l.b16 %v114
  %v483 = vunpack.c.l.b16 %v115
  %v484 = vunpack.c.l.b16 %v116
  %v485 = vunpack.c.l.b16 %v117
  %v486 = vunpack.c.l.b16 %v118
  %v487 = vunpack.c.l.b16 %v119
  %v488 = vunpack.c.l.b16 %v120
  %v489 = vunpack.c.l.b16 %v121
  %v490 = vunpack.c.l.b16 %v122
  %v491 = vunpack.c.l.b16 %v123
  %v492 = vunpack.c.l.b16 %v124
  %v493 = vunpack.c.l.b16 %v125
  %v494 = vunpack.c.l.b16 %v126
  %v495 = vunpack.c.l.b16 %v127
  %v496 = vunpack.c.l.b16 %v128
  %v497 = vunpack.c.l.b16 %v129
  %v498 = vunpack.c.l.b16 %v130
  %v499 = vunpack.c.l.b16 %v131
  %v500 = vunpack.c.l.b16 %v132
  %v501 = vunpack.c.l.b16 %v133
  %v502 = vunpack.c.l.b16 %v134
  %v503 = vunpack.c.l.b16 %v135
  %v504 = vunpack.c.l.b16 %v136
  %v505 = vunpack.c.l.b16 %v137
  %v506 = vunpack.c.l.b16 %v138
  %v507 = vunpack.c.l.b16 %v139
  %v508 = vunpack.c.l.b16 %v140
  %v509 = vunpack.c.l.b16 %v141
  %v510 = vunpack.c.l.b16 %v142
  %v511 = vunpack.c.l.b16 %v143
  %v512 = vunpack.c.l.b16 %v144
  %v513 = vunpack.c.l.b16 %v145
  %v514 = vunpack.c.l.b16 %v146
  %v515 = vunpack.c.l.b16 %v147
  %v516 = vunpack.c.l.b16 %v148
  %v517 = vunpack.c.l.b16 %v149
  %v518 = vunpack.c.l.b16 %v150
  %v519 = vunpack.c.l.b16 %v151
  %v520 = vunpack.c.l.b16 %v152
  %v521 = vunpack.c.l.b16 %v153
  %v522 = vunpack.c.l.b16 %v154
  %v523 = vunpack.c.l.b16 %v155
  %v524 = vunpack.c.l.b16 %v156
  %v525 = vunpack.c.l.b16 %v157
  %v526 = vunpack.c.l.b16 %v158
  %v527 = vunpack.c.l.b16 %v159
  %v528 = vunpack.c.l.b16 %v160
  %v529 = vunpack.c.l.b16 %v161
  %v530 = vunpack.c.l.b16 %v162
  %v531 = vunpack.c.l.b16 %v163
  %v532 = vunpack.c.l.b16 %v164
  %v533 = vunpack.c.l.b16 %v165
  %v534 = vunpack.c.l.b16 %v166
  %v535 = vunpack.c.l.b16 %v167
  %v536 = vunpack.c.l.b16 %v168
  %v537 = vunpack.c.l.b16 %v169
  %v538 = vunpack.c.l.b16 %v170
  %v539 = vunpack.c.l.b16 %v171
  %v540 = vunpack.c.l.b16 %v172
  %v541 = vunpack.c.l.b16 %v173
  %v542 = vunpack.c.l.b16 %v174
  %v543 = vunpack.c.l.b16 %v175
  %v544 = vunpack.c.l.b16 %v176
  %v545 = vunpack.c.l.b16 %v177
  %v546 = vunpack.c.l.b16 %v178
  %v547 = vpack.c.b16 %v468, %v467
  %v548 = vpack.c.b16 %v470, %v469
  %v549 = vpack.c.b16 %v472, %v471
  %v550 = vpack.c.b16 %v474, %v473
  %v551 = vpack.c.b16 %v476, %v475
  %v552 = vpack.c.b16 %v478, %v477
  %v553 = vpack.c.b16 %v480, %v479
  %v554 = vpack.c.b16 %v482, %v481
  %v555 = vpack.c.b16 %v484, %v483
  %v556 = vpack.c.b16 %v486, %v485
  %v557 = vpack.c.b16 %v488, %v487
  %v558 = vpack.c.b16 %v490, %v489
  %v559 = vpack.c.b16 %v492, %v491
  %v560 = vpack.c.b16 %v494, %v493
  %v561 = vpack.c.b16 %v496, %v495
  %v562 = vpack.c.b16 %v498, %v497
  %v563 = vpack.c.b16 %v500, %v499
  %v564 = vpack.c.b16 %v502, %v501
  %v565 = vpack.c.b16 %v504, %v503
  %v566 = vpack.c.b16 %v506, %v505
  %v567 = vpack.c.b16 %v508, %v507
  %v568 = vpack.c.b16 %v510, %v509
  %v569 = vpack.c.b16 %v512, %v511
  %v570 = vpack.c.b16 %v514, %v513
  %v571 = vpack.c.b16 %v516, %v515
  %v572 = vpack.c.b16 %v518, %v517
  %v573 = vpack.c.b16 %v520, %v519
  %v574 = vpack.c.b16 %v522, %v521
  %v575 = vpack.c.b16 %v524, %v523
  %v576 = vpack.c.b16 %v526, %v525
  %v577 = vpack.c.b16 %v528, %v527
  %v578 = vpack.c.b16 %v530, %v529
  %v579 = vpack.c.b16 %v532, %v531
  %v580 = vpack.c.b16 %v534, %v533
  %v581 = vpack.c.b16 %v536, %v535
  %v582 = vpack.c.b16 %v538, %v537
  %v583 = vpack.c.b16 %v540, %v539
  %v584 = vpack.c.b16 %v542, %v541
  %v585 = vpack.c.b16 %v544, %v543
  %v586 = vpack.c.b16 %v546, %v545
  %627 = vmatprep.subr.bf16.mxu0 0
  %628 = vmatpush1.bf16.msra.mxu0 %v554
  %629 = vmatprep.subr.bf16.mxu0 0
  %630 = vmatpush1.bf16.msra.mxu0 %v553
  %631 = vmatprep.subr.bf16.mxu0 0
  %632 = vmatpush1.bf16.msra.mxu0 %v552
  %633 = vmatprep.subr.bf16.mxu0 0
  %634 = vmatpush1.bf16.msra.mxu0 %v551
  %635 = vmatprep.subr.bf16.mxu0 0
  %636 = vmatpush1.bf16.msra.mxu0 %v550
  %637 = vmatprep.subr.bf16.mxu0 0
  %638 = vmatpush1.bf16.msra.mxu0 %v549
  %639 = vmatprep.subr.bf16.mxu0 0
  %640 = vmatpush1.bf16.msra.mxu0 %v548
  %641 = vmatprep.subr.bf16.mxu0 0
  %642 = vmatpush1.bf16.msra.mxu0 %v547
  %643 = vmatprep.subr.bf16.mxu0 0
  %644 = vmatpush2.bf16.msra.mxu0 %v562
  %645 = vmatprep.subr.bf16.mxu0 0
  %646 = vmatpush2.bf16.msra.mxu0 %v561
  %647 = vmatprep.subr.bf16.mxu0 0
  %648 = vmatpush2.bf16.msra.mxu0 %v560
  %649 = vmatprep.subr.bf16.mxu0 0
  %650 = vmatpush2.bf16.msra.mxu0 %v559
  %651 = vmatprep.subr.bf16.mxu0 0
  %652 = vmatpush2.bf16.msra.mxu0 %v558
  %653 = vmatprep.subr.bf16.mxu0 0
  %654 = vmatpush2.bf16.msra.mxu0 %v557
  %655 = vmatprep.subr.bf16.mxu0 0
  %656 = vmatpush2.bf16.msra.mxu0 %v556
  %657 = vmatprep.subr.bf16.mxu0 0
  %658 = vmatpush2.bf16.msra.mxu0 %v555
  %659 = vmatprep.mubr.bf16.mxu0 %v308
  %660 = vmatmul.mubr.bf16.gmra.mxu0 %v307
  %v661 = vpop.f32.mrf.mxu0
  %v662 = vadd.f32 0.0, %v661
  %v663 = vpop.f32.mrf.mxu0
  %v664 = vpop.f32.mrf.mxu0
  %v665 = vadd.f32 0.0, %v664
  %v666 = vpop.f32.mrf.mxu0
  %667 = vmatprep.mubr.bf16.mxu0 %v313
  %668 = vmatmul.mubr.bf16.gmra.mxu0 %v312
  %v669 = vpop.f32.mrf.mxu0
  %v670 = vadd.f32 0.0, %v669
  %v671 = vpop.f32.mrf.mxu0
  %v672 = vpop.f32.mrf.mxu0
  %v673 = vadd.f32 0.0, %v672
  %v674 = vpop.f32.mrf.mxu0
  %675 = vmatprep.mubr.bf16.mxu0 %v318
  %676 = vmatmul.mubr.bf16.gmra.mxu0 %v317
  %v677 = vpop.f32.mrf.mxu0
  %v678 = vadd.f32 0.0, %v677
  %v679 = vpop.f32.mrf.mxu0
  %v680 = vpop.f32.mrf.mxu0
  %v681 = vadd.f32 0.0, %v680
  %v682 = vpop.f32.mrf.mxu0
  %683 = vmatprep.mubr.bf16.mxu0 %v323
  %684 = vmatmul.mubr.bf16.gmra.mxu0 %v322
  %v685 = vpop.f32.mrf.mxu0
  %v686 = vadd.f32 0.0, %v685
  %v687 = vpop.f32.mrf.mxu0
  %v688 = vpop.f32.mrf.mxu0
  %v689 = vadd.f32 0.0, %v688
  %v690 = vpop.f32.mrf.mxu0
  %691 = vmatprep.mubr.bf16.mxu0 %v328
  %692 = vmatmul.mubr.bf16.gmra.mxu0 %v327
  %v693 = vpop.f32.mrf.mxu0
  %v694 = vadd.f32 0.0, %v693
  %v695 = vpop.f32.mrf.mxu0
  %v696 = vpop.f32.mrf.mxu0
  %v697 = vadd.f32 0.0, %v696
  %v698 = vpop.f32.mrf.mxu0
  %699 = vmatprep.mubr.bf16.mxu0 %v333
  %700 = vmatmul.mubr.bf16.gmra.mxu0 %v332
  %v701 = vpop.f32.mrf.mxu0
  %v702 = vadd.f32 0.0, %v701
  %v703 = vpop.f32.mrf.mxu0
  %v704 = vpop.f32.mrf.mxu0
  %v705 = vadd.f32 0.0, %v704
  %v706 = vpop.f32.mrf.mxu0
  %707 = vmatprep.mubr.bf16.mxu0 %v338
  %708 = vmatmul.mubr.bf16.gmra.mxu0 %v337
  %v709 = vpop.f32.mrf.mxu0
  %v710 = vadd.f32 0.0, %v709
  %v711 = vpop.f32.mrf.mxu0
  %v712 = vpop.f32.mrf.mxu0
  %v713 = vadd.f32 0.0, %v712
  %v714 = vpop.f32.mrf.mxu0
  %715 = vmatprep.mubr.bf16.mxu0 %v343
  %716 = vmatmul.mubr.bf16.gmra.mxu0 %v342
  %v717 = vpop.f32.mrf.mxu0
  %v718 = vadd.f32 0.0, %v717
  %v719 = vpop.f32.mrf.mxu0
  %v720 = vpop.f32.mrf.mxu0
  %v721 = vadd.f32 0.0, %v720
  %v722 = vpop.f32.mrf.mxu0
  %723 = vdwg.mxu0
  %724 = vmatprep.subr.bf16.mxu0 0
  %725 = vmatpush1.bf16.msra.mxu0 %v570
  %726 = vmatprep.subr.bf16.mxu0 0
  %727 = vmatpush1.bf16.msra.mxu0 %v569
  %728 = vmatprep.subr.bf16.mxu0 0
  %729 = vmatpush1.bf16.msra.mxu0 %v568
  %730 = vmatprep.subr.bf16.mxu0 0
  %731 = vmatpush1.bf16.msra.mxu0 %v567
  %732 = vmatprep.subr.bf16.mxu0 0
  %733 = vmatpush1.bf16.msra.mxu0 %v566
  %734 = vmatprep.subr.bf16.mxu0 0
  %735 = vmatpush1.bf16.msra.mxu0 %v565
  %736 = vmatprep.subr.bf16.mxu0 0
  %737 = vmatpush1.bf16.msra.mxu0 %v564
  %738 = vmatprep.subr.bf16.mxu0 0
  %739 = vmatpush1.bf16.msra.mxu0 %v563
  %740 = vmatprep.subr.bf16.mxu0 0
  %741 = vmatpush2.bf16.msra.mxu0 %v578
  %742 = vmatprep.subr.bf16.mxu0 0
  %743 = vmatpush2.bf16.msra.mxu0 %v577
  %744 = vmatprep.subr.bf16.mxu0 0
  %745 = vmatpush2.bf16.msra.mxu0 %v576
  %746 = vmatprep.subr.bf16.mxu0 0
  %747 = vmatpush2.bf16.msra.mxu0 %v575
  %748 = vmatprep.subr.bf16.mxu0 0
  %749 = vmatpush2.bf16.msra.mxu0 %v574
  %750 = vmatprep.subr.bf16.mxu0 0
  %751 = vmatpush2.bf16.msra.mxu0 %v573
  %752 = vmatprep.subr.bf16.mxu0 0
  %753 = vmatpush2.bf16.msra.mxu0 %v572
  %754 = vmatprep.subr.bf16.mxu0 0
  %755 = vmatpush2.bf16.msra.mxu0 %v571
  %756 = vmatprep.mubr.bf16.mxu0 %v310
  %757 = vmatmul.mubr.bf16.gmra.mxu0 %v309
  %v758 = vpop.f32.mrf.mxu0
  %v759 = vadd.f32 %v662, %v758
  %v760 = vpop.f32.mrf.mxu0
  %v761 = vpop.f32.mrf.mxu0
  %v762 = vadd.f32 %v665, %v761
  %v763 = vpop.f32.mrf.mxu0
  %764 = vmatprep.mubr.bf16.mxu0 %v315
  %765 = vmatmul.mubr.bf16.gmra.mxu0 %v314
  %v766 = vpop.f32.mrf.mxu0
  %v767 = vadd.f32 %v670, %v766
  %v768 = vpop.f32.mrf.mxu0
  %v769 = vpop.f32.mrf.mxu0
  %v770 = vadd.f32 %v673, %v769
  %v771 = vpop.f32.mrf.mxu0
  %772 = vmatprep.mubr.bf16.mxu0 %v320
  %773 = vmatmul.mubr.bf16.gmra.mxu0 %v319
  %v774 = vpop.f32.mrf.mxu0
  %v775 = vadd.f32 %v678, %v774
  %v776 = vpop.f32.mrf.mxu0
  %v777 = vpop.f32.mrf.mxu0
  %v778 = vadd.f32 %v681, %v777
  %v779 = vpop.f32.mrf.mxu0
  %780 = vmatprep.mubr.bf16.mxu0 %v325
  %781 = vmatmul.mubr.bf16.gmra.mxu0 %v324
  %v782 = vpop.f32.mrf.mxu0
  %v783 = vadd.f32 %v686, %v782
  %v784 = vpop.f32.mrf.mxu0
  %v785 = vpop.f32.mrf.mxu0
  %v786 = vadd.f32 %v689, %v785
  %v787 = vpop.f32.mrf.mxu0
  %788 = vmatprep.mubr.bf16.mxu0 %v330
  %789 = vmatmul.mubr.bf16.gmra.mxu0 %v329
  %v790 = vpop.f32.mrf.mxu0
  %v791 = vadd.f32 %v694, %v790
  %v792 = vpop.f32.mrf.mxu0
  %v793 = vpop.f32.mrf.mxu0
  %v794 = vadd.f32 %v697, %v793
  %v795 = vpop.f32.mrf.mxu0
  %796 = vmatprep.mubr.bf16.mxu0 %v335
  %797 = vmatmul.mubr.bf16.gmra.mxu0 %v334
  %v798 = vpop.f32.mrf.mxu0
  %v799 = vadd.f32 %v702, %v798
  %v800 = vpop.f32.mrf.mxu0
  %v801 = vpop.f32.mrf.mxu0
  %v802 = vadd.f32 %v705, %v801
  %v803 = vpop.f32.mrf.mxu0
  %804 = vmatprep.mubr.bf16.mxu0 %v340
  %805 = vmatmul.mubr.bf16.gmra.mxu0 %v339
  %v806 = vpop.f32.mrf.mxu0
  %v807 = vadd.f32 %v710, %v806
  %v808 = vpop.f32.mrf.mxu0
  %v809 = vpop.f32.mrf.mxu0
  %v810 = vadd.f32 %v713, %v809
  %v811 = vpop.f32.mrf.mxu0
  %812 = vmatprep.mubr.bf16.mxu0 %v345
  %813 = vmatmul.mubr.bf16.gmra.mxu0 %v344
  %v814 = vpop.f32.mrf.mxu0
  %v815 = vadd.f32 %v718, %v814
  %v816 = vpop.f32.mrf.mxu0
  %v817 = vpop.f32.mrf.mxu0
  %v818 = vadd.f32 %v721, %v817
  %v819 = vpop.f32.mrf.mxu0
  %820 = vdwg.mxu0
  %821 = vmatprep.subr.bf16.mxu0 0
  %822 = vmatpush1.bf16.msra.mxu0 %v586
  %823 = vmatprep.subr.bf16.mxu0 0
  %824 = vmatpush1.bf16.msra.mxu0 %v585
  %825 = vmatprep.subr.bf16.mxu0 0
  %826 = vmatpush1.bf16.msra.mxu0 %v584
  %827 = vmatprep.subr.bf16.mxu0 0
  %828 = vmatpush1.bf16.msra.mxu0 %v583
  %829 = vmatprep.subr.bf16.mxu0 0
  %830 = vmatpush1.bf16.msra.mxu0 %v582
  %831 = vmatprep.subr.bf16.mxu0 0
  %832 = vmatpush1.bf16.msra.mxu0 %v581
  %833 = vmatprep.subr.bf16.mxu0 0
  %834 = vmatpush1.bf16.msra.mxu0 %v580
  %835 = vmatprep.subr.bf16.mxu0 0
  %836 = vmatpush1.bf16.msra.mxu0 %v579
  %837 = vmatprep.subr.bf16.mxu0 0
  %838 = vmatpush2.bf16.msra.mxu0 0
  %839 = vmatprep.subr.bf16.mxu0 0
  %840 = vmatpush2.bf16.msra.mxu0 0
  %841 = vmatprep.subr.bf16.mxu0 0
  %842 = vmatpush2.bf16.msra.mxu0 0
  %843 = vmatprep.subr.bf16.mxu0 0
  %844 = vmatpush2.bf16.msra.mxu0 0
  %845 = vmatprep.subr.bf16.mxu0 0
  %846 = vmatpush2.bf16.msra.mxu0 0
  %847 = vmatprep.subr.bf16.mxu0 0
  %848 = vmatpush2.bf16.msra.mxu0 0
  %849 = vmatprep.subr.bf16.mxu0 0
  %850 = vmatpush2.bf16.msra.mxu0 0
  %851 = vmatprep.subr.bf16.mxu0 0
  %852 = vmatpush2.bf16.msra.mxu0 0
  %853 = vmatprep.mubr.bf16.mxu0 0
  %854 = vmatmul.mubr.bf16.gmra.mxu0 %v311
  %v855 = vpop.f32.mrf.mxu0
  %v856 = vadd.f32 %v759, %v855
  %v857 = vpop.f32.mrf.mxu0
  %v858 = vpop.f32.mrf.mxu0
  %v859 = vadd.f32 %v762, %v858
  %v860 = vpop.f32.mrf.mxu0
  %861 = vmatprep.mubr.bf16.mxu0 0
  %862 = vmatmul.mubr.bf16.gmra.mxu0 %v316
  %v863 = vpop.f32.mrf.mxu0
  %v864 = vadd.f32 %v767, %v863
  %v865 = vpop.f32.mrf.mxu0
  %v866 = vpop.f32.mrf.mxu0
  %v867 = vadd.f32 %v770, %v866
  %v868 = vpop.f32.mrf.mxu0
  %869 = vmatprep.mubr.bf16.mxu0 0
  %870 = vmatmul.mubr.bf16.gmra.mxu0 %v321
  %v871 = vpop.f32.mrf.mxu0
  %v872 = vadd.f32 %v775, %v871
  %v873 = vpop.f32.mrf.mxu0
  %v874 = vpop.f32.mrf.mxu0
  %v875 = vadd.f32 %v778, %v874
  %v876 = vpop.f32.mrf.mxu0
  %877 = vmatprep.mubr.bf16.mxu0 0
  %878 = vmatmul.mubr.bf16.gmra.mxu0 %v326
  %v879 = vpop.f32.mrf.mxu0
  %v880 = vadd.f32 %v783, %v879
  %v881 = vpop.f32.mrf.mxu0
  %v882 = vpop.f32.mrf.mxu0
  %v883 = vadd.f32 %v786, %v882
  %v884 = vpop.f32.mrf.mxu0
  %885 = vmatprep.mubr.bf16.mxu0 0
  %886 = vmatmul.mubr.bf16.gmra.mxu0 %v331
  %v887 = vpop.f32.mrf.mxu0
  %v888 = vadd.f32 %v791, %v887
  %v889 = vpop.f32.mrf.mxu0
  %v890 = vpop.f32.mrf.mxu0
  %v891 = vadd.f32 %v794, %v890
  %v892 = vpop.f32.mrf.mxu0
  %893 = vmatprep.mubr.bf16.mxu0 0
  %894 = vmatmul.mubr.bf16.gmra.mxu0 %v336
  %v895 = vpop.f32.mrf.mxu0
  %v896 = vadd.f32 %v799, %v895
  %v897 = vpop.f32.mrf.mxu0
  %v898 = vpop.f32.mrf.mxu0
  %v899 = vadd.f32 %v802, %v898
  %v900 = vpop.f32.mrf.mxu0
  %901 = vmatprep.mubr.bf16.mxu0 0
  %902 = vmatmul.mubr.bf16.gmra.mxu0 %v341
  %v903 = vpop.f32.mrf.mxu0
  %v904 = vadd.f32 %v807, %v903
  %v905 = vpop.f32.mrf.mxu0
  %v906 = vpop.f32.mrf.mxu0
  %v907 = vadd.f32 %v810, %v906
  %v908 = vpop.f32.mrf.mxu0
  %909 = vmatprep.mubr.bf16.mxu0 0
  %910 = vmatmul.mubr.bf16.gmra.mxu0 %v346
  %v911 = vpop.f32.mrf.mxu0
  %v912 = vadd.f32 %v815, %v911
  %v913 = vpop.f32.mrf.mxu0
  %v914 = vpop.f32.mrf.mxu0
  %v915 = vadd.f32 %v818, %v914
  %v916 = vpop.f32.mrf.mxu0
  %917 = vdwg.mxu0
  %v918 = vadd.f32 %v35, %v856
  %v919 = vadd.f32 %v36, %v859
  %v920 = vadd.f32 %v37, %v864
  %v921 = vadd.f32 %v38, %v867
  %v922 = vadd.f32 %v39, %v872
  %v923 = vadd.f32 %v40, %v875
  %v924 = vadd.f32 %v41, %v880
  %v925 = vadd.f32 %v42, %v883
  %v926 = vadd.f32 %v43, %v888
  %v927 = vadd.f32 %v44, %v891
  %v928 = vadd.f32 %v45, %v896
  %v929 = vadd.f32 %v46, %v899
  %v930 = vadd.f32 %v47, %v904
  %v931 = vadd.f32 %v48, %v907
  %v932 = vadd.f32 %v49, %v912
  %v933 = vadd.f32 %v50, %v915
  %934 = vst [vmem:[#allocation2] sm:$0xff] %v918
  %935 = vst [vmem:[#allocation2 + $0x8] sm:$0xff] %v919
  %936 = vst [vmem:[#allocation2 + $0x10] sm:$0xff] %v920
  %937 = vst [vmem:[#allocation2 + $0x18] sm:$0xff] %v921
  %938 = vst [vmem:[#allocation2 + $0x20] sm:$0xff] %v922
  %939 = vst [vmem:[#allocation2 + $0x28] sm:$0xff] %v923
  %940 = vst [vmem:[#allocation2 + $0x30] sm:$0xff] %v924
  %941 = vst [vmem:[#allocation2 + $0x38] sm:$0xff] %v925
  %942 = vst [vmem:[#allocation2 + $0x40] sm:$0xff] %v926
  %943 = vst [vmem:[#allocation2 + $0x48] sm:$0xff] %v927
  %944 = vst [vmem:[#allocation2 + $0x50] sm:$0xff] %v928
  %945 = vst [vmem:[#allocation2 + $0x58] sm:$0xff] %v929
  %946 = vst [vmem:[#allocation2 + $0x60] sm:$0xff] %v930
  %947 = vst [vmem:[#allocation2 + $0x68] sm:$0xff] %v931
  %948 = vst [vmem:[#allocation2 + $0x70] sm:$0xff] %v932
  %949 = vst [vmem:[#allocation2 + $0x78] sm:$0xff] %v933
  // Predicated region
  $region14: #{discriminator_forward.7} parent=0 // pred_check
    %p950 = pneg %p15
  $region15: #{discriminator_forward.7} parent=0 // pred_check_branch
    %952 = sbr.rel (%p950) target = $region17
  $region16: #{discriminator_forward.7} parent=0 // pred_region
    %v953 = vld [vmem:[#allocation2] sm:$0xff]
    %v954 = vld [vmem:[#allocation2 + $0x8] sm:$0xff]
    %v955 = vld [vmem:[#allocation2 + $0x10] sm:$0xff]
    %v956 = vld [vmem:[#allocation2 + $0x18] sm:$0xff]
    %v957 = vld [vmem:[#allocation2 + $0x20] sm:$0xff]
    %v958 = vld [vmem:[#allocation2 + $0x28] sm:$0xff]
    %v959 = vld [vmem:[#allocation2 + $0x30] sm:$0xff]
    %v960 = vld [vmem:[#allocation2 + $0x38] sm:$0xff]
    %v961 = vld [vmem:[#allocation2 + $0x40] sm:$0xff]
    %v962 = vld [vmem:[#allocation2 + $0x48] sm:$0xff]
    %v963 = vld [vmem:[#allocation2 + $0x50] sm:$0xff]
    %v964 = vld [vmem:[#allocation2 + $0x58] sm:$0xff]
    %v965 = vld [vmem:[#allocation2 + $0x60] sm:$0xff]
    %v966 = vld [vmem:[#allocation2 + $0x68] sm:$0xff]
    %v967 = vld [vmem:[#allocation2 + $0x70] sm:$0xff]
    %v968 = vld [vmem:[#allocation2 + $0x78] sm:$0xff]
    %969 = vst [vmem:[%s2] sm:$0xff] %v953
    %970 = vst [vmem:[%s2 + $0x8] sm:$0xff] %v954
    %971 = vst [vmem:[%s2 + $0x10] sm:$0xff] %v955
    %972 = vst [vmem:[%s2 + $0x18] sm:$0xff] %v956
    %973 = vst [vmem:[%s2 + $0x20] sm:$0xff] %v957
    %974 = vst [vmem:[%s2 + $0x28] sm:$0xff] %v958
    %975 = vst [vmem:[%s2 + $0x30] sm:$0xff] %v959
    %976 = vst [vmem:[%s2 + $0x38] sm:$0xff] %v960
    %977 = vst [vmem:[%s2 + $0x40] sm:$0xff] %v961
    %978 = vst [vmem:[%s2 + $0x48] sm:$0xff] %v962
    %979 = vst [vmem:[%s2 + $0x50] sm:$0xff] %v963
    %980 = vst [vmem:[%s2 + $0x58] sm:$0xff] %v964
    %981 = vst [vmem:[%s2 + $0x60] sm:$0xff] %v965
    %982 = vst [vmem:[%s2 + $0x68] sm:$0xff] %v966
    %983 = vst [vmem:[%s2 + $0x70] sm:$0xff] %v967
    %984 = vst [vmem:[%s2 + $0x78] sm:$0xff] %v968
    %v985 = vadd.f32 %v953, %v954
    %v986 = vadd.f32 %v985, %v955
    %v987 = vadd.f32 %v986, %v956
    %v988 = vadd.f32 %v987, %v957
    %v989 = vadd.f32 %v988, %v958
    %v990 = vadd.f32 %v989, %v959
    %v991 = vadd.f32 %v990, %v960
    %v992 = vadd.f32 %v991, %v961
    %v993 = vadd.f32 %v992, %v962
    %v994 = vadd.f32 %v993, %v963
    %v995 = vadd.f32 %v994, %v964
    %v996 = vadd.f32 %v995, %v965
    %v997 = vadd.f32 %v996, %v966
    %v998 = vadd.f32 %v997, %v967
    %v999 = vadd.f32 %v998, %v968
    %v1000 = vrot.slane %v999, 4
    %v1001 = vadd.f32 %v999, %v1000
    %v1002 = vrot.slane %v1001, 2
    %v1003 = vadd.f32 %v1001, %v1002
    %v1004 = vrot.slane %v1003, 1
    %v1005 = vadd.f32 %v1003, %v1004
    %v1006 = vmul.f32 %v953, %v953
    %v1007 = vmul.f32 %v954, %v954
    %v1008 = vmul.f32 %v955, %v955
    %v1009 = vmul.f32 %v956, %v956
    %v1010 = vmul.f32 %v957, %v957
    %v1011 = vmul.f32 %v958, %v958
    %v1012 = vmul.f32 %v959, %v959
    %v1013 = vmul.f32 %v960, %v960
    %v1014 = vmul.f32 %v961, %v961
    %v1015 = vmul.f32 %v962, %v962
    %v1016 = vmul.f32 %v963, %v963
    %v1017 = vmul.f32 %v964, %v964
    %v1018 = vmul.f32 %v965, %v965
    %v1019 = vmul.f32 %v966, %v966
    %v1020 = vmul.f32 %v967, %v967
    %v1021 = vmul.f32 %v968, %v968
    %v1022 = vadd.f32 %v1006, %v1007
    %v1023 = vadd.f32 %v1022, %v1008
    %v1024 = vadd.f32 %v1023, %v1009
    %v1025 = vadd.f32 %v1024, %v1010
    %v1026 = vadd.f32 %v1025, %v1011
    %v1027 = vadd.f32 %v1026, %v1012
    %v1028 = vadd.f32 %v1027, %v1013
    %v1029 = vadd.f32 %v1028, %v1014
    %v1030 = vadd.f32 %v1029, %v1015
    %v1031 = vadd.f32 %v1030, %v1016
    %v1032 = vadd.f32 %v1031, %v1017
    %v1033 = vadd.f32 %v1032, %v1018
    %v1034 = vadd.f32 %v1033, %v1019
    %v1035 = vadd.f32 %v1034, %v1020
    %v1036 = vadd.f32 %v1035, %v1021
    %v1037 = vrot.slane %v1036, 4
    %v1038 = vadd.f32 %v1036, %v1037
    %v1039 = vrot.slane %v1038, 2
    %v1040 = vadd.f32 %v1038, %v1039
    %v1041 = vrot.slane %v1040, 1
    %v1042 = vadd.f32 %v1040, %v1041
    %1043 = vst [vmem:[%s3] sm:$0xff] %v1005
    %1044 = vst [vmem:[%s4] sm:$0xff] %v1042
  $region17: #{discriminator_forward.7} parent=0 // pred_fallthru
    _
  // Predicated region
  $region18: #{discriminator_forward.7} parent=0 // pred_check
    _
  $region19: #{discriminator_forward.7} parent=0 // pred_check_branch
    %1046 = sbr.rel (0) target = $region21
  $region20: #{discriminator_forward.7} parent=0 // pred_region
    _
  $region21: #{discriminator_forward.7} parent=0 // pred_fallthru
    _
  // Predicated region
  $region22: #{discriminator_forward.7} parent=0 // pred_check
    _
  $region23: #{discriminator_forward.7} parent=0 // pred_check_branch
    %1048 = sbr.rel (0) target = $region25
  $region24: #{discriminator_forward.7} parent=0 // pred_region
    _
  $region25: #{discriminator_forward.7} parent=0 // pred_fallthru
    _
  // Predicated region
  $region26: #{discriminator_forward.7} parent=0 // pred_check
    _
  $region27: #{discriminator_forward.7} parent=0 // pred_check_branch
    %1050 = sbr.rel (0) target = $region29
  $region28: #{discriminator_forward.7} parent=0 // pred_region
    _
  $region29: #{discriminator_forward.7} parent=0 // pred_fallthru
    _
  // Predicated region
  $region30: #{discriminator_forward.7} parent=0 // pred_check
    _
  $region31: #{discriminator_forward.7} parent=0 // pred_check_branch
    %1052 = sbr.rel (0) target = $region33
  $region32: #{discriminator_forward.7} parent=0 // pred_region
    _
  $region33: #{discriminator_forward.7} parent=0 // pred_fallthru
    _
  // Predicated region
  $region34: #{discriminator_forward.7} parent=0 // pred_check
    _
  $region35: #{discriminator_forward.7} parent=0 // pred_check_branch
    %1054 = sbr.rel (0) target = $region37
  $region36: #{discriminator_forward.7} parent=0 // pred_region
    _
  $region37: #{discriminator_forward.7} parent=0 // pred_fallthru
    _
  // Predicated region
  $region38: #{discriminator_forward.7} parent=0 // pred_check
    _
  $region39: #{discriminator_forward.7} parent=0 // pred_check_branch
    %1056 = sbr.rel (0) target = $region41
  $region40: #{discriminator_forward.7} parent=0 // pred_region
    _
  $region41: #{discriminator_forward.7} parent=0 // pred_fallthru
    _

// kernel: discriminator_forward.9
$region0: #{discriminator_forward.9}
  #allocation0 [shape = 'u32[]', space=smem, size = 0x4, offset = 0x4, fixed_abs, tag = 'smem constant byte address 0x4 - core index']
  #allocation1 [shape = 'u32[144,128]{1,0:T(1,128)}', space=vmem, size = 0x12000, scoped, tag = 'internal scratch']
  #allocation2 [shape = 'f32[32,256]{1,0:T(8,128)}', space=vmem, size = 0x8000, scoped, tag = 'scratch operand']
  %s0 = inlined_call_operand.vmem [shape: bf16[32,1536], index: 0, kind: input, shape index: {}]
  %s1 = inlined_call_operand.vmem [shape: bf16[1536,256], index: 1, kind: input, shape index: {}]
  %s2 = inlined_call_operand.vmem [shape: f32[32,256], index: 2, kind: output, shape index: {0}]
  %s3 = inlined_call_operand.vmem [shape: f32[8,256], index: 3, kind: output, shape index: {1}]
  %s4 = inlined_call_operand.vmem [shape: f32[8,256], index: 4, kind: output, shape index: {2}]
  %5 = xla_tuple %s2, %s3, %s4
  %s6 = sld [smem:[#allocation0]]
  $region88: #{discriminator_forward.9} parent=0
    _
  %s8 = ssub.s32 1, %s6
  %s9 = scalar_select 0, %s8, %s6
  $region1: #{discriminator_forward.9} parent=0
    #allocation3 [shape = 'u8[65536]{0}', space=vmem, size = 0x10000, scoped, tag = 'input window, operand 0']
    loop: start=0, step=1, limit=5
    $region2: #{discriminator_forward.9} parent=1 // loop_pre_header
      _
    $region3: #{discriminator_forward.9} parent=1 // loop_header
      %s11 = sphi 0, %s15
      %p12 = scmp.ge.s32.totalorder %s11, 5
      %s18 = sphi 0, %s30
      %s19 = sphi 0, %s26
      %s20 = sphi 0, %s18
      %s21 = sphi 0, %s19
      %s22 = sphi 0, %s20
      %s23 = sphi 0, %s21
      %s35 = sphi 0, %s37
      %s38 = sphi 0, %s35
      %s39 = sphi 0, %s38
      %s55 = sphi 0, %s39
      %s61 = sphi 0, %s63
      %s64 = sphi 0, %s61
      %s65 = sphi 0, %s64
      %s81 = sphi 0, %s65
      %s87 = sphi 0, %s89
      %s90 = sphi 0, %s87
      %s91 = sphi 0, %s90
      %s107 = sphi 0, %s91
      %s113 = sphi 0, %s115
      %s116 = sphi 0, %s113
      %s117 = sphi 0, %s116
      %s133 = sphi 0, %s117
      %s139 = sphi 0, %s141
      %s142 = sphi 0, %s139
      %s143 = sphi 0, %s142
      %s159 = sphi 0, %s143
    $region4: #{discriminator_forward.9} parent=1 // loop_header_branch
      %14 = sbr.rel (%p12) target = $region8
    $region5: #{discriminator_forward.9} parent=1 // loop_body
      %s16 = ssub.s32 %s11, 1
      %s17 = ssub.s32 %s11, 2
      %s24 = sadd.s32 1, %s19
      %p25 = scmp.ge.s32.totalorder %s24, 3
      %s26 = scalar_select %p25, 0, %s24
      %s27 = sadd.s32 1, %s18
      %s28 = scalar_select %p25, %s27, %s18
      %p29 = scmp.ge.s32.totalorder %s28, 1
      %s30 = scalar_select %p29, 0, %s28
      %s31 = ssub.s32 %s18, %s30
      %s32 = ssub.s32 %s19, %s26
      %s33 = sor.u32 %s31, %s32
      %p34 = scmp.eq.s32.totalorder %s33, 0
      %s36 = sadd.s32 %s35, 1
      %s37 = scalar_select %p34, %s35, %s36
      %p40 = pneg %p34
      %p41 = scmp.eq.s32.totalorder %s11, 2
      %p42 = por %p40, %p41
      %p43 = scmp.ne.s32.totalorder %s35, %s38
      %p44 = scmp.eq.s32.totalorder %s11, 0
      %p45 = por %p43, %p44
      %p46 = scmp.ne.s32.totalorder %s35, %s38
      %p47 = scmp.eq.s32.totalorder %s16, 2
      %p48 = por %p46, %p47
      %p49 = scmp.ne.s32.totalorder %s38, %s39
      %p50 = scmp.eq.s32.totalorder %s16, 0
      %p51 = por %p49, %p50
      %p52 = scmp.ne.s32.totalorder %s38, %s39
      %p53 = scmp.eq.s32.totalorder %s17, 2
      %p54 = por %p52, %p53
      %p56 = scmp.ne.s32.totalorder %s39, %s55
      %p57 = scmp.eq.s32.totalorder %s17, 0
      %p58 = por %p56, %p57
      %s59 = ssub.s32 %s19, %s26
      %p60 = scmp.eq.s32.totalorder %s59, 0
      %s62 = sadd.s32 %s61, 1
      %s63 = scalar_select %p60, %s61, %s62
      %p66 = pneg %p60
      %p67 = scmp.eq.s32.totalorder %s11, 2
      %p68 = por %p66, %p67
      %p69 = scmp.ne.s32.totalorder %s61, %s64
      %p70 = scmp.eq.s32.totalorder %s11, 0
      %p71 = por %p69, %p70
      %p72 = scmp.ne.s32.totalorder %s61, %s64
      %p73 = scmp.eq.s32.totalorder %s16, 2
      %p74 = por %p72, %p73
      %p75 = scmp.ne.s32.totalorder %s64, %s65
      %p76 = scmp.eq.s32.totalorder %s16, 0
      %p77 = por %p75, %p76
      %p78 = scmp.ne.s32.totalorder %s64, %s65
      %p79 = scmp.eq.s32.totalorder %s17, 2
      %p80 = por %p78, %p79
      %p82 = scmp.ne.s32.totalorder %s65, %s81
      %p83 = scmp.eq.s32.totalorder %s17, 0
      %p84 = por %p82, %p83
      %s85 = ssub.s32 %s18, %s30
      %p86 = scmp.eq.s32.totalorder %s85, 0
      %s88 = sadd.s32 %s87, 1
      %s89 = scalar_select %p86, %s87, %s88
      %p92 = pneg %p86
      %p93 = scmp.eq.s32.totalorder %s11, 2
      %p94 = por %p92, %p93
      %p95 = scmp.ne.s32.totalorder %s87, %s90
      %p96 = scmp.eq.s32.totalorder %s11, 0
      %p97 = por %p95, %p96
      %p98 = scmp.ne.s32.totalorder %s87, %s90
      %p99 = scmp.eq.s32.totalorder %s16, 2
      %p100 = por %p98, %p99
      %p101 = scmp.ne.s32.totalorder %s90, %s91
      %p102 = scmp.eq.s32.totalorder %s16, 0
      %p103 = por %p101, %p102
      %p104 = scmp.ne.s32.totalorder %s90, %s91
      %p105 = scmp.eq.s32.totalorder %s17, 2
      %p106 = por %p104, %p105
      %p108 = scmp.ne.s32.totalorder %s91, %s107
      %p109 = scmp.eq.s32.totalorder %s17, 0
      %p110 = por %p108, %p109
      %s111 = ssub.s32 %s18, %s30
      %p112 = scmp.eq.s32.totalorder %s111, 0
      %s114 = sadd.s32 %s113, 1
      %s115 = scalar_select %p112, %s113, %s114
      %p118 = pneg %p112
      %p119 = scmp.eq.s32.totalorder %s11, 2
      %p120 = por %p118, %p119
      %p121 = scmp.ne.s32.totalorder %s113, %s116
      %p122 = scmp.eq.s32.totalorder %s11, 0
      %p123 = por %p121, %p122
      %p124 = scmp.ne.s32.totalorder %s113, %s116
      %p125 = scmp.eq.s32.totalorder %s16, 2
      %p126 = por %p124, %p125
      %p127 = scmp.ne.s32.totalorder %s116, %s117
      %p128 = scmp.eq.s32.totalorder %s16, 0
      %p129 = por %p127, %p128
      %p130 = scmp.ne.s32.totalorder %s116, %s117
      %p131 = scmp.eq.s32.totalorder %s17, 2
      %p132 = por %p130, %p131
      %p134 = scmp.ne.s32.totalorder %s117, %s133
      %p135 = scmp.eq.s32.totalorder %s17, 0
      %p136 = por %p134, %p135
      %s137 = ssub.s32 %s18, %s30
      %p138 = scmp.eq.s32.totalorder %s137, 0
      %s140 = sadd.s32 %s139, 1
      %s141 = scalar_select %p138, %s139, %s140
      %p144 = pneg %p138
      %p145 = scmp.eq.s32.totalorder %s11, 2
      %p146 = por %p144, %p145
      %p147 = scmp.ne.s32.totalorder %s139, %s142
      %p148 = scmp.eq.s32.totalorder %s11, 0
      %p149 = por %p147, %p148
      %p150 = scmp.ne.s32.totalorder %s139, %s142
      %p151 = scmp.eq.s32.totalorder %s16, 2
      %p152 = por %p150, %p151
      %p153 = scmp.ne.s32.totalorder %s142, %s143
      %p154 = scmp.eq.s32.totalorder %s16, 0
      %p155 = por %p153, %p154
      %p156 = scmp.ne.s32.totalorder %s142, %s143
      %p157 = scmp.eq.s32.totalorder %s17, 2
      %p158 = por %p156, %p157
      %p160 = scmp.ne.s32.totalorder %s143, %s159
      %p161 = scmp.eq.s32.totalorder %s17, 0
      %p162 = por %p160, %p161
      %p163 = scmp.le.s32.totalorder 1, %s11
      %p164 = scmp.lt.s32.totalorder %s11, 4
      %p165 = pnand %p163, %p164
      %p166 = pneg %p165
      // Predicated region
      $region9: #{discriminator_forward.9} parent=5 // pred_check
        _
      $region10: #{discriminator_forward.9} parent=5 // pred_check_branch
        %168 = sbr.rel (%p165) target = $region12
      $region11: #{discriminator_forward.9} parent=5 // pred_region
        %s169 = ssub.s32 %s11, 1
      $region12: #{discriminator_forward.9} parent=5 // pred_fallthru
        _
      %p170 = scmp.lt.s32.totalorder %s11, 3
      // Predicated region
      $region13: #{discriminator_forward.9} parent=5 // pred_check
        %p171 = pneg %p170
      $region14: #{discriminator_forward.9} parent=5 // pred_check_branch
        %173 = sbr.rel (%p171) target = $region16
      $region15: #{discriminator_forward.9} parent=5 // pred_region
        // Predicated region
        $region17: #{discriminator_forward.9} parent=15 // pred_check
          %p174 = pneg %p45
        $region18: #{discriminator_forward.9} parent=15 // pred_check_branch
          %176 = sbr.rel (%p174) target = $region20
        $region19: #{discriminator_forward.9} parent=15 // pred_region
          %s177 = sand.u32 %s35, 1
          %s178 = sand.u32 %s35, 1
          %s179 = smul.addr %s178, 64
          %s180 = scalar_lea.vmem [#allocation3], %s179
          %s181 = smul.u32 4, %s18
          %s182 = smul.u32 4, %s19
          %s183 = smul.addr %s181, 12
          %s184 = sadd.s32 %s182, %s183
          %s185 = smul.addr %s184, 4
          %s186 = scalar_lea.vmem %s0, %s185
          // Predicated region
          $region21: #{discriminator_forward.9} parent=19 // pred_check
            _
          $region22: #{discriminator_forward.9} parent=19 // pred_check_branch
            %188 = sbr.rel (0) target = $region24
          $region23: #{discriminator_forward.9} parent=19 // pred_region
            // Predicated region
            $region25: #{discriminator_forward.9} parent=23 // pred_check
              _
            $region26: #{discriminator_forward.9} parent=23 // pred_check_branch
              %190 = sbr.rel (0) target = $region28
            $region27: #{discriminator_forward.9} parent=23 // pred_region
              loop: start=0, step=1, limit=1
              $region29: #{discriminator_forward.9} parent=27 // loop_pre_header
                _
              $region30: #{discriminator_forward.9} parent=27 // loop_header
                %s192 = sphi 0, %s196
                %p193 = scmp.ge.s32.totalorder %s192, 1
                %s197 = sphi %s186, %s186
                %s198 = sphi %s180, %s180
              $region31: #{discriminator_forward.9} parent=27 // loop_header_branch
                %195 = sbr.rel (%p193) target = $region35
              $region32: #{discriminator_forward.9} parent=27 // loop_body
                %v199 = vld [vmem:[%s197] sm:$0xff]
                %200 = vst [vmem:[%s198] sm:$0xff] %v199
                %v201 = vld [vmem:[%s197 + $0x8] sm:$0xff]
                %202 = vst [vmem:[%s198 + $0x8] sm:$0xff] %v201
                %v203 = vld [vmem:[%s197 + $0x30] sm:$0xff]
                %204 = vst [vmem:[%s198 + $0x10] sm:$0xff] %v203
                %v205 = vld [vmem:[%s197 + $0x38] sm:$0xff]
                %206 = vst [vmem:[%s198 + $0x18] sm:$0xff] %v205
                %v207 = vld [vmem:[%s197 + $0x60] sm:$0xff]
                %208 = vst [vmem:[%s198 + $0x20] sm:$0xff] %v207
                %v209 = vld [vmem:[%s197 + $0x68] sm:$0xff]
                %210 = vst [vmem:[%s198 + $0x28] sm:$0xff] %v209
                %v211 = vld [vmem:[%s197 + $0x90] sm:$0xff]
                %212 = vst [vmem:[%s198 + $0x30] sm:$0xff] %v211
                %v213 = vld [vmem:[%s197 + $0x98] sm:$0xff]
                %214 = vst [vmem:[%s198 + $0x38] sm:$0xff] %v213
              $region33: #{discriminator_forward.9} parent=27 // loop_footer
                %s196 = sadd.s32 1, %s192
              $region34: #{discriminator_forward.9} parent=27 // loop_footer_branch
                %191 = sbr.rel target = $region30
              $region35: #{discriminator_forward.9} parent=27 // loop_exit
                _
            $region28: #{discriminator_forward.9} parent=23 // pred_fallthru
              _
            // Predicated region
            $region36: #{discriminator_forward.9} parent=23 // pred_check
              _
            $region37: #{discriminator_forward.9} parent=23 // pred_check_branch
              %216 = sbr.rel target = $region39
            $region38: #{discriminator_forward.9} parent=23 // pred_region
              _
            $region39: #{discriminator_forward.9} parent=23 // pred_fallthru
              _
          $region24: #{discriminator_forward.9} parent=19 // pred_fallthru
            _
          %217 = vnop
        $region20: #{discriminator_forward.9} parent=15 // pred_fallthru
          _
        // Predicated region
        $region40: #{discriminator_forward.9} parent=15 // pred_check
          %p218 = pneg %p71
        $region41: #{discriminator_forward.9} parent=15 // pred_check_branch
          %220 = sbr.rel (%p218) target = $region43
        $region42: #{discriminator_forward.9} parent=15 // pred_region
          %s221 = smul.u32 64, %s19
          %p222 = scmp.lt.s32.totalorder %s221, 191
          %s223 = scalar_select %p222, %s221, 191
          %s224 = smul.addr %s223, 2
          %s225 = smul.addr %s224, 4
          %s226 = scalar_lea.vmem %s1, %s225
          %s227 = smul.u32 64, %s19
        $region43: #{discriminator_forward.9} parent=15 // pred_fallthru
          _
      $region16: #{discriminator_forward.9} parent=5 // pred_fallthru
        _
      %p228 = scmp.le.s32.totalorder 1, %s11
      %p229 = scmp.lt.s32.totalorder %s11, 4
      %p230 = pnand %p228, %p229
      %p231 = pneg %p230
      // Predicated region
      $region44: #{discriminator_forward.9} parent=5 // pred_check
        _
      $region45: #{discriminator_forward.9} parent=5 // pred_check_branch
        %233 = sbr.rel (%p230) target = $region47
      $region46: #{discriminator_forward.9} parent=5 // pred_region
        %s234 = ssub.s32 %s11, 1
        %s235 = sand.u32 %s38, 1
        %s236 = sand.u32 %s38, 1
        %s237 = smul.addr %s236, 64
        %s238 = scalar_lea.vmem [#allocation3], %s237
        // Predicated region
        $region48: #{discriminator_forward.9} parent=46 // pred_check
          %p239 = pneg %p51
        $region49: #{discriminator_forward.9} parent=46 // pred_check_branch
          %241 = sbr.rel (%p239) target = $region51
        $region50: #{discriminator_forward.9} parent=46 // pred_region
          _
        $region51: #{discriminator_forward.9} parent=46 // pred_fallthru
          _
        %s242 = sand.u32 %s38, 1
        %s243 = sand.u32 %s38, 1
        %s244 = smul.addr %s243, 64
        %s245 = scalar_lea.vmem [#allocation3], %s244
        %p246 = pneg %p51
        %p247 = pneg %p48
        %s248 = smul.u32 64, %s21
        %p249 = scmp.lt.s32.totalorder %s248, 191
        %s250 = scalar_select %p249, %s248, 191
        %s251 = smul.addr %s250, 2
        %s252 = smul.addr %s251, 4
        %s253 = scalar_lea.vmem %s1, %s252
        %p254 = pneg %p77
        %p255 = pneg %p74
        %p256 = pneg %p103
        %p257 = pneg %p100
        %s258 = smul.u32 4, %s20
        %p259 = scmp.lt.s32.totalorder %s258, 3
        %s260 = scalar_select %p259, %s258, 3
        %s261 = smul.addr %s260, 2
        %s262 = smul.addr %s261, 8
        %s263 = scalar_lea.vmem %s2, %s262
        %p264 = pneg %p129
        %p265 = pneg %p126
        %p266 = scmp.lt.s32.totalorder %s20, 0
        %s267 = scalar_select %p266, %s20, 0
        %s268 = smul.addr %s267, 2
        %s269 = smul.addr %s268, 8
        %s270 = scalar_lea.vmem %s3, %s269
        %p271 = pneg %p155
        %p272 = pneg %p152
        %p273 = scmp.lt.s32.totalorder %s20, 0
        %s274 = scalar_select %p273, %s20, 0
        %s275 = smul.addr %s274, 2
        %s276 = smul.addr %s275, 8
        %s277 = scalar_lea.vmem %s4, %s276
        %s278 = smul.u32 4, %s20
        %s279 = smul.u32 4, %s21
        %s280 = smul.u32 64, %s21
        %p281 = scmp.lt.s32.totalorder %s280, 191
        %s282 = scalar_select %p281, %s280, 191
        %s283 = smul.addr %s282, 2
        %s284 = smul.addr %s283, 4
        %s285 = scalar_lea.vmem %s1, %s284
        %s286 = smul.u32 64, %s21
        %s287 = smul.u32 4, %s20
        %p288 = scmp.lt.s32.totalorder %s287, 3
        %s289 = scalar_select %p288, %s287, 3
        %s290 = smul.addr %s289, 2
        %s291 = smul.addr %s290, 8
        %s292 = scalar_lea.vmem %s2, %s291
        %s293 = smul.u32 4, %s20
        %p294 = scmp.lt.s32.totalorder %s20, 0
        %s295 = scalar_select %p294, %s20, 0
        %s296 = smul.addr %s295, 2
        %s297 = smul.addr %s296, 8
        %s298 = scalar_lea.vmem %s3, %s297
        %p299 = scmp.lt.s32.totalorder %s20, 0
        %s300 = scalar_select %p299, %s20, 0
        %s301 = smul.addr %s300, 2
        %s302 = smul.addr %s301, 8
        %s303 = scalar_lea.vmem %s4, %s302
        %p304 = scmp.eq.s32.totalorder %s21, 0
        // Predicated region
        $region52: #{discriminator_forward.9} parent=46 // pred_check
          %p305 = pneg %p304
        $region53: #{discriminator_forward.9} parent=46 // pred_check_branch
          %307 = sbr.rel (%p305) target = $region55
        $region54: #{discriminator_forward.9} parent=46 // pred_region
          %308 = vst [vmem:[#allocation2] sm:$0xff] 0.0
          %309 = vst [vmem:[#allocation2 + $0x8] sm:$0xff] 0.0
          %310 = vst [vmem:[#allocation2 + $0x10] sm:$0xff] 0.0
          %311 = vst [vmem:[#allocation2 + $0x18] sm:$0xff] 0.0
          %312 = vst [vmem:[#allocation2 + $0x20] sm:$0xff] 0.0
          %313 = vst [vmem:[#allocation2 + $0x28] sm:$0xff] 0.0
          %314 = vst [vmem:[#allocation2 + $0x30] sm:$0xff] 0.0
          %315 = vst [vmem:[#allocation2 + $0x38] sm:$0xff] 0.0
        $region55: #{discriminator_forward.9} parent=46 // pred_fallthru
          _
        %v316 = vld [vmem:[#allocation2] sm:$0xff]
        %v317 = vld [vmem:[#allocation2 + $0x8] sm:$0xff]
        %v318 = vld [vmem:[#allocation2 + $0x10] sm:$0xff]
        %v319 = vld [vmem:[#allocation2 + $0x18] sm:$0xff]
        %v320 = vld [vmem:[#allocation2 + $0x20] sm:$0xff]
        %v321 = vld [vmem:[#allocation2 + $0x28] sm:$0xff]
        %v322 = vld [vmem:[#allocation2 + $0x30] sm:$0xff]
        %v323 = vld [vmem:[#allocation2 + $0x38] sm:$0xff]
        %v324 = vld [vmem:[%s238] sm:$0xff]
        %v325 = vld [vmem:[%s238 + $0x8] sm:$0xff]
        %v326 = vld [vmem:[%s238 + $0x10] sm:$0xff]
        %v327 = vld [vmem:[%s238 + $0x18] sm:$0xff]
        %v328 = vld [vmem:[%s238 + $0x20] sm:$0xff]
        %v329 = vld [vmem:[%s238 + $0x28] sm:$0xff]
        %v330 = vld [vmem:[%s238 + $0x30] sm:$0xff]
        %v331 = vld [vmem:[%s238 + $0x38] sm:$0xff]
        %v332 = vld [vmem:[%s285] sm:$0xff]
        %v333 = vld [vmem:[%s285 + $0x8] sm:$0xff]
        %v334 = vld [vmem:[%s285 + $0x10] sm:$0xff]
        %v335 = vld [vmem:[%s285 + $0x18] sm:$0xff]
        %v336 = vld [vmem:[%s285 + $0x20] sm:$0xff]
        %v337 = vld [vmem:[%s285 + $0x28] sm:$0xff]
        %v338 = vld [vmem:[%s285 + $0x30] sm:$0xff]
        %v339 = vld [vmem:[%s285 + $0x38] sm:$0xff]
        %v340 = vld [vmem:[%s285 + $0x40] sm:$0xff]
        %v341 = vld [vmem:[%s285 + $0x48] sm:$0xff]
        %v342 = vld [vmem:[%s285 + $0x50] sm:$0xff]
        %v343 = vld [vmem:[%s285 + $0x58] sm:$0xff]
        %v344 = vld [vmem:[%s285 + $0x60] sm:$0xff]
        %v345 = vld [vmem:[%s285 + $0x68] sm:$0xff]
        %v346 = vld [vmem:[%s285 + $0x70] sm:$0xff]
        %v347 = vld [vmem:[%s285 + $0x78] sm:$0xff]
        %v348 = vld [vmem:[%s285 + $0x80] sm:$0xff]
        %v349 = vld [vmem:[%s285 + $0x88] sm:$0xff]
        %v350 = vld [vmem:[%s285 + $0x90] sm:$0xff]
        %v351 = vld [vmem:[%s285 + $0x98] sm:$0xff]
        %v352 = vld [vmem:[%s285 + $0xa0] sm:$0xff]
        %v353 = vld [vmem:[%s285 + $0xa8] sm:$0xff]
        %v354 = vld [vmem:[%s285 + $0xb0] sm:$0xff]
        %v355 = vld [vmem:[%s285 + $0xb8] sm:$0xff]
        %v356 = vld [vmem:[%s285 + $0xc0] sm:$0xff]
        %v357 = vld [vmem:[%s285 + $0xc8] sm:$0xff]
        %v358 = vld [vmem:[%s285 + $0xd0] sm:$0xff]
        %v359 = vld [vmem:[%s285 + $0xd8] sm:$0xff]
        %v360 = vld [vmem:[%s285 + $0xe0] sm:$0xff]
        %v361 = vld [vmem:[%s285 + $0xe8] sm:$0xff]
        %v362 = vld [vmem:[%s285 + $0xf0] sm:$0xff]
        %v363 = vld [vmem:[%s285 + $0xf8] sm:$0xff]
        %v364 = vld [vmem:[%s285 + $0x100] sm:$0xff]
        %v365 = vld [vmem:[%s285 + $0x108] sm:$0xff]
        %v366 = vld [vmem:[%s285 + $0x110] sm:$0xff]
        %v367 = vld [vmem:[%s285 + $0x118] sm:$0xff]
        %v368 = vld [vmem:[%s285 + $0x120] sm:$0xff]
        %v369 = vld [vmem:[%s285 + $0x128] sm:$0xff]
        %v370 = vld [vmem:[%s285 + $0x130] sm:$0xff]
        %v371 = vld [vmem:[%s285 + $0x138] sm:$0xff]
        %v372 = vld [vmem:[%s285 + $0x140] sm:$0xff]
        %v373 = vld [vmem:[%s285 + $0x148] sm:$0xff]
        %v374 = vld [vmem:[%s285 + $0x150] sm:$0xff]
        %v375 = vld [vmem:[%s285 + $0x158] sm:$0xff]
        %v376 = vld [vmem:[%s285 + $0x160] sm:$0xff]
        %v377 = vld [vmem:[%s285 + $0x168] sm:$0xff]
        %v378 = vld [vmem:[%s285 + $0x170] sm:$0xff]
        %v379 = vld [vmem:[%s285 + $0x178] sm:$0xff]
        %v380 = vld [vmem:[%s285 + $0x180] sm:$0xff]
        %v381 = vld [vmem:[%s285 + $0x188] sm:$0xff]
        %v382 = vld [vmem:[%s285 + $0x190] sm:$0xff]
        %v383 = vld [vmem:[%s285 + $0x198] sm:$0xff]
        %v384 = vld [vmem:[%s285 + $0x1a0] sm:$0xff]
        %v385 = vld [vmem:[%s285 + $0x1a8] sm:$0xff]
        %v386 = vld [vmem:[%s285 + $0x1b0] sm:$0xff]
        %v387 = vld [vmem:[%s285 + $0x1b8] sm:$0xff]
        %v388 = vld [vmem:[%s285 + $0x1c0] sm:$0xff]
        %v389 = vld [vmem:[%s285 + $0x1c8] sm:$0xff]
        %v390 = vld [vmem:[%s285 + $0x1d0] sm:$0xff]
        %v391 = vld [vmem:[%s285 + $0x1d8] sm:$0xff]
        %v392 = vld [vmem:[%s285 + $0x1e0] sm:$0xff]
        %v393 = vld [vmem:[%s285 + $0x1e8] sm:$0xff]
        %v394 = vld [vmem:[%s285 + $0x1f0] sm:$0xff]
        %v395 = vld [vmem:[%s285 + $0x1f8] sm:$0xff]
        %v404 = vunpack.c.l.b16 %v324
        %v405 = vunpack.c.h.b16 %v324
        %v406 = vunpack.c.l.b16 %v325
        %v407 = vunpack.c.h.b16 %v325
        %v408 = vunpack.c.l.b16 %v326
        %v409 = vunpack.c.h.b16 %v326
        %v410 = vunpack.c.l.b16 %v327
        %v411 = vunpack.c.h.b16 %v327
        %v412 = vunpack.c.l.b16 %v328
        %v413 = vunpack.c.h.b16 %v328
        %v414 = vunpack.c.l.b16 %v329
        %v415 = vunpack.c.h.b16 %v329
        %v416 = vunpack.c.l.b16 %v330
        %v417 = vunpack.c.h.b16 %v330
        %v418 = vunpack.c.l.b16 %v331
        %v419 = vunpack.c.h.b16 %v331
        %v420 = vpack.c.b16 %v408, %v404
        %v421 = vpack.c.b16 %v409, %v405
        %v422 = vpack.c.b16 %v410, %v406
        %v423 = vpack.c.b16 %v411, %v407
        %v424 = vpack.c.b16 %v416, %v412
        %v425 = vpack.c.b16 %v417, %v413
        %v426 = vpack.c.b16 %v418, %v414
        %v427 = vpack.c.b16 %v419, %v415
        %v500 = vunpack.c.l.b16 %v332
        %v501 = vunpack.c.h.b16 %v332
        %v502 = vunpack.c.l.b16 %v333
        %v503 = vunpack.c.h.b16 %v333
        %v504 = vunpack.c.l.b16 %v334
        %v505 = vunpack.c.h.b16 %v334
        %v506 = vunpack.c.l.b16 %v335
        %v507 = vunpack.c.h.b16 %v335
        %v508 = vunpack.c.l.b16 %v336
        %v509 = vunpack.c.h.b16 %v336
        %v510 = vunpack.c.l.b16 %v337
        %v511 = vunpack.c.h.b16 %v337
        %v512 = vunpack.c.l.b16 %v338
        %v513 = vunpack.c.h.b16 %v338
        %v514 = vunpack.c.l.b16 %v339
        %v515 = vunpack.c.h.b16 %v339
        %v516 = vunpack.c.l.b16 %v340
        %v517 = vunpack.c.h.b16 %v340
        %v518 = vunpack.c.l.b16 %v341
        %v519 = vunpack.c.h.b16 %v341
        %v520 = vunpack.c.l.b16 %v342
        %v521 = vunpack.c.h.b16 %v342
        %v522 = vunpack.c.l.b16 %v343
        %v523 = vunpack.c.h.b16 %v343
        %v524 = vunpack.c.l.b16 %v344
        %v525 = vunpack.c.h.b16 %v344
        %v526 = vunpack.c.l.b16 %v345
        %v527 = vunpack.c.h.b16 %v345
        %v528 = vunpack.c.l.b16 %v346
        %v529 = vunpack.c.h.b16 %v346
        %v530 = vunpack.c.l.b16 %v347
        %v531 = vunpack.c.h.b16 %v347
        %v532 = vunpack.c.l.b16 %v348
        %v533 = vunpack.c.h.b16 %v348
        %v534 = vunpack.c.l.b16 %v349
        %v535 = vunpack.c.h.b16 %v349
        %v536 = vunpack.c.l.b16 %v350
        %v537 = vunpack.c.h.b16 %v350
        %v538 = vunpack.c.l.b16 %v351
        %v539 = vunpack.c.h.b16 %v351
        %v540 = vunpack.c.l.b16 %v352
        %v541 = vunpack.c.h.b16 %v352
        %v542 = vunpack.c.l.b16 %v353
        %v543 = vunpack.c.h.b16 %v353
        %v544 = vunpack.c.l.b16 %v354
        %v545 = vunpack.c.h.b16 %v354
        %v546 = vunpack.c.l.b16 %v355
        %v547 = vunpack.c.h.b16 %v355
        %v548 = vunpack.c.l.b16 %v356
        %v549 = vunpack.c.h.b16 %v356
        %v550 = vunpack.c.l.b16 %v357
        %v551 = vunpack.c.h.b16 %v357
        %v552 = vunpack.c.l.b16 %v358
        %v553 = vunpack.c.h.b16 %v358
        %v554 = vunpack.c.l.b16 %v359
        %v555 = vunpack.c.h.b16 %v359
        %v556 = vunpack.c.l.b16 %v360
        %v557 = vunpack.c.h.b16 %v360
        %v558 = vunpack.c.l.b16 %v361
        %v559 = vunpack.c.h.b16 %v361
        %v560 = vunpack.c.l.b16 %v362
        %v561 = vunpack.c.h.b16 %v362
        %v562 = vunpack.c.l.b16 %v363
        %v563 = vunpack.c.h.b16 %v363
        %v564 = vunpack.c.l.b16 %v364
        %v565 = vunpack.c.h.b16 %v364
        %v566 = vunpack.c.l.b16 %v365
        %v567 = vunpack.c.h.b16 %v365
        %v568 = vunpack.c.l.b16 %v366
        %v569 = vunpack.c.h.b16 %v366
        %v570 = vunpack.c.l.b16 %v367
        %v571 = vunpack.c.h.b16 %v367
        %v572 = vunpack.c.l.b16 %v368
        %v573 = vunpack.c.h.b16 %v368
        %v574 = vunpack.c.l.b16 %v369
        %v575 = vunpack.c.h.b16 %v369
        %v576 = vunpack.c.l.b16 %v370
        %v577 = vunpack.c.h.b16 %v370
        %v578 = vunpack.c.l.b16 %v371
        %v579 = vunpack.c.h.b16 %v371
        %v580 = vunpack.c.l.b16 %v372
        %v581 = vunpack.c.h.b16 %v372
        %v582 = vunpack.c.l.b16 %v373
        %v583 = vunpack.c.h.b16 %v373
        %v584 = vunpack.c.l.b16 %v374
        %v585 = vunpack.c.h.b16 %v374
        %v586 = vunpack.c.l.b16 %v375
        %v587 = vunpack.c.h.b16 %v375
        %v588 = vunpack.c.l.b16 %v376
        %v589 = vunpack.c.h.b16 %v376
        %v590 = vunpack.c.l.b16 %v377
        %v591 = vunpack.c.h.b16 %v377
        %v592 = vunpack.c.l.b16 %v378
        %v593 = vunpack.c.h.b16 %v378
        %v594 = vunpack.c.l.b16 %v379
        %v595 = vunpack.c.h.b16 %v379
        %v596 = vunpack.c.l.b16 %v380
        %v597 = vunpack.c.h.b16 %v380
        %v598 = vunpack.c.l.b16 %v381
        %v599 = vunpack.c.h.b16 %v381
        %v600 = vunpack.c.l.b16 %v382
        %v601 = vunpack.c.h.b16 %v382
        %v602 = vunpack.c.l.b16 %v383
        %v603 = vunpack.c.h.b16 %v383
        %v604 = vunpack.c.l.b16 %v384
        %v605 = vunpack.c.h.b16 %v384
        %v606 = vunpack.c.l.b16 %v385
        %v607 = vunpack.c.h.b16 %v385
        %v608 = vunpack.c.l.b16 %v386
        %v609 = vunpack.c.h.b16 %v386
        %v610 = vunpack.c.l.b16 %v387
        %v611 = vunpack.c.h.b16 %v387
        %v612 = vunpack.c.l.b16 %v388
        %v613 = vunpack.c.h.b16 %v388
        %v614 = vunpack.c.l.b16 %v389
        %v615 = vunpack.c.h.b16 %v389
        %v616 = vunpack.c.l.b16 %v390
        %v617 = vunpack.c.h.b16 %v390
        %v618 = vunpack.c.l.b16 %v391
        %v619 = vunpack.c.h.b16 %v391
        %v620 = vunpack.c.l.b16 %v392
        %v621 = vunpack.c.h.b16 %v392
        %v622 = vunpack.c.l.b16 %v393
        %v623 = vunpack.c.h.b16 %v393
        %v624 = vunpack.c.l.b16 %v394
        %v625 = vunpack.c.h.b16 %v394
        %v626 = vunpack.c.l.b16 %v395
        %v627 = vunpack.c.h.b16 %v395
        %v628 = vpack.c.b16 %v502, %v500
        %v629 = vpack.c.b16 %v503, %v501
        %v630 = vpack.c.b16 %v506, %v504
        %v631 = vpack.c.b16 %v507, %v505
        %v632 = vpack.c.b16 %v510, %v508
        %v633 = vpack.c.b16 %v511, %v509
        %v634 = vpack.c.b16 %v514, %v512
        %v635 = vpack.c.b16 %v515, %v513
        %v636 = vpack.c.b16 %v518, %v516
        %v637 = vpack.c.b16 %v519, %v517
        %v638 = vpack.c.b16 %v522, %v520
        %v639 = vpack.c.b16 %v523, %v521
        %v640 = vpack.c.b16 %v526, %v524
        %v641 = vpack.c.b16 %v527, %v525
        %v642 = vpack.c.b16 %v530, %v528
        %v643 = vpack.c.b16 %v531, %v529
        %v644 = vpack.c.b16 %v534, %v532
        %v645 = vpack.c.b16 %v535, %v533
        %v646 = vpack.c.b16 %v538, %v536
        %v647 = vpack.c.b16 %v539, %v537
        %v648 = vpack.c.b16 %v542, %v540
        %v649 = vpack.c.b16 %v543, %v541
        %v650 = vpack.c.b16 %v546, %v544
        %v651 = vpack.c.b16 %v547, %v545
        %v652 = vpack.c.b16 %v550, %v548
        %v653 = vpack.c.b16 %v551, %v549
        %v654 = vpack.c.b16 %v554, %v552
        %v655 = vpack.c.b16 %v555, %v553
        %v656 = vpack.c.b16 %v558, %v556
        %v657 = vpack.c.b16 %v559, %v557
        %v658 = vpack.c.b16 %v562, %v560
        %v659 = vpack.c.b16 %v563, %v561
        %v660 = vpack.c.b16 %v566, %v564
        %v661 = vpack.c.b16 %v567, %v565
        %v662 = vpack.c.b16 %v570, %v568
        %v663 = vpack.c.b16 %v571, %v569
        %v664 = vpack.c.b16 %v574, %v572
        %v665 = vpack.c.b16 %v575, %v573
        %v666 = vpack.c.b16 %v578, %v576
        %v667 = vpack.c.b16 %v579, %v577
        %v668 = vpack.c.b16 %v582, %v580
        %v669 = vpack.c.b16 %v583, %v581
        %v670 = vpack.c.b16 %v586, %v584
        %v671 = vpack.c.b16 %v587, %v585
        %v672 = vpack.c.b16 %v590, %v588
        %v673 = vpack.c.b16 %v591, %v589
        %v674 = vpack.c.b16 %v594, %v592
        %v675 = vpack.c.b16 %v595, %v593
        %v676 = vpack.c.b16 %v598, %v596
        %v677 = vpack.c.b16 %v599, %v597
        %v678 = vpack.c.b16 %v602, %v600
        %v679 = vpack.c.b16 %v603, %v601
        %v680 = vpack.c.b16 %v606, %v604
        %v681 = vpack.c.b16 %v607, %v605
        %v682 = vpack.c.b16 %v610, %v608
        %v683 = vpack.c.b16 %v611, %v609
        %v684 = vpack.c.b16 %v614, %v612
        %v685 = vpack.c.b16 %v615, %v613
        %v686 = vpack.c.b16 %v618, %v616
        %v687 = vpack.c.b16 %v619, %v617
        %v688 = vpack.c.b16 %v622, %v620
        %v689 = vpack.c.b16 %v623, %v621
        %v690 = vpack.c.b16 %v626, %v624
        %v691 = vpack.c.b16 %v627, %v625
        %756 = vmatprep.subr.bf16.mxu0 %v643
        %757 = vmatpush1.bf16.msra.mxu0 %v642
        %758 = vmatprep.subr.bf16.mxu0 %v641
        %759 = vmatpush1.bf16.msra.mxu0 %v640
        %760 = vmatprep.subr.bf16.mxu0 %v639
        %761 = vmatpush1.bf16.msra.mxu0 %v638
        %762 = vmatprep.subr.bf16.mxu0 %v637
        %763 = vmatpush1.bf16.msra.mxu0 %v636
        %764 = vmatprep.subr.bf16.mxu0 %v635
        %765 = vmatpush1.bf16.msra.mxu0 %v634
        %766 = vmatprep.subr.bf16.mxu0 %v633
        %767 = vmatpush1.bf16.msra.mxu0 %v632
        %768 = vmatprep.subr.bf16.mxu0 %v631
        %769 = vmatpush1.bf16.msra.mxu0 %v630
        %770 = vmatprep.subr.bf16.mxu0 %v629
        %771 = vmatpush1.bf16.msra.mxu0 %v628
        %772 = vmatprep.subr.bf16.mxu0 %v659
        %773 = vmatpush2.bf16.msra.mxu0 %v658
        %774 = vmatprep.subr.bf16.mxu0 %v657
        %775 = vmatpush2.bf16.msra.mxu0 %v656
        %776 = vmatprep.subr.bf16.mxu0 %v655
        %777 = vmatpush2.bf16.msra.mxu0 %v654
        %778 = vmatprep.subr.bf16.mxu0 %v653
        %779 = vmatpush2.bf16.msra.mxu0 %v652
        %780 = vmatprep.subr.bf16.mxu0 %v651
        %781 = vmatpush2.bf16.msra.mxu0 %v650
        %782 = vmatprep.subr.bf16.mxu0 %v649
        %783 = vmatpush2.bf16.msra.mxu0 %v648
        %784 = vmatprep.subr.bf16.mxu0 %v647
        %785 = vmatpush2.bf16.msra.mxu0 %v646
        %786 = vmatprep.subr.bf16.mxu0 %v645
        %787 = vmatpush2.bf16.msra.mxu0 %v644
        %788 = vmatprep.mubr.bf16.mxu0 %v421
        %789 = vmatmul.mubr.bf16.gmra.mxu0 %v420
        %v790 = vpop.f32.mrf.mxu0
        %v791 = vadd.f32 0.0, %v790
        %v792 = vpop.f32.mrf.mxu0
        %v793 = vadd.f32 0.0, %v792
        %v794 = vpop.f32.mrf.mxu0
        %v795 = vadd.f32 0.0, %v794
        %v796 = vpop.f32.mrf.mxu0
        %v797 = vadd.f32 0.0, %v796
        %798 = vmatprep.mubr.bf16.mxu0 %v425
        %799 = vmatmul.mubr.bf16.gmra.mxu0 %v424
        %v800 = vpop.f32.mrf.mxu0
        %v801 = vadd.f32 0.0, %v800
        %v802 = vpop.f32.mrf.mxu0
        %v803 = vadd.f32 0.0, %v802
        %v804 = vpop.f32.mrf.mxu0
        %v805 = vadd.f32 0.0, %v804
        %v806 = vpop.f32.mrf.mxu0
        %v807 = vadd.f32 0.0, %v806
        %808 = vdwg.mxu0
        %809 = vmatprep.subr.bf16.mxu0 %v675
        %810 = vmatpush1.bf16.msra.mxu0 %v674
        %811 = vmatprep.subr.bf16.mxu0 %v673
        %812 = vmatpush1.bf16.msra.mxu0 %v672
        %813 = vmatprep.subr.bf16.mxu0 %v671
        %814 = vmatpush1.bf16.msra.mxu0 %v670
        %815 = vmatprep.subr.bf16.mxu0 %v669
        %816 = vmatpush1.bf16.msra.mxu0 %v668
        %817 = vmatprep.subr.bf16.mxu0 %v667
        %818 = vmatpush1.bf16.msra.mxu0 %v666
        %819 = vmatprep.subr.bf16.mxu0 %v665
        %820 = vmatpush1.bf16.msra.mxu0 %v664
        %821 = vmatprep.subr.bf16.mxu0 %v663
        %822 = vmatpush1.bf16.msra.mxu0 %v662
        %823 = vmatprep.subr.bf16.mxu0 %v661
        %824 = vmatpush1.bf16.msra.mxu0 %v660
        %825 = vmatprep.subr.bf16.mxu0 %v691
        %826 = vmatpush2.bf16.msra.mxu0 %v690
        %827 = vmatprep.subr.bf16.mxu0 %v689
        %828 = vmatpush2.bf16.msra.mxu0 %v688
        %829 = vmatprep.subr.bf16.mxu0 %v687
        %830 = vmatpush2.bf16.msra.mxu0 %v686
        %831 = vmatprep.subr.bf16.mxu0 %v685
        %832 = vmatpush2.bf16.msra.mxu0 %v684
        %833 = vmatprep.subr.bf16.mxu0 %v683
        %834 = vmatpush2.bf16.msra.mxu0 %v682
        %835 = vmatprep.subr.bf16.mxu0 %v681
        %836 = vmatpush2.bf16.msra.mxu0 %v680
        %837 = vmatprep.subr.bf16.mxu0 %v679
        %838 = vmatpush2.bf16.msra.mxu0 %v678
        %839 = vmatprep.subr.bf16.mxu0 %v677
        %840 = vmatpush2.bf16.msra.mxu0 %v676
        %841 = vmatprep.mubr.bf16.mxu0 %v423
        %842 = vmatmul.mubr.bf16.gmra.mxu0 %v422
        %v843 = vpop.f32.mrf.mxu0
        %v844 = vadd.f32 %v791, %v843
        %v845 = vpop.f32.mrf.mxu0
        %v846 = vadd.f32 %v793, %v845
        %v847 = vpop.f32.mrf.mxu0
        %v848 = vadd.f32 %v795, %v847
        %v849 = vpop.f32.mrf.mxu0
        %v850 = vadd.f32 %v797, %v849
        %851 = vmatprep.mubr.bf16.mxu0 %v427
        %852 = vmatmul.mubr.bf16.gmra.mxu0 %v426
        %v853 = vpop.f32.mrf.mxu0
        %v854 = vadd.f32 %v801, %v853
        %v855 = vpop.f32.mrf.mxu0
        %v856 = vadd.f32 %v803, %v855
        %v857 = vpop.f32.mrf.mxu0
        %v858 = vadd.f32 %v805, %v857
        %v859 = vpop.f32.mrf.mxu0
        %v860 = vadd.f32 %v807, %v859
        %861 = vdwg.mxu0
        %v862 = vadd.f32 %v316, %v844
        %v863 = vadd.f32 %v317, %v846
        %v864 = vadd.f32 %v318, %v848
        %v865 = vadd.f32 %v319, %v850
        %v866 = vadd.f32 %v320, %v854
        %v867 = vadd.f32 %v321, %v856
        %v868 = vadd.f32 %v322, %v858
        %v869 = vadd.f32 %v323, %v860
        %870 = vst [vmem:[#allocation2] sm:$0xff] %v862
        %871 = vst [vmem:[#allocation2 + $0x8] sm:$0xff] %v863
        %872 = vst [vmem:[#allocation2 + $0x10] sm:$0xff] %v864
        %873 = vst [vmem:[#allocation2 + $0x18] sm:$0xff] %v865
        %874 = vst [vmem:[#allocation2 + $0x20] sm:$0xff] %v866
        %875 = vst [vmem:[#allocation2 + $0x28] sm:$0xff] %v867
        %876 = vst [vmem:[#allocation2 + $0x30] sm:$0xff] %v868
        %877 = vst [vmem:[#allocation2 + $0x38] sm:$0xff] %v869
        %p878 = scmp.eq.s32.totalorder %s21, 2
        // Predicated region
        $region56: #{discriminator_forward.9} parent=46 // pred_check
          %p879 = pneg %p878
        $region57: #{discriminator_forward.9} parent=46 // pred_check_branch
          %881 = sbr.rel (%p879) target = $region59
        $region58: #{discriminator_forward.9} parent=46 // pred_region
          %v882 = vld [vmem:[#allocation2] sm:$0xff]
          %v883 = vld [vmem:[#allocation2 + $0x8] sm:$0xff]
          %v884 = vld [vmem:[#allocation2 + $0x10] sm:$0xff]
          %v885 = vld [vmem:[#allocation2 + $0x18] sm:$0xff]
          %v886 = vld [vmem:[#allocation2 + $0x20] sm:$0xff]
          %v887 = vld [vmem:[#allocation2 + $0x28] sm:$0xff]
          %v888 = vld [vmem:[#allocation2 + $0x30] sm:$0xff]
          %v889 = vld [vmem:[#allocation2 + $0x38] sm:$0xff]
          %890 = vst [vmem:[%s292] sm:$0xff] %v882
          %891 = vst [vmem:[%s292 + $0x8] sm:$0xff] %v883
          %892 = vst [vmem:[%s292 + $0x10] sm:$0xff] %v884
          %893 = vst [vmem:[%s292 + $0x18] sm:$0xff] %v885
          %894 = vst [vmem:[%s292 + $0x20] sm:$0xff] %v886
          %895 = vst [vmem:[%s292 + $0x28] sm:$0xff] %v887
          %896 = vst [vmem:[%s292 + $0x30] sm:$0xff] %v888
          %897 = vst [vmem:[%s292 + $0x38] sm:$0xff] %v889
          %v898 = vadd.f32 %v882, %v884
          %v899 = vadd.f32 %v898, %v886
          %v900 = vadd.f32 %v899, %v888
          %v901 = vrot.slane %v900, 4
          %v902 = vadd.f32 %v900, %v901
          %v903 = vrot.slane %v902, 2
          %v904 = vadd.f32 %v902, %v903
          %v905 = vrot.slane %v904, 1
          %v906 = vadd.f32 %v904, %v905
          %v907 = vadd.f32 %v883, %v885
          %v908 = vadd.f32 %v907, %v887
          %v909 = vadd.f32 %v908, %v889
          %v910 = vrot.slane %v909, 4
          %v911 = vadd.f32 %v909, %v910
          %v912 = vrot.slane %v911, 2
          %v913 = vadd.f32 %v911, %v912
          %v914 = vrot.slane %v913, 1
          %v915 = vadd.f32 %v913, %v914
          %v916 = vmul.f32 %v882, %v882
          %v917 = vmul.f32 %v883, %v883
          %v918 = vmul.f32 %v884, %v884
          %v919 = vmul.f32 %v885, %v885
          %v920 = vmul.f32 %v886, %v886
          %v921 = vmul.f32 %v887, %v887
          %v922 = vmul.f32 %v888, %v888
          %v923 = vmul.f32 %v889, %v889
          %v924 = vadd.f32 %v916, %v918
          %v925 = vadd.f32 %v924, %v920
          %v926 = vadd.f32 %v925, %v922
          %v927 = vrot.slane %v926, 4
          %v928 = vadd.f32 %v926, %v927
          %v929 = vrot.slane %v928, 2
          %v930 = vadd.f32 %v928, %v929
          %v931 = vrot.slane %v930, 1
          %v932 = vadd.f32 %v930, %v931
          %v933 = vadd.f32 %v917, %v919
          %v934 = vadd.f32 %v933, %v921
          %v935 = vadd.f32 %v934, %v923
          %v936 = vrot.slane %v935, 4
          %v937 = vadd.f32 %v935, %v936
          %v938 = vrot.slane %v937, 2
          %v939 = vadd.f32 %v937, %v938
          %v940 = vrot.slane %v939, 1
          %v941 = vadd.f32 %v939, %v940
          %942 = vst [vmem:[%s298] sm:$0xff] %v906
          %943 = vst [vmem:[%s298 + $0x8] sm:$0xff] %v915
          %944 = vst [vmem:[%s303] sm:$0xff] %v932
          %945 = vst [vmem:[%s303 + $0x8] sm:$0xff] %v941
        $region59: #{discriminator_forward.9} parent=46 // pred_fallthru
          _
        %s946 = smul.u32 4, %s20
        %p947 = scmp.lt.s32.totalorder %s946, 3
        %s948 = scalar_select %p947, %s946, 3
        %s949 = smul.addr %s948, 2
        %s950 = smul.addr %s949, 8
        %s951 = scalar_lea.vmem %s2, %s950
        %p952 = scmp.lt.s32.totalorder %s20, 0
        %s953 = scalar_select %p952, %s20, 0
        %s954 = smul.addr %s953, 2
        %s955 = smul.addr %s954, 8
        %s956 = scalar_lea.vmem %s3, %s955
        %p957 = scmp.lt.s32.totalorder %s20, 0
        %s958 = scalar_select %p957, %s20, 0
        %s959 = smul.addr %s958, 2
        %s960 = smul.addr %s959, 8
        %s961 = scalar_lea.vmem %s4, %s960
        // Predicated region
        $region60: #{discriminator_forward.9} parent=46 // pred_check
          %p962 = pneg %p100
        $region61: #{discriminator_forward.9} parent=46 // pred_check_branch
          %964 = sbr.rel (%p962) target = $region63
        $region62: #{discriminator_forward.9} parent=46 // pred_region
          %s965 = smul.u32 4, %s20
        $region63: #{discriminator_forward.9} parent=46 // pred_fallthru
          _
        // Predicated region
        $region64: #{discriminator_forward.9} parent=46 // pred_check
          %p966 = pneg %p126
        $region65: #{discriminator_forward.9} parent=46 // pred_check_branch
          %968 = sbr.rel (%p966) target = $region67
        $region66: #{discriminator_forward.9} parent=46 // pred_region
          _
        $region67: #{discriminator_forward.9} parent=46 // pred_fallthru
          _
        // Predicated region
        $region68: #{discriminator_forward.9} parent=46 // pred_check
          %p969 = pneg %p152
        $region69: #{discriminator_forward.9} parent=46 // pred_check_branch
          %971 = sbr.rel (%p969) target = $region71
        $region70: #{discriminator_forward.9} parent=46 // pred_region
          _
        $region71: #{discriminator_forward.9} parent=46 // pred_fallthru
          _
        // Predicated region
        $region72: #{discriminator_forward.9} parent=46 // pred_check
          %p972 = pneg %p100
        $region73: #{discriminator_forward.9} parent=46 // pred_check_branch
          %974 = sbr.rel (%p972) target = $region75
        $region74: #{discriminator_forward.9} parent=46 // pred_region
          %s975 = smul.u32 4, %s20
          %p976 = scmp.lt.s32.totalorder %s975, 3
          %s977 = scalar_select %p976, %s975, 3
          %s978 = smul.addr %s977, 2
          %s979 = smul.addr %s978, 8
          %s980 = scalar_lea.vmem %s2, %s979
        $region75: #{discriminator_forward.9} parent=46 // pred_fallthru
          _
        // Predicated region
        $region76: #{discriminator_forward.9} parent=46 // pred_check
          %p981 = pneg %p126
        $region77: #{discriminator_forward.9} parent=46 // pred_check_branch
          %983 = sbr.rel (%p981) target = $region79
        $region78: #{discriminator_forward.9} parent=46 // pred_region
          %p984 = scmp.lt.s32.totalorder %s20, 0
          %s985 = scalar_select %p984, %s20, 0
          %s986 = smul.addr %s985, 2
          %s987 = smul.addr %s986, 8
          %s988 = scalar_lea.vmem %s3, %s987
        $region79: #{discriminator_forward.9} parent=46 // pred_fallthru
          _
        // Predicated region
        $region80: #{discriminator_forward.9} parent=46 // pred_check
          %p989 = pneg %p152
        $region81: #{discriminator_forward.9} parent=46 // pred_check_branch
          %991 = sbr.rel (%p989) target = $region83
        $region82: #{discriminator_forward.9} parent=46 // pred_region
          %p992 = scmp.lt.s32.totalorder %s20, 0
          %s993 = scalar_select %p992, %s20, 0
          %s994 = smul.addr %s993, 2
          %s995 = smul.addr %s994, 8
          %s996 = scalar_lea.vmem %s4, %s995
        $region83: #{discriminator_forward.9} parent=46 // pred_fallthru
          _
      $region47: #{discriminator_forward.9} parent=5 // pred_fallthru
        _
      %p997 = scmp.le.s32.totalorder 2, %s11
      // Predicated region
      $region84: #{discriminator_forward.9} parent=5 // pred_check
        %p998 = pneg %p997
      $region85: #{discriminator_forward.9} parent=5 // pred_check_branch
        %1000 = sbr.rel (%p998) target = $region87
      $region86: #{discriminator_forward.9} parent=5 // pred_region
        %s1001 = ssub.s32 %s11, 2
      $region87: #{discriminator_forward.9} parent=5 // pred_fallthru
        _
    $region6: #{discriminator_forward.9} parent=1 // loop_footer
      %s15 = sadd.s32 1, %s11
    $region7: #{discriminator_forward.9} parent=1 // loop_footer_branch
      %10 = sbr.rel target = $region3
    $region8: #{discriminator_forward.9} parent=1 // loop_exit
      _

// kernel: discriminator_forward.10
$region0: #{discriminator_forward.10}
  #allocation0 [shape = 'u32[]', space=smem, size = 0x4, offset = 0x4, fixed_abs, tag = 'smem constant byte address 0x4 - core index']
  #allocation1 [shape = 'u32[144,128]{1,0:T(1,128)}', space=vmem, size = 0x12000, scoped, tag = 'internal scratch']
  %s0 = inlined_call_operand.vmem [shape: f32[32,256], index: 0, kind: input, shape index: {}]
  %s1 = inlined_call_operand.vmem [shape: f32[1,256], index: 1, kind: input, shape index: {}]
  %s2 = inlined_call_operand.vmem [shape: f32[1,256], index: 2, kind: input, shape index: {}]
  %s3 = inlined_call_operand.vmem [shape: bf16[32,256], index: 3, kind: output, shape index: {}]
  %s4 = sld [smem:[#allocation0]]
  $region22: #{discriminator_forward.10} parent=0
    _
  %s6 = ssub.s32 1, %s4
  %s7 = scalar_select 0, %s6, %s4
  // Predicated region
  $region2: #{discriminator_forward.10} parent=0 // pred_check
    _
  $region3: #{discriminator_forward.10} parent=0 // pred_check_branch
    %9 = sbr.rel (0) target = $region5
  $region4: #{discriminator_forward.10} parent=0 // pred_region
    _
  $region5: #{discriminator_forward.10} parent=0 // pred_fallthru
    _
  // Predicated region
  $region6: #{discriminator_forward.10} parent=0 // pred_check
    _
  $region7: #{discriminator_forward.10} parent=0 // pred_check_branch
    %11 = sbr.rel (0) target = $region9
  $region8: #{discriminator_forward.10} parent=0 // pred_region
    _
  $region9: #{discriminator_forward.10} parent=0 // pred_fallthru
    _
  // Predicated region
  $region10: #{discriminator_forward.10} parent=0 // pred_check
    _
  $region11: #{discriminator_forward.10} parent=0 // pred_check_branch
    %13 = sbr.rel (0) target = $region13
  $region12: #{discriminator_forward.10} parent=0 // pred_region
    _
  $region13: #{discriminator_forward.10} parent=0 // pred_fallthru
    _
  %v14 = vld [vmem:[%s0] sm:$0xff]
  %v15 = vld [vmem:[%s0 + $0x8] sm:$0xff]
  %v16 = vld [vmem:[%s0 + $0x10] sm:$0xff]
  %v17 = vld [vmem:[%s0 + $0x18] sm:$0xff]
  %v18 = vld [vmem:[%s0 + $0x20] sm:$0xff]
  %v19 = vld [vmem:[%s0 + $0x28] sm:$0xff]
  %v20 = vld [vmem:[%s0 + $0x30] sm:$0xff]
  %v21 = vld [vmem:[%s0 + $0x38] sm:$0xff]
  %v22 = vld [vmem:[%s1] sm:$0x3]
  %v24 = vlaneseq
  %v25 = vshrl.u32 %v24, 7
  %v26 = vsub.s32 0, %v25
  %v27 = vrot.slane %v22, %v26
  %v28 = vlaneseq
  %v29 = vshrl.u32 %v28, 7
  %v30 = vsub.s32 1, %v29
  %v31 = vrot.slane %v22, %v30
  %v34 = vmul.f32 %v14, %v27
  %v35 = vmul.f32 %v15, %v31
  %v36 = vmul.f32 %v16, %v27
  %v37 = vmul.f32 %v17, %v31
  %v38 = vmul.f32 %v18, %v27
  %v39 = vmul.f32 %v19, %v31
  %v40 = vmul.f32 %v20, %v27
  %v41 = vmul.f32 %v21, %v31
  %v42 = vld [vmem:[%s2] sm:$0x3]
  %v44 = vlaneseq
  %v45 = vshrl.u32 %v44, 7
  %v46 = vsub.s32 0, %v45
  %v47 = vrot.slane %v42, %v46
  %v48 = vlaneseq
  %v49 = vshrl.u32 %v48, 7
  %v50 = vsub.s32 1, %v49
  %v51 = vrot.slane %v42, %v50
  %v54 = vadd.f32 %v34, %v47
  %v55 = vadd.f32 %v35, %v51
  %v56 = vadd.f32 %v36, %v47
  %v57 = vadd.f32 %v37, %v51
  %v58 = vadd.f32 %v38, %v47
  %v59 = vadd.f32 %v39, %v51
  %v60 = vadd.f32 %v40, %v47
  %v61 = vadd.f32 %v41, %v51
  %v62 = vmul.f32 %v54, 0.2
  %v63 = vmul.f32 %v55, 0.2
  %v64 = vmul.f32 %v56, 0.2
  %v65 = vmul.f32 %v57, 0.2
  %v66 = vmul.f32 %v58, 0.2
  %v67 = vmul.f32 %v59, 0.2
  %v68 = vmul.f32 %v60, 0.2
  %v69 = vmul.f32 %v61, 0.2
  %v70 = vmax.f32 %v54, %v62
  %v71 = vmax.f32 %v55, %v63
  %v72 = vmax.f32 %v56, %v64
  %v73 = vmax.f32 %v57, %v65
  %v74 = vmax.f32 %v58, %v66
  %v75 = vmax.f32 %v59, %v67
  %v76 = vmax.f32 %v60, %v68
  %v77 = vmax.f32 %v61, %v69
  %v78 = vpack.c.bf16 %v72, %v70
  %v79 = vpack.c.bf16 %v73, %v71
  %v80 = vpack.c.bf16 %v76, %v74
  %v81 = vpack.c.bf16 %v77, %v75
  %v86 = vunpack.c.l.b16 %v78
  %v87 = vunpack.c.l.b16 %v79
  %v88 = vunpack.c.h.b16 %v78
  %v89 = vunpack.c.h.b16 %v79
  %v90 = vunpack.c.l.b16 %v80
  %v91 = vunpack.c.l.b16 %v81
  %v92 = vunpack.c.h.b16 %v80
  %v93 = vunpack.c.h.b16 %v81
  %v94 = vpack.c.b16 %v87, %v86
  %v95 = vpack.c.b16 %v89, %v88
  %v96 = vpack.c.b16 %v91, %v90
  %v97 = vpack.c.b16 %v93, %v92
  %102 = vst [vmem:[%s3] sm:$0xff] %v94
  %103 = vst [vmem:[%s3 + $0x8] sm:$0xff] %v95
  %104 = vst [vmem:[%s3 + $0x10] sm:$0xff] %v96
  %105 = vst [vmem:[%s3 + $0x18] sm:$0xff] %v97
  // Predicated region
  $region14: #{discriminator_forward.10} parent=0 // pred_check
    _
  $region15: #{discriminator_forward.10} parent=0 // pred_check_branch
    %107 = sbr.rel (0) target = $region17
  $region16: #{discriminator_forward.10} parent=0 // pred_region
    _
  $region17: #{discriminator_forward.10} parent=0 // pred_fallthru
    _
  // Predicated region
  $region18: #{discriminator_forward.10} parent=0 // pred_check
    _
  $region19: #{discriminator_forward.10} parent=0 // pred_check_branch
    %109 = sbr.rel (0) target = $region21
  $region20: #{discriminator_forward.10} parent=0 // pred_region
    _
  $region21: #{discriminator_forward.10} parent=0 // pred_fallthru
    _

// kernel: discriminator_forward.11
$region0: #{discriminator_forward.11}
  #allocation0 [shape = 'u32[]', space=smem, size = 0x4, offset = 0x4, fixed_abs, tag = 'smem constant byte address 0x4 - core index']
  #allocation1 [shape = 'u32[144,128]{1,0:T(1,128)}', space=vmem, size = 0x12000, scoped, tag = 'internal scratch']
  #allocation2 [shape = 'f32[16,128]{1,0:T(8,128)}', space=vmem, size = 0x2000, scoped, tag = 'scratch operand']
  %s0 = inlined_call_operand.vmem [shape: bf16[16,2560], index: 0, kind: input, shape index: {}]
  %s1 = inlined_call_operand.vmem [shape: bf16[2560,128], index: 1, kind: input, shape index: {}]
  %s2 = inlined_call_operand.vmem [shape: f32[16,128], index: 2, kind: output, shape index: {}]
  %s3 = sld [smem:[#allocation0]]
  $region72: #{discriminator_forward.11} parent=0
    _
  %s5 = ssub.s32 1, %s3
  %s6 = scalar_select 0, %s5, %s3
  $region1: #{discriminator_forward.11} parent=0
    #allocation3 [shape = 'u8[32768]{0}', space=vmem, size = 0x8000, scoped, tag = 'input window, operand 0']
    loop: start=0, step=1, limit=7
    $region2: #{discriminator_forward.11} parent=1 // loop_pre_header
      _
    $region3: #{discriminator_forward.11} parent=1 // loop_header
      %s8 = sphi 0, %s12
      %p9 = scmp.ge.s32.totalorder %s8, 7
      %s15 = sphi 0, %s27
      %s16 = sphi 0, %s23
      %s17 = sphi 0, %s15
      %s18 = sphi 0, %s16
      %s19 = sphi 0, %s17
      %s20 = sphi 0, %s18
      %s32 = sphi 0, %s34
      %s35 = sphi 0, %s32
      %s36 = sphi 0, %s35
      %s52 = sphi 0, %s36
      %s58 = sphi 0, %s60
      %s61 = sphi 0, %s58
      %s62 = sphi 0, %s61
      %s78 = sphi 0, %s62
      %s84 = sphi 0, %s86
      %s87 = sphi 0, %s84
      %s88 = sphi 0, %s87
      %s104 = sphi 0, %s88
    $region4: #{discriminator_forward.11} parent=1 // loop_header_branch
      %11 = sbr.rel (%p9) target = $region8
    $region5: #{discriminator_forward.11} parent=1 // loop_body
      %s13 = ssub.s32 %s8, 1
      %s14 = ssub.s32 %s8, 2
      %s21 = sadd.s32 1, %s16
      %p22 = scmp.ge.s32.totalorder %s21, 5
      %s23 = scalar_select %p22, 0, %s21
      %s24 = sadd.s32 1, %s15
      %s25 = scalar_select %p22, %s24, %s15
      %p26 = scmp.ge.s32.totalorder %s25, 1
      %s27 = scalar_select %p26, 0, %s25
      %s28 = ssub.s32 %s15, %s27
      %s29 = ssub.s32 %s16, %s23
      %s30 = sor.u32 %s28, %s29
      %p31 = scmp.eq.s32.totalorder %s30, 0
      %s33 = sadd.s32 %s32, 1
      %s34 = scalar_select %p31, %s32, %s33
      %p37 = pneg %p31
      %p38 = scmp.eq.s32.totalorder %s8, 4
      %p39 = por %p37, %p38
      %p40 = scmp.ne.s32.totalorder %s32, %s35
      %p41 = scmp.eq.s32.totalorder %s8, 0
      %p42 = por %p40, %p41
      %p43 = scmp.ne.s32.totalorder %s32, %s35
      %p44 = scmp.eq.s32.totalorder %s13, 4
      %p45 = por %p43, %p44
      %p46 = scmp.ne.s32.totalorder %s35, %s36
      %p47 = scmp.eq.s32.totalorder %s13, 0
      %p48 = por %p46, %p47
      %p49 = scmp.ne.s32.totalorder %s35, %s36
      %p50 = scmp.eq.s32.totalorder %s14, 4
      %p51 = por %p49, %p50
      %p53 = scmp.ne.s32.totalorder %s36, %s52
      %p54 = scmp.eq.s32.totalorder %s14, 0
      %p55 = por %p53, %p54
      %s56 = ssub.s32 %s16, %s23
      %p57 = scmp.eq.s32.totalorder %s56, 0
      %s59 = sadd.s32 %s58, 1
      %s60 = scalar_select %p57, %s58, %s59
      %p63 = pneg %p57
      %p64 = scmp.eq.s32.totalorder %s8, 4
      %p65 = por %p63, %p64
      %p66 = scmp.ne.s32.totalorder %s58, %s61
      %p67 = scmp.eq.s32.totalorder %s8, 0
      %p68 = por %p66, %p67
      %p69 = scmp.ne.s32.totalorder %s58, %s61
      %p70 = scmp.eq.s32.totalorder %s13, 4
      %p71 = por %p69, %p70
      %p72 = scmp.ne.s32.totalorder %s61, %s62
      %p73 = scmp.eq.s32.totalorder %s13, 0
      %p74 = por %p72, %p73
      %p75 = scmp.ne.s32.totalorder %s61, %s62
      %p76 = scmp.eq.s32.totalorder %s14, 4
      %p77 = por %p75, %p76
      %p79 = scmp.ne.s32.totalorder %s62, %s78
      %p80 = scmp.eq.s32.totalorder %s14, 0
      %p81 = por %p79, %p80
      %s82 = ssub.s32 %s15, %s27
      %p83 = scmp.eq.s32.totalorder %s82, 0
      %s85 = sadd.s32 %s84, 1
      %s86 = scalar_select %p83, %s84, %s85
      %p89 = pneg %p83
      %p90 = scmp.eq.s32.totalorder %s8, 4
      %p91 = por %p89, %p90
      %p92 = scmp.ne.s32.totalorder %s84, %s87
      %p93 = scmp.eq.s32.totalorder %s8, 0
      %p94 = por %p92, %p93
      %p95 = scmp.ne.s32.totalorder %s84, %s87
      %p96 = scmp.eq.s32.totalorder %s13, 4
      %p97 = por %p95, %p96
      %p98 = scmp.ne.s32.totalorder %s87, %s88
      %p99 = scmp.eq.s32.totalorder %s13, 0
      %p100 = por %p98, %p99
      %p101 = scmp.ne.s32.totalorder %s87, %s88
      %p102 = scmp.eq.s32.totalorder %s14, 4
      %p103 = por %p101, %p102
      %p105 = scmp.ne.s32.totalorder %s88, %s104
      %p106 = scmp.eq.s32.totalorder %s14, 0
      %p107 = por %p105, %p106
      %p108 = scmp.le.s32.totalorder 1, %s8
      %p109 = scmp.lt.s32.totalorder %s8, 6
      %p110 = pnand %p108, %p109
      %p111 = pneg %p110
      // Predicated region
      $region9: #{discriminator_forward.11} parent=5 // pred_check
        _
      $region10: #{discriminator_forward.11} parent=5 // pred_check_branch
        %113 = sbr.rel (%p110) target = $region12
      $region11: #{discriminator_forward.11} parent=5 // pred_region
        %s114 = ssub.s32 %s8, 1
      $region12: #{discriminator_forward.11} parent=5 // pred_fallthru
        _
      %p115 = scmp.lt.s32.totalorder %s8, 5
      // Predicated region
      $region13: #{discriminator_forward.11} parent=5 // pred_check
        %p116 = pneg %p115
      $region14: #{discriminator_forward.11} parent=5 // pred_check_branch
        %118 = sbr.rel (%p116) target = $region16
      $region15: #{discriminator_forward.11} parent=5 // pred_region
        // Predicated region
        $region17: #{discriminator_forward.11} parent=15 // pred_check
          %p119 = pneg %p42
        $region18: #{discriminator_forward.11} parent=15 // pred_check_branch
          %121 = sbr.rel (%p119) target = $region20
        $region19: #{discriminator_forward.11} parent=15 // pred_region
          %s122 = sand.u32 %s32, 1
          %s123 = sand.u32 %s32, 1
          %s124 = smul.addr %s123, 32
          %s125 = scalar_lea.vmem [#allocation3], %s124
          %s126 = smul.u32 2, %s15
          %s127 = smul.u32 4, %s16
          %s128 = smul.addr %s126, 20
          %s129 = sadd.s32 %s127, %s128
          %s130 = smul.addr %s129, 4
          %s131 = scalar_lea.vmem %s0, %s130
          // Predicated region
          $region21: #{discriminator_forward.11} parent=19 // pred_check
            _
          $region22: #{discriminator_forward.11} parent=19 // pred_check_branch
            %133 = sbr.rel (0) target = $region24
          $region23: #{discriminator_forward.11} parent=19 // pred_region
            // Predicated region
            $region25: #{discriminator_forward.11} parent=23 // pred_check
              _
            $region26: #{discriminator_forward.11} parent=23 // pred_check_branch
              %135 = sbr.rel (0) target = $region28
            $region27: #{discriminator_forward.11} parent=23 // pred_region
              loop: start=0, step=1, limit=1
              $region29: #{discriminator_forward.11} parent=27 // loop_pre_header
                _
              $region30: #{discriminator_forward.11} parent=27 // loop_header
                %s137 = sphi 0, %s141
                %p138 = scmp.ge.s32.totalorder %s137, 1
                %s142 = sphi %s131, %s131
                %s143 = sphi %s125, %s125
              $region31: #{discriminator_forward.11} parent=27 // loop_header_branch
                %140 = sbr.rel (%p138) target = $region35
              $region32: #{discriminator_forward.11} parent=27 // loop_body
                %v144 = vld [vmem:[%s142] sm:$0xff]
                %145 = vst [vmem:[%s143] sm:$0xff] %v144
                %v146 = vld [vmem:[%s142 + $0x8] sm:$0xff]
                %147 = vst [vmem:[%s143 + $0x8] sm:$0xff] %v146
                %v148 = vld [vmem:[%s142 + $0x50] sm:$0xff]
                %149 = vst [vmem:[%s143 + $0x10] sm:$0xff] %v148
                %v150 = vld [vmem:[%s142 + $0x58] sm:$0xff]
                %151 = vst [vmem:[%s143 + $0x18] sm:$0xff] %v150
              $region33: #{discriminator_forward.11} parent=27 // loop_footer
                %s141 = sadd.s32 1, %s137
              $region34: #{discriminator_forward.11} parent=27 // loop_footer_branch
                %136 = sbr.rel target = $region30
              $region35: #{discriminator_forward.11} parent=27 // loop_exit
                _
            $region28: #{discriminator_forward.11} parent=23 // pred_fallthru
              _
            // Predicated region
            $region36: #{discriminator_forward.11} parent=23 // pred_check
              _
            $region37: #{discriminator_forward.11} parent=23 // pred_check_branch
              %153 = sbr.rel target = $region39
            $region38: #{discriminator_forward.11} parent=23 // pred_region
              _
            $region39: #{discriminator_forward.11} parent=23 // pred_fallthru
              _
          $region24: #{discriminator_forward.11} parent=19 // pred_fallthru
            _
          %154 = vnop
        $region20: #{discriminator_forward.11} parent=15 // pred_fallthru
          _
        // Predicated region
        $region40: #{discriminator_forward.11} parent=15 // pred_check
          %p155 = pneg %p68
        $region41: #{discriminator_forward.11} parent=15 // pred_check_branch
          %157 = sbr.rel (%p155) target = $region43
        $region42: #{discriminator_forward.11} parent=15 // pred_region
          %s158 = smul.u32 64, %s16
          %p159 = scmp.lt.s32.totalorder %s158, 319
          %s160 = scalar_select %p159, %s158, 319
          %s161 = smul.addr %s160, 4
          %s162 = scalar_lea.vmem %s1, %s161
          %s163 = smul.u32 64, %s16
        $region43: #{discriminator_forward.11} parent=15 // pred_fallthru
          _
      $region16: #{discriminator_forward.11} parent=5 // pred_fallthru
        _
      %p164 = scmp.le.s32.totalorder 1, %s8
      %p165 = scmp.lt.s32.totalorder %s8, 6
      %p166 = pnand %p164, %p165
      %p167 = pneg %p166
      // Predicated region
      $region44: #{discriminator_forward.11} parent=5 // pred_check
        _
      $region45: #{discriminator_forward.11} parent=5 // pred_check_branch
        %169 = sbr.rel (%p166) target = $region47
      $region46: #{discriminator_forward.11} parent=5 // pred_region
        %s170 = ssub.s32 %s8, 1
        %s171 = sand.u32 %s35, 1
        %s172 = sand.u32 %s35, 1
        %s173 = smul.addr %s172, 32
        %s174 = scalar_lea.vmem [#allocation3], %s173
        // Predicated region
        $region48: #{discriminator_forward.11} parent=46 // pred_check
          %p175 = pneg %p48
        $region49: #{discriminator_forward.11} parent=46 // pred_check_branch
          %177 = sbr.rel (%p175) target = $region51
        $region50: #{discriminator_forward.11} parent=46 // pred_region
          _
        $region51: #{discriminator_forward.11} parent=46 // pred_fallthru
          _
        %s178 = sand.u32 %s35, 1
        %s179 = sand.u32 %s35, 1
        %s180 = smul.addr %s179, 32
        %s181 = scalar_lea.vmem [#allocation3], %s180
        %p182 = pneg %p48
        %p183 = pneg %p45
        %s184 = smul.u32 64, %s18
        %p185 = scmp.lt.s32.totalorder %s184, 319
        %s186 = scalar_select %p185, %s184, 319
        %s187 = smul.addr %s186, 4
        %s188 = scalar_lea.vmem %s1, %s187
        %p189 = pneg %p74
        %p190 = pneg %p71
        %p191 = pneg %p100
        %p192 = pneg %p97
        %s193 = smul.u32 2, %s17
        %p194 = scmp.lt.s32.totalorder %s193, 1
        %s195 = scalar_select %p194, %s193, 1
        %s196 = smul.addr %s195, 8
        %s197 = scalar_lea.vmem %s2, %s196
        %s198 = smul.u32 2, %s17
        %s199 = smul.u32 4, %s18
        %s200 = smul.u32 64, %s18
        %p201 = scmp.lt.s32.totalorder %s200, 319
        %s202 = scalar_select %p201, %s200, 319
        %s203 = smul.addr %s202, 4
        %s204 = scalar_lea.vmem %s1, %s203
        %s205 = smul.u32 64, %s18
        %s206 = smul.u32 2, %s17
        %p207 = scmp.lt.s32.totalorder %s206, 1
        %s208 = scalar_select %p207, %s206, 1
        %s209 = smul.addr %s208, 8
        %s210 = scalar_lea.vmem %s2, %s209
        %s211 = smul.u32 2, %s17
        %p213 = scmp.eq.s32.totalorder %s18, 0
        // Predicated region
        $region52: #{discriminator_forward.11} parent=46 // pred_check
          %p214 = pneg %p213
        $region53: #{discriminator_forward.11} parent=46 // pred_check_branch
          %216 = sbr.rel (%p214) target = $region55
        $region54: #{discriminator_forward.11} parent=46 // pred_region
          %217 = vst [vmem:[#allocation2] sm:$0xff] 0.0
          %218 = vst [vmem:[#allocation2 + $0x8] sm:$0xff] 0.0
        $region55: #{discriminator_forward.11} parent=46 // pred_fallthru
          _
        %v219 = vld [vmem:[#allocation2] sm:$0xff]
        %v220 = vld [vmem:[#allocation2 + $0x8] sm:$0xff]
        %v221 = vld [vmem:[%s174] sm:$0xff]
        %v222 = vld [vmem:[%s174 + $0x8] sm:$0xff]
        %v223 = vld [vmem:[%s174 + $0x10] sm:$0xff]
        %v224 = vld [vmem:[%s174 + $0x18] sm:$0xff]
        %v225 = vld [vmem:[%s204] sm:$0xf]
        %v226 = vld [vmem:[%s204 + $0x4] sm:$0xf]
        %v227 = vld [vmem:[%s204 + $0x8] sm:$0xf]
        %v228 = vld [vmem:[%s204 + $0xc] sm:$0xf]
        %v229 = vld [vmem:[%s204 + $0x10] sm:$0xf]
        %v230 = vld [vmem:[%s204 + $0x14] sm:$0xf]
        %v231 = vld [vmem:[%s204 + $0x18] sm:$0xf]
        %v232 = vld [vmem:[%s204 + $0x1c] sm:$0xf]
        %v233 = vld [vmem:[%s204 + $0x20] sm:$0xf]
        %v234 = vld [vmem:[%s204 + $0x24] sm:$0xf]
        %v235 = vld [vmem:[%s204 + $0x28] sm:$0xf]
        %v236 = vld [vmem:[%s204 + $0x2c] sm:$0xf]
        %v237 = vld [vmem:[%s204 + $0x30] sm:$0xf]
        %v238 = vld [vmem:[%s204 + $0x34] sm:$0xf]
        %v239 = vld [vmem:[%s204 + $0x38] sm:$0xf]
        %v240 = vld [vmem:[%s204 + $0x3c] sm:$0xf]
        %v241 = vld [vmem:[%s204 + $0x40] sm:$0xf]
        %v242 = vld [vmem:[%s204 + $0x44] sm:$0xf]
        %v243 = vld [vmem:[%s204 + $0x48] sm:$0xf]
        %v244 = vld [vmem:[%s204 + $0x4c] sm:$0xf]
        %v245 = vld [vmem:[%s204 + $0x50] sm:$0xf]
        %v246 = vld [vmem:[%s204 + $0x54] sm:$0xf]
        %v247 = vld [vmem:[%s204 + $0x58] sm:$0xf]
        %v248 = vld [vmem:[%s204 + $0x5c] sm:$0xf]
        %v249 = vld [vmem:[%s204 + $0x60] sm:$0xf]
        %v250 = vld [vmem:[%s204 + $0x64] sm:$0xf]
        %v251 = vld [vmem:[%s204 + $0x68] sm:$0xf]
        %v252 = vld [vmem:[%s204 + $0x6c] sm:$0xf]
        %v253 = vld [vmem:[%s204 + $0x70] sm:$0xf]
        %v254 = vld [vmem:[%s204 + $0x74] sm:$0xf]
        %v255 = vld [vmem:[%s204 + $0x78] sm:$0xf]
        %v256 = vld [vmem:[%s204 + $0x7c] sm:$0xf]
        %v257 = vld [vmem:[%s204 + $0x80] sm:$0xf]
        %v258 = vld [vmem:[%s204 + $0x84] sm:$0xf]
        %v259 = vld [vmem:[%s204 + $0x88] sm:$0xf]
        %v260 = vld [vmem:[%s204 + $0x8c] sm:$0xf]
        %v261 = vld [vmem:[%s204 + $0x90] sm:$0xf]
        %v262 = vld [vmem:[%s204 + $0x94] sm:$0xf]
        %v263 = vld [vmem:[%s204 + $0x98] sm:$0xf]
        %v264 = vld [vmem:[%s204 + $0x9c] sm:$0xf]
        %v265 = vld [vmem:[%s204 + $0xa0] sm:$0xf]
        %v266 = vld [vmem:[%s204 + $0xa4] sm:$0xf]
        %v267 = vld [vmem:[%s204 + $0xa8] sm:$0xf]
        %v268 = vld [vmem:[%s204 + $0xac] sm:$0xf]
        %v269 = vld [vmem:[%s204 + $0xb0] sm:$0xf]
        %v270 = vld [vmem:[%s204 + $0xb4] sm:$0xf]
        %v271 = vld [vmem:[%s204 + $0xb8] sm:$0xf]
        %v272 = vld [vmem:[%s204 + $0xbc] sm:$0xf]
        %v273 = vld [vmem:[%s204 + $0xc0] sm:$0xf]
        %v274 = vld [vmem:[%s204 + $0xc4] sm:$0xf]
        %v275 = vld [vmem:[%s204 + $0xc8] sm:$0xf]
        %v276 = vld [vmem:[%s204 + $0xcc] sm:$0xf]
        %v277 = vld [vmem:[%s204 + $0xd0] sm:$0xf]
        %v278 = vld [vmem:[%s204 + $0xd4] sm:$0xf]
        %v279 = vld [vmem:[%s204 + $0xd8] sm:$0xf]
        %v280 = vld [vmem:[%s204 + $0xdc] sm:$0xf]
        %v281 = vld [vmem:[%s204 + $0xe0] sm:$0xf]
        %v282 = vld [vmem:[%s204 + $0xe4] sm:$0xf]
        %v283 = vld [vmem:[%s204 + $0xe8] sm:$0xf]
        %v284 = vld [vmem:[%s204 + $0xec] sm:$0xf]
        %v285 = vld [vmem:[%s204 + $0xf0] sm:$0xf]
        %v286 = vld [vmem:[%s204 + $0xf4] sm:$0xf]
        %v287 = vld [vmem:[%s204 + $0xf8] sm:$0xf]
        %v288 = vld [vmem:[%s204 + $0xfc] sm:$0xf]
        %v293 = vunpack.c.l.b16 %v221
        %v294 = vunpack.c.h.b16 %v221
        %v295 = vunpack.c.l.b16 %v222
        %v296 = vunpack.c.h.b16 %v222
        %v297 = vunpack.c.l.b16 %v223
        %v298 = vunpack.c.h.b16 %v223
        %v299 = vunpack.c.l.b16 %v224
        %v300 = vunpack.c.h.b16 %v224
        %v301 = vpack.c.b16 %v297, %v293
        %v302 = vpack.c.b16 %v298, %v294
        %v303 = vpack.c.b16 %v299, %v295
        %v304 = vpack.c.b16 %v300, %v296
        %v373 = vunpack.c.l.b16 %v225
        %v374 = vunpack.c.l.b16 %v226
        %v375 = vunpack.c.l.b16 %v227
        %v376 = vunpack.c.l.b16 %v228
        %v377 = vunpack.c.l.b16 %v229
        %v378 = vunpack.c.l.b16 %v230
        %v379 = vunpack.c.l.b16 %v231
        %v380 = vunpack.c.l.b16 %v232
        %v381 = vunpack.c.l.b16 %v233
        %v382 = vunpack.c.l.b16 %v234
        %v383 = vunpack.c.l.b16 %v235
        %v384 = vunpack.c.l.b16 %v236
        %v385 = vunpack.c.l.b16 %v237
        %v386 = vunpack.c.l.b16 %v238
        %v387 = vunpack.c.l.b16 %v239
        %v388 = vunpack.c.l.b16 %v240
        %v389 = vunpack.c.l.b16 %v241
        %v390 = vunpack.c.l.b16 %v242
        %v391 = vunpack.c.l.b16 %v243
        %v392 = vunpack.c.l.b16 %v244
        %v393 = vunpack.c.l.b16 %v245
        %v394 = vunpack.c.l.b16 %v246
        %v395 = vunpack.c.l.b16 %v247
        %v396 = vunpack.c.l.b16 %v248
        %v397 = vunpack.c.l.b16 %v249
        %v398 = vunpack.c.l.b16 %v250
        %v399 = vunpack.c.l.b16 %v251
        %v400 = vunpack.c.l.b16 %v252
        %v401 = vunpack.c.l.b16 %v253
        %v402 = vunpack.c.l.b16 %v254
        %v403 = vunpack.c.l.b16 %v255
        %v404 = vunpack.c.l.b16 %v256
        %v405 = vunpack.c.l.b16 %v257
        %v406 = vunpack.c.l.b16 %v258
        %v407 = vunpack.c.l.b16 %v259
        %v408 = vunpack.c.l.b16 %v260
        %v409 = vunpack.c.l.b16 %v261
        %v410 = vunpack.c.l.b16 %v262
        %v411 = vunpack.c.l.b16 %v263
        %v412 = vunpack.c.l.b16 %v264
        %v413 = vunpack.c.l.b16 %v265
        %v414 = vunpack.c.l.b16 %v266
        %v415 = vunpack.c.l.b16 %v267
        %v416 = vunpack.c.l.b16 %v268
        %v417 = vunpack.c.l.b16 %v269
        %v418 = vunpack.c.l.b16 %v270
        %v419 = vunpack.c.l.b16 %v271
        %v420 = vunpack.c.l.b16 %v272
        %v421 = vunpack.c.l.b16 %v273
        %v422 = vunpack.c.l.b16 %v274
        %v423 = vunpack.c.l.b16 %v275
        %v424 = vunpack.c.l.b16 %v276
        %v425 = vunpack.c.l.b16 %v277
        %v426 = vunpack.c.l.b16 %v278
        %v427 = vunpack.c.l.b16 %v279
        %v428 = vunpack.c.l.b16 %v280
        %v429 = vunpack.c.l.b16 %v281
        %v430 = vunpack.c.l.b16 %v282
        %v431 = vunpack.c.l.b16 %v283
        %v432 = vunpack.c.l.b16 %v284
        %v433 = vunpack.c.l.b16 %v285
        %v434 = vunpack.c.l.b16 %v286
        %v435 = vunpack.c.l.b16 %v287
        %v436 = vunpack.c.l.b16 %v288
        %v437 = vpack.c.b16 %v374, %v373
        %v438 = vpack.c.b16 %v376, %v375
        %v439 = vpack.c.b16 %v378, %v377
        %v440 = vpack.c.b16 %v380, %v379
        %v441 = vpack.c.b16 %v382, %v381
        %v442 = vpack.c.b16 %v384, %v383
        %v443 = vpack.c.b16 %v386, %v385
        %v444 = vpack.c.b16 %v388, %v387
        %v445 = vpack.c.b16 %v390, %v389
        %v446 = vpack.c.b16 %v392, %v391
        %v447 = vpack.c.b16 %v394, %v393
        %v448 = vpack.c.b16 %v396, %v395
        %v449 = vpack.c.b16 %v398, %v397
        %v450 = vpack.c.b16 %v400, %v399
        %v451 = vpack.c.b16 %v402, %v401
        %v452 = vpack.c.b16 %v404, %v403
        %v453 = vpack.c.b16 %v406, %v405
        %v454 = vpack.c.b16 %v408, %v407
        %v455 = vpack.c.b16 %v410, %v409
        %v456 = vpack.c.b16 %v412, %v411
        %v457 = vpack.c.b16 %v414, %v413
        %v458 = vpack.c.b16 %v416, %v415
        %v459 = vpack.c.b16 %v418, %v417
        %v460 = vpack.c.b16 %v420, %v419
        %v461 = vpack.c.b16 %v422, %v421
        %v462 = vpack.c.b16 %v424, %v423
        %v463 = vpack.c.b16 %v426, %v425
        %v464 = vpack.c.b16 %v428, %v427
        %v465 = vpack.c.b16 %v430, %v429
        %v466 = vpack.c.b16 %v432, %v431
        %v467 = vpack.c.b16 %v434, %v433
        %v468 = vpack.c.b16 %v436, %v435
        %501 = vmatprep.subr.bf16.mxu0 0
        %502 = vmatpush1.bf16.msra.mxu0 %v444
        %503 = vmatprep.subr.bf16.mxu0 0
        %504 = vmatpush1.bf16.msra.mxu0 %v443
        %505 = vmatprep.subr.bf16.mxu0 0
        %506 = vmatpush1.bf16.msra.mxu0 %v442
        %507 = vmatprep.subr.bf16.mxu0 0
        %508 = vmatpush1.bf16.msra.mxu0 %v441
        %509 = vmatprep.subr.bf16.mxu0 0
        %510 = vmatpush1.bf16.msra.mxu0 %v440
        %511 = vmatprep.subr.bf16.mxu0 0
        %512 = vmatpush1.bf16.msra.mxu0 %v439
        %513 = vmatprep.subr.bf16.mxu0 0
        %514 = vmatpush1.bf16.msra.mxu0 %v438
        %515 = vmatprep.subr.bf16.mxu0 0
        %516 = vmatpush1.bf16.msra.mxu0 %v437
        %517 = vmatprep.subr.bf16.mxu0 0
        %518 = vmatpush2.bf16.msra.mxu0 %v452
        %519 = vmatprep.subr.bf16.mxu0 0
        %520 = vmatpush2.bf16.msra.mxu0 %v451
        %521 = vmatprep.subr.bf16.mxu0 0
        %522 = vmatpush2.bf16.msra.mxu0 %v450
        %523 = vmatprep.subr.bf16.mxu0 0
        %524 = vmatpush2.bf16.msra.mxu0 %v449
        %525 = vmatprep.subr.bf16.mxu0 0
        %526 = vmatpush2.bf16.msra.mxu0 %v448
        %527 = vmatprep.subr.bf16.mxu0 0
        %528 = vmatpush2.bf16.msra.mxu0 %v447
        %529 = vmatprep.subr.bf16.mxu0 0
        %530 = vmatpush2.bf16.msra.mxu0 %v446
        %531 = vmatprep.subr.bf16.mxu0 0
        %532 = vmatpush2.bf16.msra.mxu0 %v445
        %533 = vmatprep.mubr.bf16.mxu0 %v302
        %534 = vmatmul.mubr.bf16.gmra.mxu0 %v301
        %v535 = vpop.f32.mrf.mxu0
        %v536 = vadd.f32 0.0, %v535
        %v537 = vpop.f32.mrf.mxu0
        %v538 = vpop.f32.mrf.mxu0
        %v539 = vadd.f32 0.0, %v538
        %v540 = vpop.f32.mrf.mxu0
        %541 = vdwg.mxu0
        %542 = vmatprep.subr.bf16.mxu0 0
        %543 = vmatpush1.bf16.msra.mxu0 %v460
        %544 = vmatprep.subr.bf16.mxu0 0
        %545 = vmatpush1.bf16.msra.mxu0 %v459
        %546 = vmatprep.subr.bf16.mxu0 0
        %547 = vmatpush1.bf16.msra.mxu0 %v458
        %548 = vmatprep.subr.bf16.mxu0 0
        %549 = vmatpush1.bf16.msra.mxu0 %v457
        %550 = vmatprep.subr.bf16.mxu0 0
        %551 = vmatpush1.bf16.msra.mxu0 %v456
        %552 = vmatprep.subr.bf16.mxu0 0
        %553 = vmatpush1.bf16.msra.mxu0 %v455
        %554 = vmatprep.subr.bf16.mxu0 0
        %555 = vmatpush1.bf16.msra.mxu0 %v454
        %556 = vmatprep.subr.bf16.mxu0 0
        %557 = vmatpush1.bf16.msra.mxu0 %v453
        %558 = vmatprep.subr.bf16.mxu0 0
        %559 = vmatpush2.bf16.msra.mxu0 %v468
        %560 = vmatprep.subr.bf16.mxu0 0
        %561 = vmatpush2.bf16.msra.mxu0 %v467
        %562 = vmatprep.subr.bf16.mxu0 0
        %563 = vmatpush2.bf16.msra.mxu0 %v466
        %564 = vmatprep.subr.bf16.mxu0 0
        %565 = vmatpush2.bf16.msra.mxu0 %v465
        %566 = vmatprep.subr.bf16.mxu0 0
        %567 = vmatpush2.bf16.msra.mxu0 %v464
        %568 = vmatprep.subr.bf16.mxu0 0
        %569 = vmatpush2.bf16.msra.mxu0 %v463
        %570 = vmatprep.subr.bf16.mxu0 0
        %571 = vmatpush2.bf16.msra.mxu0 %v462
        %572 = vmatprep.subr.bf16.mxu0 0
        %573 = vmatpush2.bf16.msra.mxu0 %v461
        %574 = vmatprep.mubr.bf16.mxu0 %v304
        %575 = vmatmul.mubr.bf16.gmra.mxu0 %v303
        %v576 = vpop.f32.mrf.mxu0
        %v577 = vadd.f32 %v536, %v576
        %v578 = vpop.f32.mrf.mxu0
        %v579 = vpop.f32.mrf.mxu0
        %v580 = vadd.f32 %v539, %v579
        %v581 = vpop.f32.mrf.mxu0
        %582 = vdwg.mxu0
        %v583 = vadd.f32 %v219, %v577
        %v584 = vadd.f32 %v220, %v580
        %585 = vst [vmem:[#allocation2] sm:$0xff] %v583
        %586 = vst [vmem:[#allocation2 + $0x8] sm:$0xff] %v584
        %p587 = scmp.eq.s32.totalorder %s18, 4
        // Predicated region
        $region56: #{discriminator_forward.11} parent=46 // pred_check
          %p588 = pneg %p587
        $region57: #{discriminator_forward.11} parent=46 // pred_check_branch
          %590 = sbr.rel (%p588) target = $region59
        $region58: #{discriminator_forward.11} parent=46 // pred_region
          %v591 = vld [vmem:[#allocation2] sm:$0xff]
          %v592 = vld [vmem:[#allocation2 + $0x8] sm:$0xff]
          %v593 = vsub.f32 0.0, %v591
          %v594 = vsub.f32 0.0, %v592
          %v595 = vmul.f32 %v593, 1.442695
          %v596 = vpow.pop %v595
          %v597 = vmul.f32 %v594, 1.442695
          %v598 = vpow.pop %v597
          %v599 = vadd.f32 %v596, 1.0
          %v600 = vadd.f32 %v598, 1.0
          %v601 = vrcp.pop %v599
          %v602 = vmul.f32 1.0, %v601
          %v603 = vrcp.pop %v600
          %v604 = vmul.f32 1.0, %v603
          %605 = vst [vmem:[%s210] sm:$0xff] %v602
          %606 = vst [vmem:[%s210 + $0x8] sm:$0xff] %v604
        $region59: #{discriminator_forward.11} parent=46 // pred_fallthru
          _
        %s607 = smul.u32 2, %s17
        %p608 = scmp.lt.s32.totalorder %s607, 1
        %s609 = scalar_select %p608, %s607, 1
        %s610 = smul.addr %s609, 8
        %s611 = scalar_lea.vmem %s2, %s610
        // Predicated region
        $region60: #{discriminator_forward.11} parent=46 // pred_check
          %p612 = pneg %p97
        $region61: #{discriminator_forward.11} parent=46 // pred_check_branch
          %614 = sbr.rel (%p612) target = $region63
        $region62: #{discriminator_forward.11} parent=46 // pred_region
          %s615 = smul.u32 2, %s17
        $region63: #{discriminator_forward.11} parent=46 // pred_fallthru
          _
        // Predicated region
        $region64: #{discriminator_forward.11} parent=46 // pred_check
          %p616 = pneg %p97
        $region65: #{discriminator_forward.11} parent=46 // pred_check_branch
          %618 = sbr.rel (%p616) target = $region67
        $region66: #{discriminator_forward.11} parent=46 // pred_region
          %s619 = smul.u32 2, %s17
          %p620 = scmp.lt.s32.totalorder %s619, 1
          %s621 = scalar_select %p620, %s619, 1
          %s622 = smul.addr %s621, 8
          %s623 = scalar_lea.vmem %s2, %s622
        $region67: #{discriminator_forward.11} parent=46 // pred_fallthru
          _
      $region47: #{discriminator_forward.11} parent=5 // pred_fallthru
        _
      %p624 = scmp.le.s32.totalorder 2, %s8
      // Predicated region
      $region68: #{discriminator_forward.11} parent=5 // pred_check
        %p625 = pneg %p624
      $region69: #{discriminator_forward.11} parent=5 // pred_check_branch
        %627 = sbr.rel (%p625) target = $region71
      $region70: #{discriminator_forward.11} parent=5 // pred_region
        %s628 = ssub.s32 %s8, 2
      $region71: #{discriminator_forward.11} parent=5 // pred_fallthru
        _
    $region6: #{discriminator_forward.11} parent=1 // loop_footer
      %s12 = sadd.s32 1, %s8
    $region7: #{discriminator_forward.11} parent=1 // loop_footer_branch
      %7 = sbr.rel target = $region3
    $region8: #{discriminator_forward.11} parent=1 // loop_exit
      _

</llo_original>
